<compile_context>
chip_gen: v5e
topology: v5e:2x2
jax: 0.10.0
libtpu: 0.0.40
codegen_flags: <defaults>
</compile_context>

<pallas_src>
import functools

import jax
import jax.numpy as jnp
import numpy as np
from jax.experimental import pallas as pl
from jax.experimental.pallas import tpu as pltpu

LEAKY_SLOPE = 0.02   # matches conv_layer(..., leaky=0.02) in the module spec
RF_HALO = 5          # 5 stacked 3x3 convs -> 5-row recompute halo per band


def _rdb_band_kernel(nc, gc, band_h, rows_ext, Wp, lane_chunk,
                     x_ref, w1_ref, w2_ref, w3_ref, w4_ref, w5_ref,
                     b_ref, mask_ref, out_ref, stack_ref):
    """Fused RDB for one (batch, row-band) grid point.

    x_ref    : (1, 1, nc, S_ext) bf16  band input (halo rows included), rows
               right-padded by 2 zero columns, zero outside the image
    w{k}_ref : (9, cout_k, cin_k) bf16 per-tap transposed conv weights
    b_ref    : (max_cout, 5) f32       per-layer bias columns
    mask_ref : (1, 1, S_ext) f32       1.0 on real pixels, 0.0 on pad cols /
                                       out-of-image halo rows
    out_ref  : (1, 1, nc, band_h*Wp) f32  band-interior output (junk pad cols
                                          are sliced off by the wrapper)
    stack_ref: VMEM (nc+4*gc, (rows_ext+2)*Wp+2) bf16 zero-guard dense stack
    """
    S_ext = rows_ext * Wp                # flat length of the band-extended region
    Sp = (rows_ext + 2) * Wp
    c_total = nc + 4 * gc

    # (1) Re-zero only the guard rows (the scratch persists across grid steps
    #     and across cores; everything else is fully rewritten every step).
    stack_ref[:, 0:Wp + 1] = jnp.zeros((c_total, Wp + 1), jnp.bfloat16)
    stack_ref[:, (rows_ext + 1) * Wp:Sp + 2] = jnp.zeros((c_total, Wp + 2),
                                                         jnp.bfloat16)

    # (2) Banded bf16 input straight into the stack (no live f32 copy of x).
    stack_ref[0:nc, Wp + 1:Wp + 1 + S_ext] = x_ref[0, 0]

    mask_full = mask_ref[0]              # (1, S_ext) f32, loaded once

    w_refs = (w1_ref, w2_ref, w3_ref, w4_ref, w5_ref)
    cins = [nc + k * gc for k in range(5)]
    couts = [gc, gc, gc, gc, nc]

    def conv3x3(layer, q0, n_cols, emit):
        """3x3 SAME conv over output columns [q0, q0+n_cols) of the active
        region, chunked along lanes; emit(cs, cw, y_f32) consumes each
        finished (cout, cw) chunk while it is still register-resident."""
        cin, cout = cins[layer], couts[layer]
        w_ref = w_refs[layer]
        taps = [w_ref[t] for t in range(9)]                 # (cout, cin) bf16
        bias = b_ref[0:cout, layer:layer + 1]               # (cout, 1)  f32
        for cs in range(0, n_cols, lane_chunk):
            cw = min(lane_chunk, n_cols - cs)
            base = q0 + cs
            # Accumulator initialised from the first tap (no zeros + add).
            acc = jnp.dot(taps[0], stack_ref[0:cin, base:base + cw],
                          preferred_element_type=jnp.float32)
            for t in range(1, 9):
                off = (t // 3) * Wp + (t % 3)
                acc = acc + jnp.dot(
                    taps[t], stack_ref[0:cin, base + off:base + off + cw],
                    preferred_element_type=jnp.float32)
            emit(cs, cw, acc + bias)

    # conv1..conv4: bias + LeakyReLU(0.02) + validity mask, stored as bf16.
    for k in range(4):
        ch0 = nc + k * gc

        def emit_hidden(cs, cw, y, _ch0=ch0):
            m = mask_full[:, cs:cs + cw]                    # (1, cw)
            y = jnp.where(y > 0, y, LEAKY_SLOPE * y) * m
            stack_ref[_ch0:_ch0 + gc, Wp + 1 + cs:Wp + 1 + cs + cw] = (
                y.astype(jnp.bfloat16))

        conv3x3(k, 0, S_ext, emit_hidden)

    # conv5 (no activation), band interior only; fused residual 0.2*x5 + x.
    q0 = RF_HALO * Wp
    n_out = band_h * Wp

    def emit_out(cs, cw, y):
        xres = stack_ref[0:nc,
                         Wp + 1 + q0 + cs:Wp + 1 + q0 + cs + cw].astype(
                             jnp.float32)
        out_ref[0, 0, 0:nc, cs:cs + cw] = y * jnp.float32(0.2) + xres

    conv3x3(4, q0, n_out, emit_out)


def _vmem_limit_bytes(nc, gc, band_h, rows_ext, Wp, lane_chunk):
    """Footprint-derived scoped-VMEM budget, clamped to the physical VMEM of
    the current TPU generation (conservative 64 MiB fallback)."""
    c_total = nc + 4 * gc
    S_ext = rows_ext * Wp
    cins = [nc + k * gc for k in range(5)]
    couts = [gc, gc, gc, gc, nc]
    stack = c_total * ((rows_ext + 2) * Wp + 2) * 2
    xio = 2 * (nc * S_ext * 2) + 2 * (nc * band_h * Wp * 4)
    msk = 2 * S_ext * 4
    wts = 2 * (sum(9 * ci * co * 2 for ci, co in zip(cins, couts))
               + max(nc, gc) * 5 * 4)
    ck = min(lane_chunk, S_ext)
    work = 8 * max(couts) * ck * 4 + 2 * max(cins) * ck * 2
    est = stack + xio + msk + wts + work
    try:
        phys = int(pltpu.get_tpu_info().vmem_capacity_bytes)
        if phys <= 0:
            raise ValueError
    except Exception:
        phys = 64 * 1024 * 1024
    budget = max(2 * est, 32 * 1024 * 1024)
    return int(min(budget, int(phys * 0.85)))


def residual_dense_block_5c(x_nchw, params, gc, band_rows=None, lane_chunk=512):
    """Forward pass of ResidualDenseBlock_5C.  x is NCHW; returns NCHW."""
    N, nc, H, W = x_nchw.shape
    Wp = W + 2

    if band_rows is None:
        band_rows = 32 if H > 48 else H     # keep bands VMEM-resident
    band_h = max(1, min(int(band_rows), H))
    num_bands = -(-H // band_h)             # ceil
    H_pad = num_bands * band_h
    rows_ext = band_h + 2 * RF_HALO
    S_ext = rows_ext * Wp

    couts = [gc, gc, gc, gc, nc]
    cmax = max(nc, gc)
    c_total = nc + 4 * gc

    # ---- host-side layout plumbing (pure XLA, outside the kernel) ---------
    # bf16 input, padded by RF_HALO zero rows top/bottom (+ ragged-H pad) and
    # 2 zero columns per row, then gathered into overlapping band slabs so
    # every kernel block is a plain non-overlapping BlockSpec block.
    x_pad = jnp.pad(x_nchw.astype(jnp.bfloat16),
                    ((0, 0), (0, 0), (RF_HALO, RF_HALO + H_pad - H), (0, 2)))
    band_row_idx = (jnp.arange(num_bands)[:, None] * band_h
                    + jnp.arange(rows_ext)[None, :])      # (nb, rows_ext)
    x_bands = x_pad[:, :, band_row_idx, :]                # (N, nc, nb, re, Wp)
    x_bands = jnp.transpose(x_bands, (0, 2, 1, 3, 4)).reshape(
        N, num_bands, nc, S_ext)

    # Pre-pack weights: HWIO (3,3,cin,cout) -> per-tap (9, cout, cin) bf16.
    w_packed = []
    for k in range(1, 6):
        w = params[f"w{k}"]
        cin, cout = w.shape[2], w.shape[3]
        w_packed.append(jnp.transpose(w, (0, 1, 3, 2))
                        .reshape(9, cout, cin).astype(jnp.bfloat16))

    # Fold biases into one (cmax, 5) f32 array (column k = bias of conv k+1).
    b_all = jnp.zeros((cmax, 5), jnp.float32)
    for k, cout in enumerate(couts):
        b_all = b_all.at[:cout, k].set(params[f"b{k + 1}"].astype(jnp.float32))

    # Per-band validity mask: 1 where (row inside [0,H)) AND (col inside
    # [0,W)); keeps the zero SAME-padding semantics exact for x1..x4.
    g_rows = (jnp.arange(num_bands)[:, None] * band_h - RF_HALO
              + jnp.arange(rows_ext)[None, :])             # global image rows
    row_ok = (g_rows >= 0) & (g_rows < H)
    col_ok = jnp.arange(Wp) < W
    mask = (row_ok[:, :, None] & col_ok[None, None, :]).astype(jnp.float32)
    mask = mask.reshape(num_bands, 1, S_ext)

    # ---- pallas_call ------------------------------------------------------
    def full_spec(a):
        return pl.BlockSpec(a.shape, lambda n, b, _nd=a.ndim: (0,) * _nd)

    in_specs = ([pl.BlockSpec((1, 1, nc, S_ext), lambda n, b: (n, b, 0, 0))]
                + [full_spec(w) for w in w_packed]
                + [full_spec(b_all),
                   pl.BlockSpec((1, 1, S_ext), lambda n, b: (b, 0, 0))])
    out_spec = pl.BlockSpec((1, 1, nc, band_h * Wp), lambda n, b: (n, b, 0, 0))

    stack_len = (rows_ext + 2) * Wp + 2
    kernel = functools.partial(_rdb_band_kernel, nc, gc, band_h, rows_ext, Wp,
                               lane_chunk)

    out_raw = pl.pallas_call(
        kernel,
        out_shape=jax.ShapeDtypeStruct((N, num_bands, nc, band_h * Wp),
                                       jnp.float32),
        grid_spec=pltpu.PrefetchScalarGridSpec(
            num_scalar_prefetch=0,
            grid=(N, num_bands),
            in_specs=in_specs,
            out_specs=out_spec,
            scratch_shapes=[pltpu.VMEM((c_total, stack_len), jnp.bfloat16)],
        ),
        compiler_params=pltpu.CompilerParams(
            # batch AND row-band axes are independent -> both parallel, so a
            # v7x chip (2 TCs) stays busy even at batch 1.
            dimension_semantics=("parallel", "parallel"),
            vmem_limit_bytes=_vmem_limit_bytes(nc, gc, band_h, rows_ext, Wp,
                                               lane_chunk),
        ),
    )(x_bands, *w_packed, b_all, mask)

    # Reassemble bands, drop the 2 pad columns per row and any ragged-H rows.
    out = out_raw.reshape(N, num_bands, nc, band_h, Wp)
    out = jnp.transpose(out, (0, 2, 1, 3, 4)).reshape(N, nc, H_pad, Wp)
    return out[:, :, :H, :W]


def init_params(key, nc, gc):
    """Deterministic init matching the conv shapes of the PyTorch module.
    weight_norm is identity at init, so effective HWIO weights are sampled
    directly (PyTorch-style uniform fan-in bound)."""
    params = {}
    cins = [nc, nc + gc, nc + 2 * gc, nc + 3 * gc, nc + 4 * gc]
    couts = [gc, gc, gc, gc, nc]
    for i, (cin, cout) in enumerate(zip(cins, couts), start=1):
        key, kw, kb = jax.random.split(key, 3)
        bound = 1.0 / np.sqrt(cin * 9)
        params[f"w{i}"] = jax.random.uniform(
            kw, (3, 3, cin, cout), jnp.float32, -bound, bound)
        params[f"b{i}"] = jax.random.uniform(
            kb, (cout,), jnp.float32, -bound, bound)
    return params


def _reference_forward(x_nchw, params, gc):
    """Pure-JAX reference with matching bf16-matmul / f32-accumulate
    semantics (activations and weights cast to bf16 at each conv)."""
    x = x_nchw.astype(jnp.float32)

    def leaky(v):
        return jnp.where(v > 0, v, LEAKY_SLOPE * v)

    def conv(v, w, b):
        y = jax.lax.conv_general_dilated(
            v.astype(jnp.bfloat16), w.astype(jnp.bfloat16),
            window_strides=(1, 1), padding="SAME",
            dimension_numbers=("NCHW", "HWIO", "NCHW"),
            preferred_element_type=jnp.float32)
        return y + b.reshape(1, -1, 1, 1).astype(jnp.float32)

    x1 = leaky(conv(x, params["w1"], params["b1"]))
    x2 = leaky(conv(jnp.concatenate([x, x1], 1), params["w2"], params["b2"]))
    x3 = leaky(conv(jnp.concatenate([x, x1, x2], 1),
                    params["w3"], params["b3"]))
    x4 = leaky(conv(jnp.concatenate([x, x1, x2, x3], 1),
                    params["w4"], params["b4"]))
    x5 = conv(jnp.concatenate([x, x1, x2, x3, x4], 1),
              params["w5"], params["b5"])
    return x5 * 0.2 + x


if __name__ == "__main__":
    N, NC, H, W = 2, 4, 16, 16   # NCHW input, like the PyTorch module
    GC = 8                       # growth channels (small for the example)

    key = jax.random.PRNGKey(0)
    kx, kp = jax.random.split(key)
    x = jax.random.normal(kx, (N, NC, H, W), jnp.float32)
    params = init_params(kp, NC, GC)

    # band_rows=8 -> 2 row bands, exercising the banded (halo-recompute) path.
    fwd = jax.jit(residual_dense_block_5c,
                  static_argnames=("gc", "band_rows", "lane_chunk"))
    out = jax.block_until_ready(fwd(x, params, gc=GC, band_rows=8))

    ref = jax.block_until_ready(_reference_forward(x, params, GC))
    assert out.shape == (N, NC, H, W)
    # bf16 matmul operands / bf16-streamed residual -> loosened tolerance.
    np.testing.assert_allclose(np.asarray(out), np.asarray(ref),
                               rtol=2e-2, atol=2e-2)
    print("KERNEL_OK")
</pallas_src>

<mosaic_0001>
module attributes {stable_mosaic.version = 11 : i64} {
  func.func @_rdb_band_kernel(%arg0: i32, %arg1: i32, %arg2: memref<1x1x4x324xbf16, #tpu.memory_space<vmem>>, %arg3: memref<9x8x4xbf16, #tpu.memory_space<vmem>>, %arg4: memref<9x8x12xbf16, #tpu.memory_space<vmem>>, %arg5: memref<9x8x20xbf16, #tpu.memory_space<vmem>>, %arg6: memref<9x8x28xbf16, #tpu.memory_space<vmem>>, %arg7: memref<9x4x36xbf16, #tpu.memory_space<vmem>>, %arg8: memref<8x5xf32, #tpu.memory_space<vmem>>, %arg9: memref<1x1x324xf32, #tpu.memory_space<vmem>>, %arg10: memref<1x1x4x144xf32, #tpu.memory_space<vmem>>, %arg11: memref<36x362xbf16, #tpu.memory_space<vmem>>) attributes {dimension_semantics = [#tpu.dimension_semantics<parallel>, #tpu.dimension_semantics<parallel>], iteration_bounds = array<i64: 2, 2>, scalar_prefetch = 0 : i64, scratch_operands = 1 : i64, tpu.core_type = #tpu.core_type<tc>, window_params = [{transform_indices = @transform_0, window_bounds = array<i64: 1, 1, 4, 324>}, {pipeline_mode = #tpu.pipeline_mode<synchronous>, transform_indices = @transform_1, window_bounds = array<i64: 9, 8, 4>}, {pipeline_mode = #tpu.pipeline_mode<synchronous>, transform_indices = @transform_2, window_bounds = array<i64: 9, 8, 12>}, {pipeline_mode = #tpu.pipeline_mode<synchronous>, transform_indices = @transform_3, window_bounds = array<i64: 9, 8, 20>}, {pipeline_mode = #tpu.pipeline_mode<synchronous>, transform_indices = @transform_4, window_bounds = array<i64: 9, 8, 28>}, {pipeline_mode = #tpu.pipeline_mode<synchronous>, transform_indices = @transform_5, window_bounds = array<i64: 9, 4, 36>}, {pipeline_mode = #tpu.pipeline_mode<synchronous>, transform_indices = @transform_6, window_bounds = array<i64: 8, 5>}, {transform_indices = @transform_7, window_bounds = array<i64: 1, 1, 324>}, {transform_indices = @transform_8, window_bounds = array<i64: 1, 1, 4, 144>}]} {
    %cst = arith.constant 0.000000e+00 : bf16
    %0 = vector.broadcast %cst : bf16 to vector<36x19xbf16>
    %c0 = arith.constant 0 : index
    %c0_0 = arith.constant 0 : index
    %1 = vector.load %arg11[%c0, %c0_0] : memref<36x362xbf16, #tpu.memory_space<vmem>>, vector<36x19xbf16>
    tpu.vector_store %arg11[%c0, %c0_0], %0 {strides = array<i32>} : memref<36x362xbf16, #tpu.memory_space<vmem>>, vector<36x19xbf16>,
    %cst_1 = arith.constant 0.000000e+00 : bf16
    %2 = vector.broadcast %cst_1 : bf16 to vector<36x20xbf16>
    %c0_2 = arith.constant 0 : index
    %c342 = arith.constant 342 : index
    %3 = vector.load %arg11[%c0_2, %c342] : memref<36x362xbf16, #tpu.memory_space<vmem>>, vector<36x20xbf16>
    tpu.vector_store %arg11[%c0_2, %c342], %2 {strides = array<i32>} : memref<36x362xbf16, #tpu.memory_space<vmem>>, vector<36x20xbf16>,
    %c0_3 = arith.constant 0 : index
    %c0_4 = arith.constant 0 : index
    %c0_5 = arith.constant 0 : index
    %c0_6 = arith.constant 0 : index
    %4 = vector.load %arg2[%c0_3, %c0_4, %c0_5, %c0_6] : memref<1x1x4x324xbf16, #tpu.memory_space<vmem>>, vector<1x1x4x324xbf16>
    %5 = vector.shape_cast %4 : vector<1x1x4x324xbf16> to vector<4x324xbf16>
    %c0_7 = arith.constant 0 : index
    %c19 = arith.constant 19 : index
    %6 = vector.load %arg11[%c0_7, %c19] : memref<36x362xbf16, #tpu.memory_space<vmem>>, vector<4x324xbf16>
    tpu.vector_store %arg11[%c0_7, %c19], %5 {strides = array<i32>} : memref<36x362xbf16, #tpu.memory_space<vmem>>, vector<4x324xbf16>,
    %c0_8 = arith.constant 0 : index
    %c0_9 = arith.constant 0 : index
    %c0_10 = arith.constant 0 : index
    %7 = vector.load %arg9[%c0_8, %c0_9, %c0_10] : memref<1x1x324xf32, #tpu.memory_space<vmem>>, vector<1x1x324xf32>
    %8 = vector.shape_cast %7 : vector<1x1x324xf32> to vector<1x324xf32>
    %c0_11 = arith.constant 0 : index
    %c0_12 = arith.constant 0 : index
    %c0_13 = arith.constant 0 : index
    %9 = vector.load %arg3[%c0_11, %c0_12, %c0_13] : memref<9x8x4xbf16, #tpu.memory_space<vmem>>, vector<1x8x4xbf16>
    %10 = vector.shape_cast %9 : vector<1x8x4xbf16> to vector<8x4xbf16>
    %c1 = arith.constant 1 : index
    %c0_14 = arith.constant 0 : index
    %c0_15 = arith.constant 0 : index
    %11 = vector.load %arg3[%c1, %c0_14, %c0_15] : memref<9x8x4xbf16, #tpu.memory_space<vmem>>, vector<1x8x4xbf16>
    %12 = vector.shape_cast %11 : vector<1x8x4xbf16> to vector<8x4xbf16>
    %c2 = arith.constant 2 : index
    %c0_16 = arith.constant 0 : index
    %c0_17 = arith.constant 0 : index
    %13 = vector.load %arg3[%c2, %c0_16, %c0_17] : memref<9x8x4xbf16, #tpu.memory_space<vmem>>, vector<1x8x4xbf16>
    %14 = vector.shape_cast %13 : vector<1x8x4xbf16> to vector<8x4xbf16>
    %c3 = arith.constant 3 : index
    %c0_18 = arith.constant 0 : index
    %c0_19 = arith.constant 0 : index
    %15 = vector.load %arg3[%c3, %c0_18, %c0_19] : memref<9x8x4xbf16, #tpu.memory_space<vmem>>, vector<1x8x4xbf16>
    %16 = vector.shape_cast %15 : vector<1x8x4xbf16> to vector<8x4xbf16>
    %c4 = arith.constant 4 : index
    %c0_20 = arith.constant 0 : index
    %c0_21 = arith.constant 0 : index
    %17 = vector.load %arg3[%c4, %c0_20, %c0_21] : memref<9x8x4xbf16, #tpu.memory_space<vmem>>, vector<1x8x4xbf16>
    %18 = vector.shape_cast %17 : vector<1x8x4xbf16> to vector<8x4xbf16>
    %c5 = arith.constant 5 : index
    %c0_22 = arith.constant 0 : index
    %c0_23 = arith.constant 0 : index
    %19 = vector.load %arg3[%c5, %c0_22, %c0_23] : memref<9x8x4xbf16, #tpu.memory_space<vmem>>, vector<1x8x4xbf16>
    %20 = vector.shape_cast %19 : vector<1x8x4xbf16> to vector<8x4xbf16>
    %c6 = arith.constant 6 : index
    %c0_24 = arith.constant 0 : index
    %c0_25 = arith.constant 0 : index
    %21 = vector.load %arg3[%c6, %c0_24, %c0_25] : memref<9x8x4xbf16, #tpu.memory_space<vmem>>, vector<1x8x4xbf16>
    %22 = vector.shape_cast %21 : vector<1x8x4xbf16> to vector<8x4xbf16>
    %c7 = arith.constant 7 : index
    %c0_26 = arith.constant 0 : index
    %c0_27 = arith.constant 0 : index
    %23 = vector.load %arg3[%c7, %c0_26, %c0_27] : memref<9x8x4xbf16, #tpu.memory_space<vmem>>, vector<1x8x4xbf16>
    %24 = vector.shape_cast %23 : vector<1x8x4xbf16> to vector<8x4xbf16>
    %c8 = arith.constant 8 : index
    %c0_28 = arith.constant 0 : index
    %c0_29 = arith.constant 0 : index
    %25 = vector.load %arg3[%c8, %c0_28, %c0_29] : memref<9x8x4xbf16, #tpu.memory_space<vmem>>, vector<1x8x4xbf16>
    %26 = vector.shape_cast %25 : vector<1x8x4xbf16> to vector<8x4xbf16>
    %c0_30 = arith.constant 0 : index
    %c0_31 = arith.constant 0 : index
    %27 = vector.load %arg8[%c0_30, %c0_31] : memref<8x5xf32, #tpu.memory_space<vmem>>, vector<8x1xf32>
    %c0_32 = arith.constant 0 : index
    %c0_33 = arith.constant 0 : index
    %28 = vector.load %arg11[%c0_32, %c0_33] : memref<36x362xbf16, #tpu.memory_space<vmem>>, vector<4x324xbf16>
    %cst_34 = arith.constant dense<0.000000e+00> : vector<8x324xf32>
    %29 = tpu.matmul %10, %28, %cst_34 {dimension_numbers = #tpu.dot_dimension_numbers<[1], [0], [0], [1], [0, 0, 1, 1], [], []>} : vector<8x4xbf16>, vector<4x324xbf16>, vector<8x324xf32> -> vector<8x324xf32>
    %c0_35 = arith.constant 0 : index
    %c1_36 = arith.constant 1 : index
    %30 = vector.load %arg11[%c0_35, %c1_36] : memref<36x362xbf16, #tpu.memory_space<vmem>>, vector<4x324xbf16>
    %cst_37 = arith.constant dense<0.000000e+00> : vector<8x324xf32>
    %31 = tpu.matmul %12, %30, %cst_37 {dimension_numbers = #tpu.dot_dimension_numbers<[1], [0], [0], [1], [0, 0, 1, 1], [], []>} : vector<8x4xbf16>, vector<4x324xbf16>, vector<8x324xf32> -> vector<8x324xf32>
    %32 = arith.addf %29, %31 : vector<8x324xf32>
    %c0_38 = arith.constant 0 : index
    %c2_39 = arith.constant 2 : index
    %33 = vector.load %arg11[%c0_38, %c2_39] : memref<36x362xbf16, #tpu.memory_space<vmem>>, vector<4x324xbf16>
    %cst_40 = arith.constant dense<0.000000e+00> : vector<8x324xf32>
    %34 = tpu.matmul %14, %33, %cst_40 {dimension_numbers = #tpu.dot_dimension_numbers<[1], [0], [0], [1], [0, 0, 1, 1], [], []>} : vector<8x4xbf16>, vector<4x324xbf16>, vector<8x324xf32> -> vector<8x324xf32>
    %35 = arith.addf %32, %34 : vector<8x324xf32>
    %c0_41 = arith.constant 0 : index
    %c18 = arith.constant 18 : index
    %36 = vector.load %arg11[%c0_41, %c18] : memref<36x362xbf16, #tpu.memory_space<vmem>>, vector<4x324xbf16>
    %cst_42 = arith.constant dense<0.000000e+00> : vector<8x324xf32>
    %37 = tpu.matmul %16, %36, %cst_42 {dimension_numbers = #tpu.dot_dimension_numbers<[1], [0], [0], [1], [0, 0, 1, 1], [], []>} : vector<8x4xbf16>, vector<4x324xbf16>, vector<8x324xf32> -> vector<8x324xf32>
    %38 = arith.addf %35, %37 : vector<8x324xf32>
    %c0_43 = arith.constant 0 : index
    %c19_44 = arith.constant 19 : index
    %39 = vector.load %arg11[%c0_43, %c19_44] : memref<36x362xbf16, #tpu.memory_space<vmem>>, vector<4x324xbf16>
    %cst_45 = arith.constant dense<0.000000e+00> : vector<8x324xf32>
    %40 = tpu.matmul %18, %39, %cst_45 {dimension_numbers = #tpu.dot_dimension_numbers<[1], [0], [0], [1], [0, 0, 1, 1], [], []>} : vector<8x4xbf16>, vector<4x324xbf16>, vector<8x324xf32> -> vector<8x324xf32>
    %41 = arith.addf %38, %40 : vector<8x324xf32>
    %c0_46 = arith.constant 0 : index
    %c20 = arith.constant 20 : index
    %42 = vector.load %arg11[%c0_46, %c20] : memref<36x362xbf16, #tpu.memory_space<vmem>>, vector<4x324xbf16>
    %cst_47 = arith.constant dense<0.000000e+00> : vector<8x324xf32>
    %43 = tpu.matmul %20, %42, %cst_47 {dimension_numbers = #tpu.dot_dimension_numbers<[1], [0], [0], [1], [0, 0, 1, 1], [], []>} : vector<8x4xbf16>, vector<4x324xbf16>, vector<8x324xf32> -> vector<8x324xf32>
    %44 = arith.addf %41, %43 : vector<8x324xf32>
    %c0_48 = arith.constant 0 : index
    %c36 = arith.constant 36 : index
    %45 = vector.load %arg11[%c0_48, %c36] : memref<36x362xbf16, #tpu.memory_space<vmem>>, vector<4x324xbf16>
    %cst_49 = arith.constant dense<0.000000e+00> : vector<8x324xf32>
    %46 = tpu.matmul %22, %45, %cst_49 {dimension_numbers = #tpu.dot_dimension_numbers<[1], [0], [0], [1], [0, 0, 1, 1], [], []>} : vector<8x4xbf16>, vector<4x324xbf16>, vector<8x324xf32> -> vector<8x324xf32>
    %47 = arith.addf %44, %46 : vector<8x324xf32>
    %c0_50 = arith.constant 0 : index
    %c37 = arith.constant 37 : index
    %48 = vector.load %arg11[%c0_50, %c37] : memref<36x362xbf16, #tpu.memory_space<vmem>>, vector<4x324xbf16>
    %cst_51 = arith.constant dense<0.000000e+00> : vector<8x324xf32>
    %49 = tpu.matmul %24, %48, %cst_51 {dimension_numbers = #tpu.dot_dimension_numbers<[1], [0], [0], [1], [0, 0, 1, 1], [], []>} : vector<8x4xbf16>, vector<4x324xbf16>, vector<8x324xf32> -> vector<8x324xf32>
    %50 = arith.addf %47, %49 : vector<8x324xf32>
    %c0_52 = arith.constant 0 : index
    %c38 = arith.constant 38 : index
    %51 = vector.load %arg11[%c0_52, %c38] : memref<36x362xbf16, #tpu.memory_space<vmem>>, vector<4x324xbf16>
    %cst_53 = arith.constant dense<0.000000e+00> : vector<8x324xf32>
    %52 = tpu.matmul %26, %51, %cst_53 {dimension_numbers = #tpu.dot_dimension_numbers<[1], [0], [0], [1], [0, 0, 1, 1], [], []>} : vector<8x4xbf16>, vector<4x324xbf16>, vector<8x324xf32> -> vector<8x324xf32>
    %53 = arith.addf %50, %52 : vector<8x324xf32>
    %54 = vector.broadcast %27 : vector<8x1xf32> to vector<8x324xf32>
    %55 = arith.addf %53, %54 : vector<8x324xf32>
    %cst_54 = arith.constant 0.000000e+00 : f32
    %56 = vector.broadcast %cst_54 : f32 to vector<8x324xf32>
    %57 = arith.cmpf ogt, %55, %56 : vector<8x324xf32>
    %cst_55 = arith.constant 2.000000e-02 : f32
    %58 = vector.broadcast %cst_55 : f32 to vector<8x324xf32>
    %59 = arith.mulf %58, %55 : vector<8x324xf32>
    %60 = arith.select %57, %55, %59 : vector<8x324xi1>, vector<8x324xf32>
    %61 = vector.broadcast %8 : vector<1x324xf32> to vector<8x324xf32>
    %62 = arith.mulf %60, %61 : vector<8x324xf32>
    %63 = arith.truncf %62 : vector<8x324xf32> to vector<8x324xbf16>
    %c4_56 = arith.constant 4 : index
    %c19_57 = arith.constant 19 : index
    %64 = vector.load %arg11[%c4_56, %c19_57] : memref<36x362xbf16, #tpu.memory_space<vmem>>, vector<8x324xbf16>
    tpu.vector_store %arg11[%c4_56, %c19_57], %63 {strides = array<i32>} : memref<36x362xbf16, #tpu.memory_space<vmem>>, vector<8x324xbf16>,
    %c0_58 = arith.constant 0 : index
    %c0_59 = arith.constant 0 : index
    %c0_60 = arith.constant 0 : index
    %65 = vector.load %arg4[%c0_58, %c0_59, %c0_60] : memref<9x8x12xbf16, #tpu.memory_space<vmem>>, vector<1x8x12xbf16>
    %66 = vector.shape_cast %65 : vector<1x8x12xbf16> to vector<8x12xbf16>
    %c1_61 = arith.constant 1 : index
    %c0_62 = arith.constant 0 : index
    %c0_63 = arith.constant 0 : index
    %67 = vector.load %arg4[%c1_61, %c0_62, %c0_63] : memref<9x8x12xbf16, #tpu.memory_space<vmem>>, vector<1x8x12xbf16>
    %68 = vector.shape_cast %67 : vector<1x8x12xbf16> to vector<8x12xbf16>
    %c2_64 = arith.constant 2 : index
    %c0_65 = arith.constant 0 : index
    %c0_66 = arith.constant 0 : index
    %69 = vector.load %arg4[%c2_64, %c0_65, %c0_66] : memref<9x8x12xbf16, #tpu.memory_space<vmem>>, vector<1x8x12xbf16>
    %70 = vector.shape_cast %69 : vector<1x8x12xbf16> to vector<8x12xbf16>
    %c3_67 = arith.constant 3 : index
    %c0_68 = arith.constant 0 : index
    %c0_69 = arith.constant 0 : index
    %71 = vector.load %arg4[%c3_67, %c0_68, %c0_69] : memref<9x8x12xbf16, #tpu.memory_space<vmem>>, vector<1x8x12xbf16>
    %72 = vector.shape_cast %71 : vector<1x8x12xbf16> to vector<8x12xbf16>
    %c4_70 = arith.constant 4 : index
    %c0_71 = arith.constant 0 : index
    %c0_72 = arith.constant 0 : index
    %73 = vector.load %arg4[%c4_70, %c0_71, %c0_72] : memref<9x8x12xbf16, #tpu.memory_space<vmem>>, vector<1x8x12xbf16>
    %74 = vector.shape_cast %73 : vector<1x8x12xbf16> to vector<8x12xbf16>
    %c5_73 = arith.constant 5 : index
    %c0_74 = arith.constant 0 : index
    %c0_75 = arith.constant 0 : index
    %75 = vector.load %arg4[%c5_73, %c0_74, %c0_75] : memref<9x8x12xbf16, #tpu.memory_space<vmem>>, vector<1x8x12xbf16>
    %76 = vector.shape_cast %75 : vector<1x8x12xbf16> to vector<8x12xbf16>
    %c6_76 = arith.constant 6 : index
    %c0_77 = arith.constant 0 : index
    %c0_78 = arith.constant 0 : index
    %77 = vector.load %arg4[%c6_76, %c0_77, %c0_78] : memref<9x8x12xbf16, #tpu.memory_space<vmem>>, vector<1x8x12xbf16>
    %78 = vector.shape_cast %77 : vector<1x8x12xbf16> to vector<8x12xbf16>
    %c7_79 = arith.constant 7 : index
    %c0_80 = arith.constant 0 : index
    %c0_81 = arith.constant 0 : index
    %79 = vector.load %arg4[%c7_79, %c0_80, %c0_81] : memref<9x8x12xbf16, #tpu.memory_space<vmem>>, vector<1x8x12xbf16>
    %80 = vector.shape_cast %79 : vector<1x8x12xbf16> to vector<8x12xbf16>
    %c8_82 = arith.constant 8 : index
    %c0_83 = arith.constant 0 : index
    %c0_84 = arith.constant 0 : index
    %81 = vector.load %arg4[%c8_82, %c0_83, %c0_84] : memref<9x8x12xbf16, #tpu.memory_space<vmem>>, vector<1x8x12xbf16>
    %82 = vector.shape_cast %81 : vector<1x8x12xbf16> to vector<8x12xbf16>
    %c0_85 = arith.constant 0 : index
    %c1_86 = arith.constant 1 : index
    %83 = vector.load %arg8[%c0_85, %c1_86] : memref<8x5xf32, #tpu.memory_space<vmem>>, vector<8x1xf32>
    %c0_87 = arith.constant 0 : index
    %c0_88 = arith.constant 0 : index
    %84 = vector.load %arg11[%c0_87, %c0_88] : memref<36x362xbf16, #tpu.memory_space<vmem>>, vector<12x324xbf16>
    %cst_89 = arith.constant dense<0.000000e+00> : vector<8x324xf32>
    %85 = tpu.matmul %66, %84, %cst_89 {dimension_numbers = #tpu.dot_dimension_numbers<[1], [0], [0], [1], [0, 0, 1, 1], [], []>} : vector<8x12xbf16>, vector<12x324xbf16>, vector<8x324xf32> -> vector<8x324xf32>
    %c0_90 = arith.constant 0 : index
    %c1_91 = arith.constant 1 : index
    %86 = vector.load %arg11[%c0_90, %c1_91] : memref<36x362xbf16, #tpu.memory_space<vmem>>, vector<12x324xbf16>
    %cst_92 = arith.constant dense<0.000000e+00> : vector<8x324xf32>
    %87 = tpu.matmul %68, %86, %cst_92 {dimension_numbers = #tpu.dot_dimension_numbers<[1], [0], [0], [1], [0, 0, 1, 1], [], []>} : vector<8x12xbf16>, vector<12x324xbf16>, vector<8x324xf32> -> vector<8x324xf32>
    %88 = arith.addf %85, %87 : vector<8x324xf32>
    %c0_93 = arith.constant 0 : index
    %c2_94 = arith.constant 2 : index
    %89 = vector.load %arg11[%c0_93, %c2_94] : memref<36x362xbf16, #tpu.memory_space<vmem>>, vector<12x324xbf16>
    %cst_95 = arith.constant dense<0.000000e+00> : vector<8x324xf32>
    %90 = tpu.matmul %70, %89, %cst_95 {dimension_numbers = #tpu.dot_dimension_numbers<[1], [0], [0], [1], [0, 0, 1, 1], [], []>} : vector<8x12xbf16>, vector<12x324xbf16>, vector<8x324xf32> -> vector<8x324xf32>
    %91 = arith.addf %88, %90 : vector<8x324xf32>
    %c0_96 = arith.constant 0 : index
    %c18_97 = arith.constant 18 : index
    %92 = vector.load %arg11[%c0_96, %c18_97] : memref<36x362xbf16, #tpu.memory_space<vmem>>, vector<12x324xbf16>
    %cst_98 = arith.constant dense<0.000000e+00> : vector<8x324xf32>
    %93 = tpu.matmul %72, %92, %cst_98 {dimension_numbers = #tpu.dot_dimension_numbers<[1], [0], [0], [1], [0, 0, 1, 1], [], []>} : vector<8x12xbf16>, vector<12x324xbf16>, vector<8x324xf32> -> vector<8x324xf32>
    %94 = arith.addf %91, %93 : vector<8x324xf32>
    %c0_99 = arith.constant 0 : index
    %c19_100 = arith.constant 19 : index
    %95 = vector.load %arg11[%c0_99, %c19_100] : memref<36x362xbf16, #tpu.memory_space<vmem>>, vector<12x324xbf16>
    %cst_101 = arith.constant dense<0.000000e+00> : vector<8x324xf32>
    %96 = tpu.matmul %74, %95, %cst_101 {dimension_numbers = #tpu.dot_dimension_numbers<[1], [0], [0], [1], [0, 0, 1, 1], [], []>} : vector<8x12xbf16>, vector<12x324xbf16>, vector<8x324xf32> -> vector<8x324xf32>
    %97 = arith.addf %94, %96 : vector<8x324xf32>
    %c0_102 = arith.constant 0 : index
    %c20_103 = arith.constant 20 : index
    %98 = vector.load %arg11[%c0_102, %c20_103] : memref<36x362xbf16, #tpu.memory_space<vmem>>, vector<12x324xbf16>
    %cst_104 = arith.constant dense<0.000000e+00> : vector<8x324xf32>
    %99 = tpu.matmul %76, %98, %cst_104 {dimension_numbers = #tpu.dot_dimension_numbers<[1], [0], [0], [1], [0, 0, 1, 1], [], []>} : vector<8x12xbf16>, vector<12x324xbf16>, vector<8x324xf32> -> vector<8x324xf32>
    %100 = arith.addf %97, %99 : vector<8x324xf32>
    %c0_105 = arith.constant 0 : index
    %c36_106 = arith.constant 36 : index
    %101 = vector.load %arg11[%c0_105, %c36_106] : memref<36x362xbf16, #tpu.memory_space<vmem>>, vector<12x324xbf16>
    %cst_107 = arith.constant dense<0.000000e+00> : vector<8x324xf32>
    %102 = tpu.matmul %78, %101, %cst_107 {dimension_numbers = #tpu.dot_dimension_numbers<[1], [0], [0], [1], [0, 0, 1, 1], [], []>} : vector<8x12xbf16>, vector<12x324xbf16>, vector<8x324xf32> -> vector<8x324xf32>
    %103 = arith.addf %100, %102 : vector<8x324xf32>
    %c0_108 = arith.constant 0 : index
    %c37_109 = arith.constant 37 : index
    %104 = vector.load %arg11[%c0_108, %c37_109] : memref<36x362xbf16, #tpu.memory_space<vmem>>, vector<12x324xbf16>
    %cst_110 = arith.constant dense<0.000000e+00> : vector<8x324xf32>
    %105 = tpu.matmul %80, %104, %cst_110 {dimension_numbers = #tpu.dot_dimension_numbers<[1], [0], [0], [1], [0, 0, 1, 1], [], []>} : vector<8x12xbf16>, vector<12x324xbf16>, vector<8x324xf32> -> vector<8x324xf32>
    %106 = arith.addf %103, %105 : vector<8x324xf32>
    %c0_111 = arith.constant 0 : index
    %c38_112 = arith.constant 38 : index
    %107 = vector.load %arg11[%c0_111, %c38_112] : memref<36x362xbf16, #tpu.memory_space<vmem>>, vector<12x324xbf16>
    %cst_113 = arith.constant dense<0.000000e+00> : vector<8x324xf32>
    %108 = tpu.matmul %82, %107, %cst_113 {dimension_numbers = #tpu.dot_dimension_numbers<[1], [0], [0], [1], [0, 0, 1, 1], [], []>} : vector<8x12xbf16>, vector<12x324xbf16>, vector<8x324xf32> -> vector<8x324xf32>
    %109 = arith.addf %106, %108 : vector<8x324xf32>
    %110 = vector.broadcast %83 : vector<8x1xf32> to vector<8x324xf32>
    %111 = arith.addf %109, %110 : vector<8x324xf32>
    %cst_114 = arith.constant 0.000000e+00 : f32
    %112 = vector.broadcast %cst_114 : f32 to vector<8x324xf32>
    %113 = arith.cmpf ogt, %111, %112 : vector<8x324xf32>
    %cst_115 = arith.constant 2.000000e-02 : f32
    %114 = vector.broadcast %cst_115 : f32 to vector<8x324xf32>
    %115 = arith.mulf %114, %111 : vector<8x324xf32>
    %116 = arith.select %113, %111, %115 : vector<8x324xi1>, vector<8x324xf32>
    %117 = vector.broadcast %8 : vector<1x324xf32> to vector<8x324xf32>
    %118 = arith.mulf %116, %117 : vector<8x324xf32>
    %119 = arith.truncf %118 : vector<8x324xf32> to vector<8x324xbf16>
    %c12 = arith.constant 12 : index
    %c19_116 = arith.constant 19 : index
    %120 = vector.load %arg11[%c12, %c19_116] : memref<36x362xbf16, #tpu.memory_space<vmem>>, vector<8x324xbf16>
    tpu.vector_store %arg11[%c12, %c19_116], %119 {strides = array<i32>} : memref<36x362xbf16, #tpu.memory_space<vmem>>, vector<8x324xbf16>,
    %c0_117 = arith.constant 0 : index
    %c0_118 = arith.constant 0 : index
    %c0_119 = arith.constant 0 : index
    %121 = vector.load %arg5[%c0_117, %c0_118, %c0_119] : memref<9x8x20xbf16, #tpu.memory_space<vmem>>, vector<1x8x20xbf16>
    %122 = vector.shape_cast %121 : vector<1x8x20xbf16> to vector<8x20xbf16>
    %c1_120 = arith.constant 1 : index
    %c0_121 = arith.constant 0 : index
    %c0_122 = arith.constant 0 : index
    %123 = vector.load %arg5[%c1_120, %c0_121, %c0_122] : memref<9x8x20xbf16, #tpu.memory_space<vmem>>, vector<1x8x20xbf16>
    %124 = vector.shape_cast %123 : vector<1x8x20xbf16> to vector<8x20xbf16>
    %c2_123 = arith.constant 2 : index
    %c0_124 = arith.constant 0 : index
    %c0_125 = arith.constant 0 : index
    %125 = vector.load %arg5[%c2_123, %c0_124, %c0_125] : memref<9x8x20xbf16, #tpu.memory_space<vmem>>, vector<1x8x20xbf16>
    %126 = vector.shape_cast %125 : vector<1x8x20xbf16> to vector<8x20xbf16>
    %c3_126 = arith.constant 3 : index
    %c0_127 = arith.constant 0 : index
    %c0_128 = arith.constant 0 : index
    %127 = vector.load %arg5[%c3_126, %c0_127, %c0_128] : memref<9x8x20xbf16, #tpu.memory_space<vmem>>, vector<1x8x20xbf16>
    %128 = vector.shape_cast %127 : vector<1x8x20xbf16> to vector<8x20xbf16>
    %c4_129 = arith.constant 4 : index
    %c0_130 = arith.constant 0 : index
    %c0_131 = arith.constant 0 : index
    %129 = vector.load %arg5[%c4_129, %c0_130, %c0_131] : memref<9x8x20xbf16, #tpu.memory_space<vmem>>, vector<1x8x20xbf16>
    %130 = vector.shape_cast %129 : vector<1x8x20xbf16> to vector<8x20xbf16>
    %c5_132 = arith.constant 5 : index
    %c0_133 = arith.constant 0 : index
    %c0_134 = arith.constant 0 : index
    %131 = vector.load %arg5[%c5_132, %c0_133, %c0_134] : memref<9x8x20xbf16, #tpu.memory_space<vmem>>, vector<1x8x20xbf16>
    %132 = vector.shape_cast %131 : vector<1x8x20xbf16> to vector<8x20xbf16>
    %c6_135 = arith.constant 6 : index
    %c0_136 = arith.constant 0 : index
    %c0_137 = arith.constant 0 : index
    %133 = vector.load %arg5[%c6_135, %c0_136, %c0_137] : memref<9x8x20xbf16, #tpu.memory_space<vmem>>, vector<1x8x20xbf16>
    %134 = vector.shape_cast %133 : vector<1x8x20xbf16> to vector<8x20xbf16>
    %c7_138 = arith.constant 7 : index
    %c0_139 = arith.constant 0 : index
    %c0_140 = arith.constant 0 : index
    %135 = vector.load %arg5[%c7_138, %c0_139, %c0_140] : memref<9x8x20xbf16, #tpu.memory_space<vmem>>, vector<1x8x20xbf16>
    %136 = vector.shape_cast %135 : vector<1x8x20xbf16> to vector<8x20xbf16>
    %c8_141 = arith.constant 8 : index
    %c0_142 = arith.constant 0 : index
    %c0_143 = arith.constant 0 : index
    %137 = vector.load %arg5[%c8_141, %c0_142, %c0_143] : memref<9x8x20xbf16, #tpu.memory_space<vmem>>, vector<1x8x20xbf16>
    %138 = vector.shape_cast %137 : vector<1x8x20xbf16> to vector<8x20xbf16>
    %c0_144 = arith.constant 0 : index
    %c2_145 = arith.constant 2 : index
    %139 = vector.load %arg8[%c0_144, %c2_145] : memref<8x5xf32, #tpu.memory_space<vmem>>, vector<8x1xf32>
    %c0_146 = arith.constant 0 : index
    %c0_147 = arith.constant 0 : index
    %140 = vector.load %arg11[%c0_146, %c0_147] : memref<36x362xbf16, #tpu.memory_space<vmem>>, vector<20x324xbf16>
    %cst_148 = arith.constant dense<0.000000e+00> : vector<8x324xf32>
    %141 = tpu.matmul %122, %140, %cst_148 {dimension_numbers = #tpu.dot_dimension_numbers<[1], [0], [0], [1], [0, 0, 1, 1], [], []>} : vector<8x20xbf16>, vector<20x324xbf16>, vector<8x324xf32> -> vector<8x324xf32>
    %c0_149 = arith.constant 0 : index
    %c1_150 = arith.constant 1 : index
    %142 = vector.load %arg11[%c0_149, %c1_150] : memref<36x362xbf16, #tpu.memory_space<vmem>>, vector<20x324xbf16>
    %cst_151 = arith.constant dense<0.000000e+00> : vector<8x324xf32>
    %143 = tpu.matmul %124, %142, %cst_151 {dimension_numbers = #tpu.dot_dimension_numbers<[1], [0], [0], [1], [0, 0, 1, 1], [], []>} : vector<8x20xbf16>, vector<20x324xbf16>, vector<8x324xf32> -> vector<8x324xf32>
    %144 = arith.addf %141, %143 : vector<8x324xf32>
    %c0_152 = arith.constant 0 : index
    %c2_153 = arith.constant 2 : index
    %145 = vector.load %arg11[%c0_152, %c2_153] : memref<36x362xbf16, #tpu.memory_space<vmem>>, vector<20x324xbf16>
    %cst_154 = arith.constant dense<0.000000e+00> : vector<8x324xf32>
    %146 = tpu.matmul %126, %145, %cst_154 {dimension_numbers = #tpu.dot_dimension_numbers<[1], [0], [0], [1], [0, 0, 1, 1], [], []>} : vector<8x20xbf16>, vector<20x324xbf16>, vector<8x324xf32> -> vector<8x324xf32>
    %147 = arith.addf %144, %146 : vector<8x324xf32>
    %c0_155 = arith.constant 0 : index
    %c18_156 = arith.constant 18 : index
    %148 = vector.load %arg11[%c0_155, %c18_156] : memref<36x362xbf16, #tpu.memory_space<vmem>>, vector<20x324xbf16>
    %cst_157 = arith.constant dense<0.000000e+00> : vector<8x324xf32>
    %149 = tpu.matmul %128, %148, %cst_157 {dimension_numbers = #tpu.dot_dimension_numbers<[1], [0], [0], [1], [0, 0, 1, 1], [], []>} : vector<8x20xbf16>, vector<20x324xbf16>, vector<8x324xf32> -> vector<8x324xf32>
    %150 = arith.addf %147, %149 : vector<8x324xf32>
    %c0_158 = arith.constant 0 : index
    %c19_159 = arith.constant 19 : index
    %151 = vector.load %arg11[%c0_158, %c19_159] : memref<36x362xbf16, #tpu.memory_space<vmem>>, vector<20x324xbf16>
    %cst_160 = arith.constant dense<0.000000e+00> : vector<8x324xf32>
    %152 = tpu.matmul %130, %151, %cst_160 {dimension_numbers = #tpu.dot_dimension_numbers<[1], [0], [0], [1], [0, 0, 1, 1], [], []>} : vector<8x20xbf16>, vector<20x324xbf16>, vector<8x324xf32> -> vector<8x324xf32>
    %153 = arith.addf %150, %152 : vector<8x324xf32>
    %c0_161 = arith.constant 0 : index
    %c20_162 = arith.constant 20 : index
    %154 = vector.load %arg11[%c0_161, %c20_162] : memref<36x362xbf16, #tpu.memory_space<vmem>>, vector<20x324xbf16>
    %cst_163 = arith.constant dense<0.000000e+00> : vector<8x324xf32>
    %155 = tpu.matmul %132, %154, %cst_163 {dimension_numbers = #tpu.dot_dimension_numbers<[1], [0], [0], [1], [0, 0, 1, 1], [], []>} : vector<8x20xbf16>, vector<20x324xbf16>, vector<8x324xf32> -> vector<8x324xf32>
    %156 = arith.addf %153, %155 : vector<8x324xf32>
    %c0_164 = arith.constant 0 : index
    %c36_165 = arith.constant 36 : index
    %157 = vector.load %arg11[%c0_164, %c36_165] : memref<36x362xbf16, #tpu.memory_space<vmem>>, vector<20x324xbf16>
    %cst_166 = arith.constant dense<0.000000e+00> : vector<8x324xf32>
    %158 = tpu.matmul %134, %157, %cst_166 {dimension_numbers = #tpu.dot_dimension_numbers<[1], [0], [0], [1], [0, 0, 1, 1], [], []>} : vector<8x20xbf16>, vector<20x324xbf16>, vector<8x324xf32> -> vector<8x324xf32>
    %159 = arith.addf %156, %158 : vector<8x324xf32>
    %c0_167 = arith.constant 0 : index
    %c37_168 = arith.constant 37 : index
    %160 = vector.load %arg11[%c0_167, %c37_168] : memref<36x362xbf16, #tpu.memory_space<vmem>>, vector<20x324xbf16>
    %cst_169 = arith.constant dense<0.000000e+00> : vector<8x324xf32>
    %161 = tpu.matmul %136, %160, %cst_169 {dimension_numbers = #tpu.dot_dimension_numbers<[1], [0], [0], [1], [0, 0, 1, 1], [], []>} : vector<8x20xbf16>, vector<20x324xbf16>, vector<8x324xf32> -> vector<8x324xf32>
    %162 = arith.addf %159, %161 : vector<8x324xf32>
    %c0_170 = arith.constant 0 : index
    %c38_171 = arith.constant 38 : index
    %163 = vector.load %arg11[%c0_170, %c38_171] : memref<36x362xbf16, #tpu.memory_space<vmem>>, vector<20x324xbf16>
    %cst_172 = arith.constant dense<0.000000e+00> : vector<8x324xf32>
    %164 = tpu.matmul %138, %163, %cst_172 {dimension_numbers = #tpu.dot_dimension_numbers<[1], [0], [0], [1], [0, 0, 1, 1], [], []>} : vector<8x20xbf16>, vector<20x324xbf16>, vector<8x324xf32> -> vector<8x324xf32>
    %165 = arith.addf %162, %164 : vector<8x324xf32>
    %166 = vector.broadcast %139 : vector<8x1xf32> to vector<8x324xf32>
    %167 = arith.addf %165, %166 : vector<8x324xf32>
    %cst_173 = arith.constant 0.000000e+00 : f32
    %168 = vector.broadcast %cst_173 : f32 to vector<8x324xf32>
    %169 = arith.cmpf ogt, %167, %168 : vector<8x324xf32>
    %cst_174 = arith.constant 2.000000e-02 : f32
    %170 = vector.broadcast %cst_174 : f32 to vector<8x324xf32>
    %171 = arith.mulf %170, %167 : vector<8x324xf32>
    %172 = arith.select %169, %167, %171 : vector<8x324xi1>, vector<8x324xf32>
    %173 = vector.broadcast %8 : vector<1x324xf32> to vector<8x324xf32>
    %174 = arith.mulf %172, %173 : vector<8x324xf32>
    %175 = arith.truncf %174 : vector<8x324xf32> to vector<8x324xbf16>
    %c20_175 = arith.constant 20 : index
    %c19_176 = arith.constant 19 : index
    %176 = vector.load %arg11[%c20_175, %c19_176] : memref<36x362xbf16, #tpu.memory_space<vmem>>, vector<8x324xbf16>
    tpu.vector_store %arg11[%c20_175, %c19_176], %175 {strides = array<i32>} : memref<36x362xbf16, #tpu.memory_space<vmem>>, vector<8x324xbf16>,
    %c0_177 = arith.constant 0 : index
    %c0_178 = arith.constant 0 : index
    %c0_179 = arith.constant 0 : index
    %177 = vector.load %arg6[%c0_177, %c0_178, %c0_179] : memref<9x8x28xbf16, #tpu.memory_space<vmem>>, vector<1x8x28xbf16>
    %178 = vector.shape_cast %177 : vector<1x8x28xbf16> to vector<8x28xbf16>
    %c1_180 = arith.constant 1 : index
    %c0_181 = arith.constant 0 : index
    %c0_182 = arith.constant 0 : index
    %179 = vector.load %arg6[%c1_180, %c0_181, %c0_182] : memref<9x8x28xbf16, #tpu.memory_space<vmem>>, vector<1x8x28xbf16>
    %180 = vector.shape_cast %179 : vector<1x8x28xbf16> to vector<8x28xbf16>
    %c2_183 = arith.constant 2 : index
    %c0_184 = arith.constant 0 : index
    %c0_185 = arith.constant 0 : index
    %181 = vector.load %arg6[%c2_183, %c0_184, %c0_185] : memref<9x8x28xbf16, #tpu.memory_space<vmem>>, vector<1x8x28xbf16>
    %182 = vector.shape_cast %181 : vector<1x8x28xbf16> to vector<8x28xbf16>
    %c3_186 = arith.constant 3 : index
    %c0_187 = arith.constant 0 : index
    %c0_188 = arith.constant 0 : index
    %183 = vector.load %arg6[%c3_186, %c0_187, %c0_188] : memref<9x8x28xbf16, #tpu.memory_space<vmem>>, vector<1x8x28xbf16>
    %184 = vector.shape_cast %183 : vector<1x8x28xbf16> to vector<8x28xbf16>
    %c4_189 = arith.constant 4 : index
    %c0_190 = arith.constant 0 : index
    %c0_191 = arith.constant 0 : index
    %185 = vector.load %arg6[%c4_189, %c0_190, %c0_191] : memref<9x8x28xbf16, #tpu.memory_space<vmem>>, vector<1x8x28xbf16>
    %186 = vector.shape_cast %185 : vector<1x8x28xbf16> to vector<8x28xbf16>
    %c5_192 = arith.constant 5 : index
    %c0_193 = arith.constant 0 : index
    %c0_194 = arith.constant 0 : index
    %187 = vector.load %arg6[%c5_192, %c0_193, %c0_194] : memref<9x8x28xbf16, #tpu.memory_space<vmem>>, vector<1x8x28xbf16>
    %188 = vector.shape_cast %187 : vector<1x8x28xbf16> to vector<8x28xbf16>
    %c6_195 = arith.constant 6 : index
    %c0_196 = arith.constant 0 : index
    %c0_197 = arith.constant 0 : index
    %189 = vector.load %arg6[%c6_195, %c0_196, %c0_197] : memref<9x8x28xbf16, #tpu.memory_space<vmem>>, vector<1x8x28xbf16>
    %190 = vector.shape_cast %189 : vector<1x8x28xbf16> to vector<8x28xbf16>
    %c7_198 = arith.constant 7 : index
    %c0_199 = arith.constant 0 : index
    %c0_200 = arith.constant 0 : index
    %191 = vector.load %arg6[%c7_198, %c0_199, %c0_200] : memref<9x8x28xbf16, #tpu.memory_space<vmem>>, vector<1x8x28xbf16>
    %192 = vector.shape_cast %191 : vector<1x8x28xbf16> to vector<8x28xbf16>
    %c8_201 = arith.constant 8 : index
    %c0_202 = arith.constant 0 : index
    %c0_203 = arith.constant 0 : index
    %193 = vector.load %arg6[%c8_201, %c0_202, %c0_203] : memref<9x8x28xbf16, #tpu.memory_space<vmem>>, vector<1x8x28xbf16>
    %194 = vector.shape_cast %193 : vector<1x8x28xbf16> to vector<8x28xbf16>
    %c0_204 = arith.constant 0 : index
    %c3_205 = arith.constant 3 : index
    %195 = vector.load %arg8[%c0_204, %c3_205] : memref<8x5xf32, #tpu.memory_space<vmem>>, vector<8x1xf32>
    %c0_206 = arith.constant 0 : index
    %c0_207 = arith.constant 0 : index
    %196 = vector.load %arg11[%c0_206, %c0_207] : memref<36x362xbf16, #tpu.memory_space<vmem>>, vector<28x324xbf16>
    %cst_208 = arith.constant dense<0.000000e+00> : vector<8x324xf32>
    %197 = tpu.matmul %178, %196, %cst_208 {dimension_numbers = #tpu.dot_dimension_numbers<[1], [0], [0], [1], [0, 0, 1, 1], [], []>} : vector<8x28xbf16>, vector<28x324xbf16>, vector<8x324xf32> -> vector<8x324xf32>
    %c0_209 = arith.constant 0 : index
    %c1_210 = arith.constant 1 : index
    %198 = vector.load %arg11[%c0_209, %c1_210] : memref<36x362xbf16, #tpu.memory_space<vmem>>, vector<28x324xbf16>
    %cst_211 = arith.constant dense<0.000000e+00> : vector<8x324xf32>
    %199 = tpu.matmul %180, %198, %cst_211 {dimension_numbers = #tpu.dot_dimension_numbers<[1], [0], [0], [1], [0, 0, 1, 1], [], []>} : vector<8x28xbf16>, vector<28x324xbf16>, vector<8x324xf32> -> vector<8x324xf32>
    %200 = arith.addf %197, %199 : vector<8x324xf32>
    %c0_212 = arith.constant 0 : index
    %c2_213 = arith.constant 2 : index
    %201 = vector.load %arg11[%c0_212, %c2_213] : memref<36x362xbf16, #tpu.memory_space<vmem>>, vector<28x324xbf16>
    %cst_214 = arith.constant dense<0.000000e+00> : vector<8x324xf32>
    %202 = tpu.matmul %182, %201, %cst_214 {dimension_numbers = #tpu.dot_dimension_numbers<[1], [0], [0], [1], [0, 0, 1, 1], [], []>} : vector<8x28xbf16>, vector<28x324xbf16>, vector<8x324xf32> -> vector<8x324xf32>
    %203 = arith.addf %200, %202 : vector<8x324xf32>
    %c0_215 = arith.constant 0 : index
    %c18_216 = arith.constant 18 : index
    %204 = vector.load %arg11[%c0_215, %c18_216] : memref<36x362xbf16, #tpu.memory_space<vmem>>, vector<28x324xbf16>
    %cst_217 = arith.constant dense<0.000000e+00> : vector<8x324xf32>
    %205 = tpu.matmul %184, %204, %cst_217 {dimension_numbers = #tpu.dot_dimension_numbers<[1], [0], [0], [1], [0, 0, 1, 1], [], []>} : vector<8x28xbf16>, vector<28x324xbf16>, vector<8x324xf32> -> vector<8x324xf32>
    %206 = arith.addf %203, %205 : vector<8x324xf32>
    %c0_218 = arith.constant 0 : index
    %c19_219 = arith.constant 19 : index
    %207 = vector.load %arg11[%c0_218, %c19_219] : memref<36x362xbf16, #tpu.memory_space<vmem>>, vector<28x324xbf16>
    %cst_220 = arith.constant dense<0.000000e+00> : vector<8x324xf32>
    %208 = tpu.matmul %186, %207, %cst_220 {dimension_numbers = #tpu.dot_dimension_numbers<[1], [0], [0], [1], [0, 0, 1, 1], [], []>} : vector<8x28xbf16>, vector<28x324xbf16>, vector<8x324xf32> -> vector<8x324xf32>
    %209 = arith.addf %206, %208 : vector<8x324xf32>
    %c0_221 = arith.constant 0 : index
    %c20_222 = arith.constant 20 : index
    %210 = vector.load %arg11[%c0_221, %c20_222] : memref<36x362xbf16, #tpu.memory_space<vmem>>, vector<28x324xbf16>
    %cst_223 = arith.constant dense<0.000000e+00> : vector<8x324xf32>
    %211 = tpu.matmul %188, %210, %cst_223 {dimension_numbers = #tpu.dot_dimension_numbers<[1], [0], [0], [1], [0, 0, 1, 1], [], []>} : vector<8x28xbf16>, vector<28x324xbf16>, vector<8x324xf32> -> vector<8x324xf32>
    %212 = arith.addf %209, %211 : vector<8x324xf32>
    %c0_224 = arith.constant 0 : index
    %c36_225 = arith.constant 36 : index
    %213 = vector.load %arg11[%c0_224, %c36_225] : memref<36x362xbf16, #tpu.memory_space<vmem>>, vector<28x324xbf16>
    %cst_226 = arith.constant dense<0.000000e+00> : vector<8x324xf32>
    %214 = tpu.matmul %190, %213, %cst_226 {dimension_numbers = #tpu.dot_dimension_numbers<[1], [0], [0], [1], [0, 0, 1, 1], [], []>} : vector<8x28xbf16>, vector<28x324xbf16>, vector<8x324xf32> -> vector<8x324xf32>
    %215 = arith.addf %212, %214 : vector<8x324xf32>
    %c0_227 = arith.constant 0 : index
    %c37_228 = arith.constant 37 : index
    %216 = vector.load %arg11[%c0_227, %c37_228] : memref<36x362xbf16, #tpu.memory_space<vmem>>, vector<28x324xbf16>
    %cst_229 = arith.constant dense<0.000000e+00> : vector<8x324xf32>
    %217 = tpu.matmul %192, %216, %cst_229 {dimension_numbers = #tpu.dot_dimension_numbers<[1], [0], [0], [1], [0, 0, 1, 1], [], []>} : vector<8x28xbf16>, vector<28x324xbf16>, vector<8x324xf32> -> vector<8x324xf32>
    %218 = arith.addf %215, %217 : vector<8x324xf32>
    %c0_230 = arith.constant 0 : index
    %c38_231 = arith.constant 38 : index
    %219 = vector.load %arg11[%c0_230, %c38_231] : memref<36x362xbf16, #tpu.memory_space<vmem>>, vector<28x324xbf16>
    %cst_232 = arith.constant dense<0.000000e+00> : vector<8x324xf32>
    %220 = tpu.matmul %194, %219, %cst_232 {dimension_numbers = #tpu.dot_dimension_numbers<[1], [0], [0], [1], [0, 0, 1, 1], [], []>} : vector<8x28xbf16>, vector<28x324xbf16>, vector<8x324xf32> -> vector<8x324xf32>
    %221 = arith.addf %218, %220 : vector<8x324xf32>
    %222 = vector.broadcast %195 : vector<8x1xf32> to vector<8x324xf32>
    %223 = arith.addf %221, %222 : vector<8x324xf32>
    %cst_233 = arith.constant 0.000000e+00 : f32
    %224 = vector.broadcast %cst_233 : f32 to vector<8x324xf32>
    %225 = arith.cmpf ogt, %223, %224 : vector<8x324xf32>
    %cst_234 = arith.constant 2.000000e-02 : f32
    %226 = vector.broadcast %cst_234 : f32 to vector<8x324xf32>
    %227 = arith.mulf %226, %223 : vector<8x324xf32>
    %228 = arith.select %225, %223, %227 : vector<8x324xi1>, vector<8x324xf32>
    %229 = vector.broadcast %8 : vector<1x324xf32> to vector<8x324xf32>
    %230 = arith.mulf %228, %229 : vector<8x324xf32>
    %231 = arith.truncf %230 : vector<8x324xf32> to vector<8x324xbf16>
    %c28 = arith.constant 28 : index
    %c19_235 = arith.constant 19 : index
    %232 = vector.load %arg11[%c28, %c19_235] : memref<36x362xbf16, #tpu.memory_space<vmem>>, vector<8x324xbf16>
    tpu.vector_store %arg11[%c28, %c19_235], %231 {strides = array<i32>} : memref<36x362xbf16, #tpu.memory_space<vmem>>, vector<8x324xbf16>,
    %c0_236 = arith.constant 0 : index
    %c0_237 = arith.constant 0 : index
    %c0_238 = arith.constant 0 : index
    %233 = vector.load %arg7[%c0_236, %c0_237, %c0_238] : memref<9x4x36xbf16, #tpu.memory_space<vmem>>, vector<1x4x36xbf16>
    %234 = vector.shape_cast %233 : vector<1x4x36xbf16> to vector<4x36xbf16>
    %c1_239 = arith.constant 1 : index
    %c0_240 = arith.constant 0 : index
    %c0_241 = arith.constant 0 : index
    %235 = vector.load %arg7[%c1_239, %c0_240, %c0_241] : memref<9x4x36xbf16, #tpu.memory_space<vmem>>, vector<1x4x36xbf16>
    %236 = vector.shape_cast %235 : vector<1x4x36xbf16> to vector<4x36xbf16>
    %c2_242 = arith.constant 2 : index
    %c0_243 = arith.constant 0 : index
    %c0_244 = arith.constant 0 : index
    %237 = vector.load %arg7[%c2_242, %c0_243, %c0_244] : memref<9x4x36xbf16, #tpu.memory_space<vmem>>, vector<1x4x36xbf16>
    %238 = vector.shape_cast %237 : vector<1x4x36xbf16> to vector<4x36xbf16>
    %c3_245 = arith.constant 3 : index
    %c0_246 = arith.constant 0 : index
    %c0_247 = arith.constant 0 : index
    %239 = vector.load %arg7[%c3_245, %c0_246, %c0_247] : memref<9x4x36xbf16, #tpu.memory_space<vmem>>, vector<1x4x36xbf16>
    %240 = vector.shape_cast %239 : vector<1x4x36xbf16> to vector<4x36xbf16>
    %c4_248 = arith.constant 4 : index
    %c0_249 = arith.constant 0 : index
    %c0_250 = arith.constant 0 : index
    %241 = vector.load %arg7[%c4_248, %c0_249, %c0_250] : memref<9x4x36xbf16, #tpu.memory_space<vmem>>, vector<1x4x36xbf16>
    %242 = vector.shape_cast %241 : vector<1x4x36xbf16> to vector<4x36xbf16>
    %c5_251 = arith.constant 5 : index
    %c0_252 = arith.constant 0 : index
    %c0_253 = arith.constant 0 : index
    %243 = vector.load %arg7[%c5_251, %c0_252, %c0_253] : memref<9x4x36xbf16, #tpu.memory_space<vmem>>, vector<1x4x36xbf16>
    %244 = vector.shape_cast %243 : vector<1x4x36xbf16> to vector<4x36xbf16>
    %c6_254 = arith.constant 6 : index
    %c0_255 = arith.constant 0 : index
    %c0_256 = arith.constant 0 : index
    %245 = vector.load %arg7[%c6_254, %c0_255, %c0_256] : memref<9x4x36xbf16, #tpu.memory_space<vmem>>, vector<1x4x36xbf16>
    %246 = vector.shape_cast %245 : vector<1x4x36xbf16> to vector<4x36xbf16>
    %c7_257 = arith.constant 7 : index
    %c0_258 = arith.constant 0 : index
    %c0_259 = arith.constant 0 : index
    %247 = vector.load %arg7[%c7_257, %c0_258, %c0_259] : memref<9x4x36xbf16, #tpu.memory_space<vmem>>, vector<1x4x36xbf16>
    %248 = vector.shape_cast %247 : vector<1x4x36xbf16> to vector<4x36xbf16>
    %c8_260 = arith.constant 8 : index
    %c0_261 = arith.constant 0 : index
    %c0_262 = arith.constant 0 : index
    %249 = vector.load %arg7[%c8_260, %c0_261, %c0_262] : memref<9x4x36xbf16, #tpu.memory_space<vmem>>, vector<1x4x36xbf16>
    %250 = vector.shape_cast %249 : vector<1x4x36xbf16> to vector<4x36xbf16>
    %c0_263 = arith.constant 0 : index
    %c4_264 = arith.constant 4 : index
    %251 = vector.load %arg8[%c0_263, %c4_264] : memref<8x5xf32, #tpu.memory_space<vmem>>, vector<4x1xf32>
    %c0_265 = arith.constant 0 : index
    %c90 = arith.constant 90 : index
    %252 = vector.load %arg11[%c0_265, %c90] : memref<36x362xbf16, #tpu.memory_space<vmem>>, vector<36x144xbf16>
    %cst_266 = arith.constant dense<0.000000e+00> : vector<4x144xf32>
    %253 = tpu.matmul %234, %252, %cst_266 {dimension_numbers = #tpu.dot_dimension_numbers<[1], [0], [0], [1], [0, 0, 1, 1], [], []>} : vector<4x36xbf16>, vector<36x144xbf16>, vector<4x144xf32> -> vector<4x144xf32>
    %c0_267 = arith.constant 0 : index
    %c91 = arith.constant 91 : index
    %254 = vector.load %arg11[%c0_267, %c91] : memref<36x362xbf16, #tpu.memory_space<vmem>>, vector<36x144xbf16>
    %cst_268 = arith.constant dense<0.000000e+00> : vector<4x144xf32>
    %255 = tpu.matmul %236, %254, %cst_268 {dimension_numbers = #tpu.dot_dimension_numbers<[1], [0], [0], [1], [0, 0, 1, 1], [], []>} : vector<4x36xbf16>, vector<36x144xbf16>, vector<4x144xf32> -> vector<4x144xf32>
    %256 = arith.addf %253, %255 : vector<4x144xf32>
    %c0_269 = arith.constant 0 : index
    %c92 = arith.constant 92 : index
    %257 = vector.load %arg11[%c0_269, %c92] : memref<36x362xbf16, #tpu.memory_space<vmem>>, vector<36x144xbf16>
    %cst_270 = arith.constant dense<0.000000e+00> : vector<4x144xf32>
    %258 = tpu.matmul %238, %257, %cst_270 {dimension_numbers = #tpu.dot_dimension_numbers<[1], [0], [0], [1], [0, 0, 1, 1], [], []>} : vector<4x36xbf16>, vector<36x144xbf16>, vector<4x144xf32> -> vector<4x144xf32>
    %259 = arith.addf %256, %258 : vector<4x144xf32>
    %c0_271 = arith.constant 0 : index
    %c108 = arith.constant 108 : index
    %260 = vector.load %arg11[%c0_271, %c108] : memref<36x362xbf16, #tpu.memory_space<vmem>>, vector<36x144xbf16>
    %cst_272 = arith.constant dense<0.000000e+00> : vector<4x144xf32>
    %261 = tpu.matmul %240, %260, %cst_272 {dimension_numbers = #tpu.dot_dimension_numbers<[1], [0], [0], [1], [0, 0, 1, 1], [], []>} : vector<4x36xbf16>, vector<36x144xbf16>, vector<4x144xf32> -> vector<4x144xf32>
    %262 = arith.addf %259, %261 : vector<4x144xf32>
    %c0_273 = arith.constant 0 : index
    %c109 = arith.constant 109 : index
    %263 = vector.load %arg11[%c0_273, %c109] : memref<36x362xbf16, #tpu.memory_space<vmem>>, vector<36x144xbf16>
    %cst_274 = arith.constant dense<0.000000e+00> : vector<4x144xf32>
    %264 = tpu.matmul %242, %263, %cst_274 {dimension_numbers = #tpu.dot_dimension_numbers<[1], [0], [0], [1], [0, 0, 1, 1], [], []>} : vector<4x36xbf16>, vector<36x144xbf16>, vector<4x144xf32> -> vector<4x144xf32>
    %265 = arith.addf %262, %264 : vector<4x144xf32>
    %c0_275 = arith.constant 0 : index
    %c110 = arith.constant 110 : index
    %266 = vector.load %arg11[%c0_275, %c110] : memref<36x362xbf16, #tpu.memory_space<vmem>>, vector<36x144xbf16>
    %cst_276 = arith.constant dense<0.000000e+00> : vector<4x144xf32>
    %267 = tpu.matmul %244, %266, %cst_276 {dimension_numbers = #tpu.dot_dimension_numbers<[1], [0], [0], [1], [0, 0, 1, 1], [], []>} : vector<4x36xbf16>, vector<36x144xbf16>, vector<4x144xf32> -> vector<4x144xf32>
    %268 = arith.addf %265, %267 : vector<4x144xf32>
    %c0_277 = arith.constant 0 : index
    %c126 = arith.constant 126 : index
    %269 = vector.load %arg11[%c0_277, %c126] : memref<36x362xbf16, #tpu.memory_space<vmem>>, vector<36x144xbf16>
    %cst_278 = arith.constant dense<0.000000e+00> : vector<4x144xf32>
    %270 = tpu.matmul %246, %269, %cst_278 {dimension_numbers = #tpu.dot_dimension_numbers<[1], [0], [0], [1], [0, 0, 1, 1], [], []>} : vector<4x36xbf16>, vector<36x144xbf16>, vector<4x144xf32> -> vector<4x144xf32>
    %271 = arith.addf %268, %270 : vector<4x144xf32>
    %c0_279 = arith.constant 0 : index
    %c127 = arith.constant 127 : index
    %272 = vector.load %arg11[%c0_279, %c127] : memref<36x362xbf16, #tpu.memory_space<vmem>>, vector<36x144xbf16>
    %cst_280 = arith.constant dense<0.000000e+00> : vector<4x144xf32>
    %273 = tpu.matmul %248, %272, %cst_280 {dimension_numbers = #tpu.dot_dimension_numbers<[1], [0], [0], [1], [0, 0, 1, 1], [], []>} : vector<4x36xbf16>, vector<36x144xbf16>, vector<4x144xf32> -> vector<4x144xf32>
    %274 = arith.addf %271, %273 : vector<4x144xf32>
    %c0_281 = arith.constant 0 : index
    %c128 = arith.constant 128 : index
    %275 = vector.load %arg11[%c0_281, %c128] : memref<36x362xbf16, #tpu.memory_space<vmem>>, vector<36x144xbf16>
    %cst_282 = arith.constant dense<0.000000e+00> : vector<4x144xf32>
    %276 = tpu.matmul %250, %275, %cst_282 {dimension_numbers = #tpu.dot_dimension_numbers<[1], [0], [0], [1], [0, 0, 1, 1], [], []>} : vector<4x36xbf16>, vector<36x144xbf16>, vector<4x144xf32> -> vector<4x144xf32>
    %277 = arith.addf %274, %276 : vector<4x144xf32>
    %278 = vector.broadcast %251 : vector<4x1xf32> to vector<4x144xf32>
    %279 = arith.addf %277, %278 : vector<4x144xf32>
    %c0_283 = arith.constant 0 : index
    %c109_284 = arith.constant 109 : index
    %280 = vector.load %arg11[%c0_283, %c109_284] : memref<36x362xbf16, #tpu.memory_space<vmem>>, vector<4x144xbf16>
    %281 = arith.extf %280 : vector<4x144xbf16> to vector<4x144xf32>
    %cst_285 = arith.constant 2.000000e-01 : f32
    %282 = vector.broadcast %cst_285 : f32 to vector<4x144xf32>
    %283 = arith.mulf %279, %282 : vector<4x144xf32>
    %284 = arith.addf %283, %281 : vector<4x144xf32>
    %c0_286 = arith.constant 0 : index
    %c0_287 = arith.constant 0 : index
    %c0_288 = arith.constant 0 : index
    %c0_289 = arith.constant 0 : index
    %285 = vector.load %arg10[%c0_286, %c0_287, %c0_288, %c0_289] : memref<1x1x4x144xf32, #tpu.memory_space<vmem>>, vector<1x1x4x144xf32>
    %286 = vector.shape_cast %285 : vector<1x1x4x144xf32> to vector<4x144xf32>
    %287 = vector.shape_cast %284 : vector<4x144xf32> to vector<1x1x4x144xf32>
    tpu.vector_store %arg10[%c0_286, %c0_287, %c0_288, %c0_289], %287 {strides = array<i32>} : memref<1x1x4x144xf32, #tpu.memory_space<vmem>>, vector<1x1x4x144xf32>,
    return
  }
  func.func @transform_0(%arg0: i32, %arg1: i32) -> (i32, i32, i32, i32) {
    %c0_i32 = arith.constant 0 : i32
    %c0_i32_0 = arith.constant 0 : i32
    %c0_i32_1 = arith.constant 0 : i32
    return %arg0, %arg1, %c0_i32, %c0_i32_0 : i32, i32, i32, i32
  }
  func.func @transform_1(%arg0: i32, %arg1: i32) -> (i32, i32, i32) {
    %c0_i32 = arith.constant 0 : i32
    %c0_i32_0 = arith.constant 0 : i32
    %c0_i32_1 = arith.constant 0 : i32
    %c0_i32_2 = arith.constant 0 : i32
    return %c0_i32, %c0_i32_0, %c0_i32_1 : i32, i32, i32
  }
  func.func @transform_2(%arg0: i32, %arg1: i32) -> (i32, i32, i32) {
    %c0_i32 = arith.constant 0 : i32
    %c0_i32_0 = arith.constant 0 : i32
    %c0_i32_1 = arith.constant 0 : i32
    %c0_i32_2 = arith.constant 0 : i32
    return %c0_i32, %c0_i32_0, %c0_i32_1 : i32, i32, i32
  }
  func.func @transform_3(%arg0: i32, %arg1: i32) -> (i32, i32, i32) {
    %c0_i32 = arith.constant 0 : i32
    %c0_i32_0 = arith.constant 0 : i32
    %c0_i32_1 = arith.constant 0 : i32
    %c0_i32_2 = arith.constant 0 : i32
    return %c0_i32, %c0_i32_0, %c0_i32_1 : i32, i32, i32
  }
  func.func @transform_4(%arg0: i32, %arg1: i32) -> (i32, i32, i32) {
    %c0_i32 = arith.constant 0 : i32
    %c0_i32_0 = arith.constant 0 : i32
    %c0_i32_1 = arith.constant 0 : i32
    %c0_i32_2 = arith.constant 0 : i32
    return %c0_i32, %c0_i32_0, %c0_i32_1 : i32, i32, i32
  }
  func.func @transform_5(%arg0: i32, %arg1: i32) -> (i32, i32, i32) {
    %c0_i32 = arith.constant 0 : i32
    %c0_i32_0 = arith.constant 0 : i32
    %c0_i32_1 = arith.constant 0 : i32
    %c0_i32_2 = arith.constant 0 : i32
    return %c0_i32, %c0_i32_0, %c0_i32_1 : i32, i32, i32
  }
  func.func @transform_6(%arg0: i32, %arg1: i32) -> (i32, i32) {
    %c0_i32 = arith.constant 0 : i32
    %c0_i32_0 = arith.constant 0 : i32
    %c0_i32_1 = arith.constant 0 : i32
    return %c0_i32, %c0_i32_0 : i32, i32
  }
  func.func @transform_7(%arg0: i32, %arg1: i32) -> (i32, i32, i32) {
    %c0_i32 = arith.constant 0 : i32
    %c0_i32_0 = arith.constant 0 : i32
    %c0_i32_1 = arith.constant 0 : i32
    return %arg1, %c0_i32, %c0_i32_0 : i32, i32, i32
  }
  func.func @transform_8(%arg0: i32, %arg1: i32) -> (i32, i32, i32, i32) {
    %c0_i32 = arith.constant 0 : i32
    %c0_i32_0 = arith.constant 0 : i32
    %c0_i32_1 = arith.constant 0 : i32
    return %arg0, %arg1, %c0_i32, %c0_i32_0 : i32, i32, i32, i32
  }
}

</mosaic_0001>

<llo_original>
// kernel: residual_dense_block_5c.1
$region0: #{residual_dense_block_5c.1}
  #allocation0 [shape = 'u32[]', space=smem, size = 0x4, offset = 0x4, fixed_abs, tag = 'smem constant byte address 0x4 - core index']
  #allocation1 [shape = 'u32[72,128]{1,0:T(1,128)}', space=vmem, size = 0x9000, scoped, tag = 'internal scratch']
  #allocation2 [shape = 'bf16[36,362]{1,0:T(8,128)(2,1)}', space=vmem, size = 0x7800, scoped, tag = 'scratch operand']
  %s0 = inlined_call_operand.vmem [shape: bf16[2,2,4,324], index: 0, kind: input, shape index: {}]
  %s1 = inlined_call_operand.vmem [shape: bf16[9,8,4], index: 1, kind: input, shape index: {}]
  %s2 = inlined_call_operand.vmem [shape: bf16[9,8,12], index: 2, kind: input, shape index: {}]
  %s3 = inlined_call_operand.vmem [shape: bf16[9,8,20], index: 3, kind: input, shape index: {}]
  %s4 = inlined_call_operand.vmem [shape: bf16[9,8,28], index: 4, kind: input, shape index: {}]
  %s5 = inlined_call_operand.vmem [shape: bf16[9,4,36], index: 5, kind: input, shape index: {}]
  %s6 = inlined_call_operand.vmem [shape: f32[8,5], index: 6, kind: input, shape index: {}]
  %s7 = inlined_call_operand.vmem [shape: f32[2,1,324], index: 7, kind: input, shape index: {}]
  %s8 = inlined_call_operand.vmem [shape: f32[2,2,4,144], index: 8, kind: output, shape index: {}]
  %s9 = sld [smem:[#allocation0]]
  $region65: #{residual_dense_block_5c.1} parent=0
    _
  %s11 = ssub.s32 1, %s9
  %s12 = scalar_select 0, %s11, %s9
  loop: start=0, step=1, limit=6
  $region2: #{residual_dense_block_5c.1} parent=0 // loop_pre_header
    _
  $region3: #{residual_dense_block_5c.1} parent=0 // loop_header
    %s14 = sphi 0, %s18
    %p15 = scmp.ge.s32.totalorder %s14, 6
    %s21 = sphi 0, %s33
    %s22 = sphi 0, %s29
    %s23 = sphi 0, %s21
    %s24 = sphi 0, %s22
    %s25 = sphi 0, %s23
    %s26 = sphi 0, %s24
    %s38 = sphi 0, %s40
    %s41 = sphi 0, %s38
    %s42 = sphi 0, %s41
    %s58 = sphi 0, %s42
    %s62 = sphi 0, %s62
    %s64 = sphi 0, %s62
    %s65 = sphi 0, %s64
    %s79 = sphi 0, %s65
    %s83 = sphi 0, %s83
    %s85 = sphi 0, %s83
    %s86 = sphi 0, %s85
    %s100 = sphi 0, %s86
    %s104 = sphi 0, %s104
    %s106 = sphi 0, %s104
    %s107 = sphi 0, %s106
    %s121 = sphi 0, %s107
    %s125 = sphi 0, %s125
    %s127 = sphi 0, %s125
    %s128 = sphi 0, %s127
    %s142 = sphi 0, %s128
    %s146 = sphi 0, %s146
    %s148 = sphi 0, %s146
    %s149 = sphi 0, %s148
    %s163 = sphi 0, %s149
    %s167 = sphi 0, %s167
    %s169 = sphi 0, %s167
    %s170 = sphi 0, %s169
    %s184 = sphi 0, %s170
    %s190 = sphi 0, %s192
    %s193 = sphi 0, %s190
    %s194 = sphi 0, %s193
    %s210 = sphi 0, %s194
    %s218 = sphi 0, %s220
    %s221 = sphi 0, %s218
    %s222 = sphi 0, %s221
    %s238 = sphi 0, %s222
  $region4: #{residual_dense_block_5c.1} parent=0 // loop_header_branch
    %17 = sbr.rel (%p15) target = $region8
  $region5: #{residual_dense_block_5c.1} parent=0 // loop_body
    %s19 = ssub.s32 %s14, 1
    %s20 = ssub.s32 %s14, 2
    %s27 = sadd.s32 1, %s22
    %p28 = scmp.ge.s32.totalorder %s27, 2
    %s29 = scalar_select %p28, 0, %s27
    %s30 = sadd.s32 1, %s21
    %s31 = scalar_select %p28, %s30, %s21
    %p32 = scmp.ge.s32.totalorder %s31, 2
    %s33 = scalar_select %p32, 0, %s31
    %s34 = ssub.s32 %s21, %s33
    %s35 = ssub.s32 %s22, %s29
    %s36 = sor.u32 %s34, %s35
    %p37 = scmp.eq.s32.totalorder %s36, 0
    %s39 = sadd.s32 %s38, 1
    %s40 = scalar_select %p37, %s38, %s39
    %p43 = pneg %p37
    %p44 = scmp.eq.s32.totalorder %s14, 3
    %p45 = por %p43, %p44
    %p46 = scmp.ne.s32.totalorder %s38, %s41
    %p47 = scmp.eq.s32.totalorder %s14, 0
    %p48 = por %p46, %p47
    %p49 = scmp.ne.s32.totalorder %s38, %s41
    %p50 = scmp.eq.s32.totalorder %s19, 3
    %p51 = por %p49, %p50
    %p52 = scmp.ne.s32.totalorder %s41, %s42
    %p53 = scmp.eq.s32.totalorder %s19, 0
    %p54 = por %p52, %p53
    %p55 = scmp.ne.s32.totalorder %s41, %s42
    %p56 = scmp.eq.s32.totalorder %s20, 3
    %p57 = por %p55, %p56
    %p59 = scmp.ne.s32.totalorder %s42, %s58
    %p60 = scmp.eq.s32.totalorder %s20, 0
    %p61 = por %p59, %p60
    %s63 = sadd.s32 %s62, 1
    %p66 = scmp.eq.s32.totalorder %s14, 3
    %p67 = scmp.ne.s32.totalorder %s62, %s64
    %p68 = scmp.eq.s32.totalorder %s14, 0
    %p69 = por %p67, %p68
    %p70 = scmp.ne.s32.totalorder %s62, %s64
    %p71 = scmp.eq.s32.totalorder %s19, 3
    %p72 = por %p70, %p71
    %p73 = scmp.ne.s32.totalorder %s64, %s65
    %p74 = scmp.eq.s32.totalorder %s19, 0
    %p75 = por %p73, %p74
    %p76 = scmp.ne.s32.totalorder %s64, %s65
    %p77 = scmp.eq.s32.totalorder %s20, 3
    %p78 = por %p76, %p77
    %p80 = scmp.ne.s32.totalorder %s65, %s79
    %p81 = scmp.eq.s32.totalorder %s20, 0
    %p82 = por %p80, %p81
    %s84 = sadd.s32 %s83, 1
    %p87 = scmp.eq.s32.totalorder %s14, 3
    %p88 = scmp.ne.s32.totalorder %s83, %s85
    %p89 = scmp.eq.s32.totalorder %s14, 0
    %p90 = por %p88, %p89
    %p91 = scmp.ne.s32.totalorder %s83, %s85
    %p92 = scmp.eq.s32.totalorder %s19, 3
    %p93 = por %p91, %p92
    %p94 = scmp.ne.s32.totalorder %s85, %s86
    %p95 = scmp.eq.s32.totalorder %s19, 0
    %p96 = por %p94, %p95
    %p97 = scmp.ne.s32.totalorder %s85, %s86
    %p98 = scmp.eq.s32.totalorder %s20, 3
    %p99 = por %p97, %p98
    %p101 = scmp.ne.s32.totalorder %s86, %s100
    %p102 = scmp.eq.s32.totalorder %s20, 0
    %p103 = por %p101, %p102
    %s105 = sadd.s32 %s104, 1
    %p108 = scmp.eq.s32.totalorder %s14, 3
    %p109 = scmp.ne.s32.totalorder %s104, %s106
    %p110 = scmp.eq.s32.totalorder %s14, 0
    %p111 = por %p109, %p110
    %p112 = scmp.ne.s32.totalorder %s104, %s106
    %p113 = scmp.eq.s32.totalorder %s19, 3
    %p114 = por %p112, %p113
    %p115 = scmp.ne.s32.totalorder %s106, %s107
    %p116 = scmp.eq.s32.totalorder %s19, 0
    %p117 = por %p115, %p116
    %p118 = scmp.ne.s32.totalorder %s106, %s107
    %p119 = scmp.eq.s32.totalorder %s20, 3
    %p120 = por %p118, %p119
    %p122 = scmp.ne.s32.totalorder %s107, %s121
    %p123 = scmp.eq.s32.totalorder %s20, 0
    %p124 = por %p122, %p123
    %s126 = sadd.s32 %s125, 1
    %p129 = scmp.eq.s32.totalorder %s14, 3
    %p130 = scmp.ne.s32.totalorder %s125, %s127
    %p131 = scmp.eq.s32.totalorder %s14, 0
    %p132 = por %p130, %p131
    %p133 = scmp.ne.s32.totalorder %s125, %s127
    %p134 = scmp.eq.s32.totalorder %s19, 3
    %p135 = por %p133, %p134
    %p136 = scmp.ne.s32.totalorder %s127, %s128
    %p137 = scmp.eq.s32.totalorder %s19, 0
    %p138 = por %p136, %p137
    %p139 = scmp.ne.s32.totalorder %s127, %s128
    %p140 = scmp.eq.s32.totalorder %s20, 3
    %p141 = por %p139, %p140
    %p143 = scmp.ne.s32.totalorder %s128, %s142
    %p144 = scmp.eq.s32.totalorder %s20, 0
    %p145 = por %p143, %p144
    %s147 = sadd.s32 %s146, 1
    %p150 = scmp.eq.s32.totalorder %s14, 3
    %p151 = scmp.ne.s32.totalorder %s146, %s148
    %p152 = scmp.eq.s32.totalorder %s14, 0
    %p153 = por %p151, %p152
    %p154 = scmp.ne.s32.totalorder %s146, %s148
    %p155 = scmp.eq.s32.totalorder %s19, 3
    %p156 = por %p154, %p155
    %p157 = scmp.ne.s32.totalorder %s148, %s149
    %p158 = scmp.eq.s32.totalorder %s19, 0
    %p159 = por %p157, %p158
    %p160 = scmp.ne.s32.totalorder %s148, %s149
    %p161 = scmp.eq.s32.totalorder %s20, 3
    %p162 = por %p160, %p161
    %p164 = scmp.ne.s32.totalorder %s149, %s163
    %p165 = scmp.eq.s32.totalorder %s20, 0
    %p166 = por %p164, %p165
    %s168 = sadd.s32 %s167, 1
    %p171 = scmp.eq.s32.totalorder %s14, 3
    %p172 = scmp.ne.s32.totalorder %s167, %s169
    %p173 = scmp.eq.s32.totalorder %s14, 0
    %p174 = por %p172, %p173
    %p175 = scmp.ne.s32.totalorder %s167, %s169
    %p176 = scmp.eq.s32.totalorder %s19, 3
    %p177 = por %p175, %p176
    %p178 = scmp.ne.s32.totalorder %s169, %s170
    %p179 = scmp.eq.s32.totalorder %s19, 0
    %p180 = por %p178, %p179
    %p181 = scmp.ne.s32.totalorder %s169, %s170
    %p182 = scmp.eq.s32.totalorder %s20, 3
    %p183 = por %p181, %p182
    %p185 = scmp.ne.s32.totalorder %s170, %s184
    %p186 = scmp.eq.s32.totalorder %s20, 0
    %p187 = por %p185, %p186
    %s188 = ssub.s32 %s22, %s29
    %p189 = scmp.eq.s32.totalorder %s188, 0
    %s191 = sadd.s32 %s190, 1
    %s192 = scalar_select %p189, %s190, %s191
    %p195 = pneg %p189
    %p196 = scmp.eq.s32.totalorder %s14, 3
    %p197 = por %p195, %p196
    %p198 = scmp.ne.s32.totalorder %s190, %s193
    %p199 = scmp.eq.s32.totalorder %s14, 0
    %p200 = por %p198, %p199
    %p201 = scmp.ne.s32.totalorder %s190, %s193
    %p202 = scmp.eq.s32.totalorder %s19, 3
    %p203 = por %p201, %p202
    %p204 = scmp.ne.s32.totalorder %s193, %s194
    %p205 = scmp.eq.s32.totalorder %s19, 0
    %p206 = por %p204, %p205
    %p207 = scmp.ne.s32.totalorder %s193, %s194
    %p208 = scmp.eq.s32.totalorder %s20, 3
    %p209 = por %p207, %p208
    %p211 = scmp.ne.s32.totalorder %s194, %s210
    %p212 = scmp.eq.s32.totalorder %s20, 0
    %p213 = por %p211, %p212
    %s214 = ssub.s32 %s21, %s33
    %s215 = ssub.s32 %s22, %s29
    %s216 = sor.u32 %s214, %s215
    %p217 = scmp.eq.s32.totalorder %s216, 0
    %s219 = sadd.s32 %s218, 1
    %s220 = scalar_select %p217, %s218, %s219
    %p223 = pneg %p217
    %p224 = scmp.eq.s32.totalorder %s14, 3
    %p225 = por %p223, %p224
    %p226 = scmp.ne.s32.totalorder %s218, %s221
    %p227 = scmp.eq.s32.totalorder %s14, 0
    %p228 = por %p226, %p227
    %p229 = scmp.ne.s32.totalorder %s218, %s221
    %p230 = scmp.eq.s32.totalorder %s19, 3
    %p231 = por %p229, %p230
    %p232 = scmp.ne.s32.totalorder %s221, %s222
    %p233 = scmp.eq.s32.totalorder %s19, 0
    %p234 = por %p232, %p233
    %p235 = scmp.ne.s32.totalorder %s221, %s222
    %p236 = scmp.eq.s32.totalorder %s20, 3
    %p237 = por %p235, %p236
    %p239 = scmp.ne.s32.totalorder %s222, %s238
    %p240 = scmp.eq.s32.totalorder %s20, 0
    %p241 = por %p239, %p240
    %p242 = scmp.le.s32.totalorder 1, %s14
    %p243 = scmp.lt.s32.totalorder %s14, 5
    %p244 = pnand %p242, %p243
    %p245 = pneg %p244
    // Predicated region
    $region9: #{residual_dense_block_5c.1} parent=5 // pred_check
      _
    $region10: #{residual_dense_block_5c.1} parent=5 // pred_check_branch
      %247 = sbr.rel (%p244) target = $region12
    $region11: #{residual_dense_block_5c.1} parent=5 // pred_region
      %s248 = ssub.s32 %s14, 1
      // Predicated region
      $region13: #{residual_dense_block_5c.1} parent=11 // pred_check
        %p249 = pneg %p75
      $region14: #{residual_dense_block_5c.1} parent=11 // pred_check_branch
        %251 = sbr.rel (%p249) target = $region16
      $region15: #{residual_dense_block_5c.1} parent=11 // pred_region
        _
      $region16: #{residual_dense_block_5c.1} parent=11 // pred_fallthru
        _
      // Predicated region
      $region17: #{residual_dense_block_5c.1} parent=11 // pred_check
        %p252 = pneg %p96
      $region18: #{residual_dense_block_5c.1} parent=11 // pred_check_branch
        %254 = sbr.rel (%p252) target = $region20
      $region19: #{residual_dense_block_5c.1} parent=11 // pred_region
        _
      $region20: #{residual_dense_block_5c.1} parent=11 // pred_fallthru
        _
      // Predicated region
      $region21: #{residual_dense_block_5c.1} parent=11 // pred_check
        %p255 = pneg %p117
      $region22: #{residual_dense_block_5c.1} parent=11 // pred_check_branch
        %257 = sbr.rel (%p255) target = $region24
      $region23: #{residual_dense_block_5c.1} parent=11 // pred_region
        _
      $region24: #{residual_dense_block_5c.1} parent=11 // pred_fallthru
        _
      // Predicated region
      $region25: #{residual_dense_block_5c.1} parent=11 // pred_check
        %p258 = pneg %p138
      $region26: #{residual_dense_block_5c.1} parent=11 // pred_check_branch
        %260 = sbr.rel (%p258) target = $region28
      $region27: #{residual_dense_block_5c.1} parent=11 // pred_region
        _
      $region28: #{residual_dense_block_5c.1} parent=11 // pred_fallthru
        _
      // Predicated region
      $region29: #{residual_dense_block_5c.1} parent=11 // pred_check
        %p261 = pneg %p159
      $region30: #{residual_dense_block_5c.1} parent=11 // pred_check_branch
        %263 = sbr.rel (%p261) target = $region32
      $region31: #{residual_dense_block_5c.1} parent=11 // pred_region
        _
      $region32: #{residual_dense_block_5c.1} parent=11 // pred_fallthru
        _
      // Predicated region
      $region33: #{residual_dense_block_5c.1} parent=11 // pred_check
        %p264 = pneg %p180
      $region34: #{residual_dense_block_5c.1} parent=11 // pred_check_branch
        %266 = sbr.rel (%p264) target = $region36
      $region35: #{residual_dense_block_5c.1} parent=11 // pred_region
        _
      $region36: #{residual_dense_block_5c.1} parent=11 // pred_fallthru
        _
    $region12: #{residual_dense_block_5c.1} parent=5 // pred_fallthru
      _
    %p267 = scmp.lt.s32.totalorder %s14, 4
    // Predicated region
    $region37: #{residual_dense_block_5c.1} parent=5 // pred_check
      %p268 = pneg %p267
    $region38: #{residual_dense_block_5c.1} parent=5 // pred_check_branch
      %270 = sbr.rel (%p268) target = $region40
    $region39: #{residual_dense_block_5c.1} parent=5 // pred_region
      // Predicated region
      $region41: #{residual_dense_block_5c.1} parent=39 // pred_check
        %p271 = pneg %p48
      $region42: #{residual_dense_block_5c.1} parent=39 // pred_check_branch
        %273 = sbr.rel (%p271) target = $region44
      $region43: #{residual_dense_block_5c.1} parent=39 // pred_region
        %p274 = scmp.lt.s32.totalorder %s21, 1
        %s275 = scalar_select %p274, %s21, 1
        %p276 = scmp.lt.s32.totalorder %s22, 1
        %s277 = scalar_select %p276, %s22, 1
        %s278 = smul.addr %s277, 3
        %s279 = smul.addr %s275, 6
        %s280 = sadd.s32 %s278, %s279
        %s281 = smul.addr %s280, 2
        %s282 = scalar_lea.vmem %s0, %s281
      $region44: #{residual_dense_block_5c.1} parent=39 // pred_fallthru
        _
      // Predicated region
      $region45: #{residual_dense_block_5c.1} parent=39 // pred_check
        %p283 = pneg %p200
      $region46: #{residual_dense_block_5c.1} parent=39 // pred_check_branch
        %285 = sbr.rel (%p283) target = $region48
      $region47: #{residual_dense_block_5c.1} parent=39 // pred_region
        %p286 = scmp.lt.s32.totalorder %s22, 1
        %s287 = scalar_select %p286, %s22, 1
        %s288 = smul.addr %s287, 3
        %s289 = scalar_lea.vmem %s7, %s288
      $region48: #{residual_dense_block_5c.1} parent=39 // pred_fallthru
        _
    $region40: #{residual_dense_block_5c.1} parent=5 // pred_fallthru
      _
    %p290 = scmp.le.s32.totalorder 1, %s14
    %p291 = scmp.lt.s32.totalorder %s14, 5
    %p292 = pnand %p290, %p291
    %p293 = pneg %p292
    // Predicated region
    $region49: #{residual_dense_block_5c.1} parent=5 // pred_check
      _
    $region50: #{residual_dense_block_5c.1} parent=5 // pred_check_branch
      %295 = sbr.rel (%p292) target = $region52
    $region51: #{residual_dense_block_5c.1} parent=5 // pred_region
      %s296 = ssub.s32 %s14, 1
      %p297 = scmp.lt.s32.totalorder %s23, 1
      %s298 = scalar_select %p297, %s23, 1
      %p299 = scmp.lt.s32.totalorder %s24, 1
      %s300 = scalar_select %p299, %s24, 1
      %s301 = smul.addr %s300, 3
      %s302 = smul.addr %s298, 6
      %s303 = sadd.s32 %s301, %s302
      %s304 = smul.addr %s303, 2
      %s305 = scalar_lea.vmem %s0, %s304
      %p306 = pneg %p54
      %p307 = pneg %p51
      %p308 = pneg %p75
      %p309 = pneg %p72
      %p310 = pneg %p96
      %p311 = pneg %p93
      %p312 = pneg %p117
      %p313 = pneg %p114
      %p314 = pneg %p138
      %p315 = pneg %p135
      %p316 = pneg %p159
      %p317 = pneg %p156
      %p318 = pneg %p180
      %p319 = pneg %p177
      %p320 = scmp.lt.s32.totalorder %s24, 1
      %s321 = scalar_select %p320, %s24, 1
      %s322 = smul.addr %s321, 3
      %s323 = scalar_lea.vmem %s7, %s322
      %p324 = pneg %p206
      %p325 = pneg %p203
      %p326 = pneg %p234
      %p327 = pneg %p231
      %p328 = scmp.lt.s32.totalorder %s23, 1
      %s329 = scalar_select %p328, %s23, 1
      %p330 = scmp.lt.s32.totalorder %s24, 1
      %s331 = scalar_select %p330, %s24, 1
      %s332 = smul.addr %s331, 2
      %s333 = smul.addr %s329, 4
      %s334 = sadd.s32 %s332, %s333
      %s335 = smul.addr %s334, 4
      %s336 = scalar_lea.vmem %s8, %s335
      %p337 = scmp.lt.s32.totalorder %s23, 1
      %s338 = scalar_select %p337, %s23, 1
      %p339 = scmp.lt.s32.totalorder %s24, 1
      %s340 = scalar_select %p339, %s24, 1
      %s341 = smul.addr %s340, 3
      %s342 = smul.addr %s338, 6
      %s343 = sadd.s32 %s341, %s342
      %s344 = smul.addr %s343, 2
      %s345 = scalar_lea.vmem %s0, %s344
      %p346 = scmp.lt.s32.totalorder %s24, 1
      %s347 = scalar_select %p346, %s24, 1
      %s348 = smul.addr %s347, 3
      %s349 = scalar_lea.vmem %s7, %s348
      %p350 = scmp.lt.s32.totalorder %s23, 1
      %s351 = scalar_select %p350, %s23, 1
      %p352 = scmp.lt.s32.totalorder %s24, 1
      %s353 = scalar_select %p352, %s24, 1
      %s354 = smul.addr %s353, 2
      %s355 = smul.addr %s351, 4
      %s356 = sadd.s32 %s354, %s355
      %s357 = smul.addr %s356, 4
      %s358 = scalar_lea.vmem %s8, %s357
      %vm360 = vcmask 150528
      %361 = vst.msk [vmem:[#allocation2] sm:$0xf] %vm360, 0
      %362 = vst.msk [vmem:[#allocation2 + $0xc] sm:$0xf] %vm360, 0
      %363 = vst.msk [vmem:[#allocation2 + $0x18] sm:$0xf] %vm360, 0
      %364 = vst.msk [vmem:[#allocation2 + $0x24] sm:$0xf] %vm360, 0
      %vm365 = vcmask 148480
      %366 = vst.msk [vmem:[#allocation2 + $0x30] sm:$0x3] %vm365, 0
      %vm367 = vcmask 863920
      %368 = vst.msk [vmem:[#allocation2 + $0x8] sm:$0xf] %vm367, 0
      %369 = vst.msk [vmem:[#allocation2 + $0x14] sm:$0xf] %vm367, 0
      %370 = vst.msk [vmem:[#allocation2 + $0x20] sm:$0xf] %vm367, 0
      %371 = vst.msk [vmem:[#allocation2 + $0x2c] sm:$0xf] %vm367, 0
      %vm372 = vcmask 861872
      %373 = vst.msk [vmem:[#allocation2 + $0x38] sm:$0x3] %vm372, 0
      %v374 = vld [vmem:[%s345] sm:$0x3f]
      %376 = vst [vmem:[#allocation1] ss:$2 sm:$0xff] %v374
      %v377 = vld.sshfl [vmem:[#allocation1] sm:$0xff pattern:$0x75643120]
      %v379 = vld.sshfl [vmem:[#allocation1 + $0x8] sm:$0xff pattern:$0x75643120]
      %381 = vrot.lane.b32.xlu0 %v377, 19
      %v382 = vpop.permute.xlu0 %381
      %383 = vrot.lane.b32.xlu0 %v379, 19
      %v384 = vpop.permute.xlu0 %383
      %v385 = vrot.slane %v382, 4
      %vm386 = vcmask 154624
      %v387 = vsel %vm386, %v385, %v382
      %v388 = vsel %vm386, %v385, %v384
      %vm391 = vcmask 1041560
      %vm392 = vcmask 1045508
      %vm393 = vmor %vm392, %vm391
      %394 = vst.msk [vmem:[#allocation2] sm:$0x33] %vm393, %v387
      %vm395 = vcmask 705536
      %396 = vst.msk [vmem:[#allocation2 + $0x8] sm:$0x3] %vm395, %v388
      %v397 = vld [vmem:[%s349] sm:$0x7]
      %v398 = vld [vmem:[%s1] sm:$0xf]
      %s399 = scalar_lea.vmem %s1, 4
      %v400 = vld [vmem:[%s399] sm:$0xf]
      %s401 = scalar_lea.vmem %s1, 8
      %v402 = vld [vmem:[%s401] sm:$0xf]
      %s403 = scalar_lea.vmem %s1, 12
      %v404 = vld [vmem:[%s403] sm:$0xf]
      %s405 = scalar_lea.vmem %s1, 16
      %v406 = vld [vmem:[%s405] sm:$0xf]
      %s407 = scalar_lea.vmem %s1, 20
      %v408 = vld [vmem:[%s407] sm:$0xf]
      %s409 = scalar_lea.vmem %s1, 24
      %v410 = vld [vmem:[%s409] sm:$0xf]
      %s411 = scalar_lea.vmem %s1, 28
      %v412 = vld [vmem:[%s411] sm:$0xf]
      %s413 = scalar_lea.vmem %s1, 32
      %v414 = vld [vmem:[%s413] sm:$0xf]
      %v415 = vld [vmem:[%s6] sm:$0xff]
      %v416 = vld [vmem:[#allocation2] sm:$0x33]
      %v417 = vld [vmem:[#allocation2 + $0x8] sm:$0x3]
      %v420 = vunpack.c.l.b16 %v416
      %v421 = vunpack.c.h.b16 %v416
      %v422 = vunpack.c.l.b16 %v417
      %v423 = vpack.c.b16 %v420, %v420
      %v424 = vpack.c.b16 %v421, %v421
      %v425 = vpack.c.b16 %v422, %v422
      %426 = vrot.lane.b32.xlu0 %v423, 127
      %v427 = vpop.permute.xlu0 %426
      %428 = vrot.lane.b32.xlu0 %v424, 127
      %v429 = vpop.permute.xlu0 %428
      %430 = vrot.lane.b32.xlu0 %v425, 127
      %v431 = vpop.permute.xlu0 %430
      %vm432 = vcmask 1039360
      %v433 = vsel %vm432, %v427, %v429
      %v434 = vsel %vm432, %v429, %v431
      %vm435 = vcmask 31744
      %v437 = vsel %vm435, %v400, 0
      %vm439 = vcmask 1041408
      %v441 = vsel %vm439, %v433, 0
      %v444 = vsel %vm439, %v434, 0
      %v447 = vsel %vm439, %v431, 0
      %449 = vmatpush.bf16.msra.mxu0 0
      %450 = vmatpush.bf16.msra.mxu0 0
      %451 = vmatpush.bf16.msra.mxu0 0
      %452 = vmatpush.bf16.msra.mxu0 0
      %453 = vmatpush.bf16.msra.mxu0 0
      %454 = vmatpush.bf16.msra.mxu0 0
      %455 = vmatpush.bf16.msra.mxu0 0
      %456 = vmatpush.bf16.msra.mxu0 %v441
      %457 = vmatmul.bf16.gmra.mxu0 %v437
      %v458 = vpop.f32.mrf.mxu0
      %v459 = vadd.f32 0.0, %v458
      %v460 = vpop.f32.mrf.mxu0
      %461 = vdwg.mxu0
      %462 = vmatpush.bf16.msra.mxu0 0
      %463 = vmatpush.bf16.msra.mxu0 0
      %464 = vmatpush.bf16.msra.mxu0 0
      %465 = vmatpush.bf16.msra.mxu0 0
      %466 = vmatpush.bf16.msra.mxu0 0
      %467 = vmatpush.bf16.msra.mxu0 0
      %468 = vmatpush.bf16.msra.mxu0 0
      %469 = vmatpush.bf16.msra.mxu0 %v444
      %470 = vmatmul.bf16.gmra.mxu0 %v437
      %v471 = vpop.f32.mrf.mxu0
      %v472 = vadd.f32 0.0, %v471
      %v473 = vpop.f32.mrf.mxu0
      %474 = vdwg.mxu0
      %475 = vmatpush.bf16.msra.mxu0 0
      %476 = vmatpush.bf16.msra.mxu0 0
      %477 = vmatpush.bf16.msra.mxu0 0
      %478 = vmatpush.bf16.msra.mxu0 0
      %479 = vmatpush.bf16.msra.mxu0 0
      %480 = vmatpush.bf16.msra.mxu0 0
      %481 = vmatpush.bf16.msra.mxu0 0
      %482 = vmatpush.bf16.msra.mxu0 %v447
      %483 = vmatmul.bf16.gmra.mxu0 %v437
      %v484 = vpop.f32.mrf.mxu0
      %v485 = vadd.f32 0.0, %v484
      %v486 = vpop.f32.mrf.mxu0
      %487 = vdwg.mxu0
      %v489 = vsel %vm435, %v398, 0
      %v492 = vsel %vm439, %v423, 0
      %v495 = vsel %vm439, %v424, 0
      %v498 = vsel %vm439, %v425, 0
      %500 = vmatpush.bf16.msra.mxu0 0
      %501 = vmatpush.bf16.msra.mxu0 0
      %502 = vmatpush.bf16.msra.mxu0 0
      %503 = vmatpush.bf16.msra.mxu0 0
      %504 = vmatpush.bf16.msra.mxu0 0
      %505 = vmatpush.bf16.msra.mxu0 0
      %506 = vmatpush.bf16.msra.mxu0 0
      %507 = vmatpush.bf16.msra.mxu0 %v492
      %508 = vmatmul.bf16.gmra.mxu0 %v489
      %v509 = vpop.f32.mrf.mxu0
      %v510 = vadd.f32 %v459, %v509
      %v511 = vpop.f32.mrf.mxu0
      %512 = vdwg.mxu0
      %513 = vmatpush.bf16.msra.mxu0 0
      %514 = vmatpush.bf16.msra.mxu0 0
      %515 = vmatpush.bf16.msra.mxu0 0
      %516 = vmatpush.bf16.msra.mxu0 0
      %517 = vmatpush.bf16.msra.mxu0 0
      %518 = vmatpush.bf16.msra.mxu0 0
      %519 = vmatpush.bf16.msra.mxu0 0
      %520 = vmatpush.bf16.msra.mxu0 %v495
      %521 = vmatmul.bf16.gmra.mxu0 %v489
      %v522 = vpop.f32.mrf.mxu0
      %v523 = vadd.f32 %v472, %v522
      %v524 = vpop.f32.mrf.mxu0
      %525 = vdwg.mxu0
      %526 = vmatpush.bf16.msra.mxu0 0
      %527 = vmatpush.bf16.msra.mxu0 0
      %528 = vmatpush.bf16.msra.mxu0 0
      %529 = vmatpush.bf16.msra.mxu0 0
      %530 = vmatpush.bf16.msra.mxu0 0
      %531 = vmatpush.bf16.msra.mxu0 0
      %532 = vmatpush.bf16.msra.mxu0 0
      %533 = vmatpush.bf16.msra.mxu0 %v498
      %534 = vmatmul.bf16.gmra.mxu0 %v489
      %v535 = vpop.f32.mrf.mxu0
      %v536 = vadd.f32 %v485, %v535
      %v537 = vpop.f32.mrf.mxu0
      %538 = vdwg.mxu0
      %539 = vrot.lane.b32.xlu0 %v423, 126
      %v540 = vpop.permute.xlu0 %539
      %541 = vrot.lane.b32.xlu0 %v424, 126
      %v542 = vpop.permute.xlu0 %541
      %543 = vrot.lane.b32.xlu0 %v425, 126
      %v544 = vpop.permute.xlu0 %543
      %vm545 = vcmask 1031168
      %v546 = vsel %vm545, %v540, %v542
      %v547 = vsel %vm545, %v542, %v544
      %v549 = vsel %vm435, %v402, 0
      %v552 = vsel %vm439, %v546, 0
      %v555 = vsel %vm439, %v547, 0
      %v558 = vsel %vm439, %v544, 0
      %560 = vmatpush.bf16.msra.mxu0 0
      %561 = vmatpush.bf16.msra.mxu0 0
      %562 = vmatpush.bf16.msra.mxu0 0
      %563 = vmatpush.bf16.msra.mxu0 0
      %564 = vmatpush.bf16.msra.mxu0 0
      %565 = vmatpush.bf16.msra.mxu0 0
      %566 = vmatpush.bf16.msra.mxu0 0
      %567 = vmatpush.bf16.msra.mxu0 %v552
      %568 = vmatmul.bf16.gmra.mxu0 %v549
      %v569 = vpop.f32.mrf.mxu0
      %v570 = vadd.f32 0.0, %v569
      %v571 = vpop.f32.mrf.mxu0
      %572 = vdwg.mxu0
      %573 = vmatpush.bf16.msra.mxu0 0
      %574 = vmatpush.bf16.msra.mxu0 0
      %575 = vmatpush.bf16.msra.mxu0 0
      %576 = vmatpush.bf16.msra.mxu0 0
      %577 = vmatpush.bf16.msra.mxu0 0
      %578 = vmatpush.bf16.msra.mxu0 0
      %579 = vmatpush.bf16.msra.mxu0 0
      %580 = vmatpush.bf16.msra.mxu0 %v555
      %581 = vmatmul.bf16.gmra.mxu0 %v549
      %v582 = vpop.f32.mrf.mxu0
      %v583 = vadd.f32 0.0, %v582
      %v584 = vpop.f32.mrf.mxu0
      %585 = vdwg.mxu0
      %586 = vmatpush.bf16.msra.mxu0 0
      %587 = vmatpush.bf16.msra.mxu0 0
      %588 = vmatpush.bf16.msra.mxu0 0
      %589 = vmatpush.bf16.msra.mxu0 0
      %590 = vmatpush.bf16.msra.mxu0 0
      %591 = vmatpush.bf16.msra.mxu0 0
      %592 = vmatpush.bf16.msra.mxu0 0
      %593 = vmatpush.bf16.msra.mxu0 %v558
      %594 = vmatmul.bf16.gmra.mxu0 %v549
      %v595 = vpop.f32.mrf.mxu0
      %v596 = vadd.f32 0.0, %v595
      %v597 = vpop.f32.mrf.mxu0
      %598 = vdwg.mxu0
      %v599 = vadd.f32 %v510, %v570
      %v600 = vadd.f32 %v523, %v583
      %v601 = vadd.f32 %v536, %v596
      %602 = vrot.lane.b32.xlu0 %v423, 110
      %v603 = vpop.permute.xlu0 %602
      %604 = vrot.lane.b32.xlu0 %v424, 110
      %v605 = vpop.permute.xlu0 %604
      %606 = vrot.lane.b32.xlu0 %v425, 110
      %v607 = vpop.permute.xlu0 %606
      %vm608 = vcmask 900096
      %v609 = vsel %vm608, %v603, %v605
      %v610 = vsel %vm608, %v605, %v607
      %v612 = vsel %vm435, %v404, 0
      %v615 = vsel %vm439, %v609, 0
      %v618 = vsel %vm439, %v610, 0
      %v621 = vsel %vm439, %v607, 0
      %623 = vmatpush.bf16.msra.mxu0 0
      %624 = vmatpush.bf16.msra.mxu0 0
      %625 = vmatpush.bf16.msra.mxu0 0
      %626 = vmatpush.bf16.msra.mxu0 0
      %627 = vmatpush.bf16.msra.mxu0 0
      %628 = vmatpush.bf16.msra.mxu0 0
      %629 = vmatpush.bf16.msra.mxu0 0
      %630 = vmatpush.bf16.msra.mxu0 %v615
      %631 = vmatmul.bf16.gmra.mxu0 %v612
      %v632 = vpop.f32.mrf.mxu0
      %v633 = vadd.f32 0.0, %v632
      %v634 = vpop.f32.mrf.mxu0
      %635 = vdwg.mxu0
      %636 = vmatpush.bf16.msra.mxu0 0
      %637 = vmatpush.bf16.msra.mxu0 0
      %638 = vmatpush.bf16.msra.mxu0 0
      %639 = vmatpush.bf16.msra.mxu0 0
      %640 = vmatpush.bf16.msra.mxu0 0
      %641 = vmatpush.bf16.msra.mxu0 0
      %642 = vmatpush.bf16.msra.mxu0 0
      %643 = vmatpush.bf16.msra.mxu0 %v618
      %644 = vmatmul.bf16.gmra.mxu0 %v612
      %v645 = vpop.f32.mrf.mxu0
      %v646 = vadd.f32 0.0, %v645
      %v647 = vpop.f32.mrf.mxu0
      %648 = vdwg.mxu0
      %649 = vmatpush.bf16.msra.mxu0 0
      %650 = vmatpush.bf16.msra.mxu0 0
      %651 = vmatpush.bf16.msra.mxu0 0
      %652 = vmatpush.bf16.msra.mxu0 0
      %653 = vmatpush.bf16.msra.mxu0 0
      %654 = vmatpush.bf16.msra.mxu0 0
      %655 = vmatpush.bf16.msra.mxu0 0
      %656 = vmatpush.bf16.msra.mxu0 %v621
      %657 = vmatmul.bf16.gmra.mxu0 %v612
      %v658 = vpop.f32.mrf.mxu0
      %v659 = vadd.f32 0.0, %v658
      %v660 = vpop.f32.mrf.mxu0
      %661 = vdwg.mxu0
      %v662 = vadd.f32 %v599, %v633
      %v663 = vadd.f32 %v600, %v646
      %v664 = vadd.f32 %v601, %v659
      %665 = vrot.lane.b32.xlu0 %v423, 109
      %v666 = vpop.permute.xlu0 %665
      %667 = vrot.lane.b32.xlu0 %v424, 109
      %v668 = vpop.permute.xlu0 %667
      %669 = vrot.lane.b32.xlu0 %v425, 109
      %v670 = vpop.permute.xlu0 %669
      %vm671 = vcmask 891904
      %v672 = vsel %vm671, %v666, %v668
      %v673 = vsel %vm671, %v668, %v670
      %v675 = vsel %vm435, %v406, 0
      %v678 = vsel %vm439, %v672, 0
      %v681 = vsel %vm439, %v673, 0
      %v684 = vsel %vm439, %v670, 0
      %686 = vmatpush.bf16.msra.mxu0 0
      %687 = vmatpush.bf16.msra.mxu0 0
      %688 = vmatpush.bf16.msra.mxu0 0
      %689 = vmatpush.bf16.msra.mxu0 0
      %690 = vmatpush.bf16.msra.mxu0 0
      %691 = vmatpush.bf16.msra.mxu0 0
      %692 = vmatpush.bf16.msra.mxu0 0
      %693 = vmatpush.bf16.msra.mxu0 %v678
      %694 = vmatmul.bf16.gmra.mxu0 %v675
      %v695 = vpop.f32.mrf.mxu0
      %v696 = vadd.f32 0.0, %v695
      %v697 = vpop.f32.mrf.mxu0
      %698 = vdwg.mxu0
      %699 = vmatpush.bf16.msra.mxu0 0
      %700 = vmatpush.bf16.msra.mxu0 0
      %701 = vmatpush.bf16.msra.mxu0 0
      %702 = vmatpush.bf16.msra.mxu0 0
      %703 = vmatpush.bf16.msra.mxu0 0
      %704 = vmatpush.bf16.msra.mxu0 0
      %705 = vmatpush.bf16.msra.mxu0 0
      %706 = vmatpush.bf16.msra.mxu0 %v681
      %707 = vmatmul.bf16.gmra.mxu0 %v675
      %v708 = vpop.f32.mrf.mxu0
      %v709 = vadd.f32 0.0, %v708
      %v710 = vpop.f32.mrf.mxu0
      %711 = vdwg.mxu0
      %712 = vmatpush.bf16.msra.mxu0 0
      %713 = vmatpush.bf16.msra.mxu0 0
      %714 = vmatpush.bf16.msra.mxu0 0
      %715 = vmatpush.bf16.msra.mxu0 0
      %716 = vmatpush.bf16.msra.mxu0 0
      %717 = vmatpush.bf16.msra.mxu0 0
      %718 = vmatpush.bf16.msra.mxu0 0
      %719 = vmatpush.bf16.msra.mxu0 %v684
      %720 = vmatmul.bf16.gmra.mxu0 %v675
      %v721 = vpop.f32.mrf.mxu0
      %v722 = vadd.f32 0.0, %v721
      %v723 = vpop.f32.mrf.mxu0
      %724 = vdwg.mxu0
      %v725 = vadd.f32 %v662, %v696
      %v726 = vadd.f32 %v663, %v709
      %v727 = vadd.f32 %v664, %v722
      %728 = vrot.lane.b32.xlu0 %v423, 108
      %v729 = vpop.permute.xlu0 %728
      %730 = vrot.lane.b32.xlu0 %v424, 108
      %v731 = vpop.permute.xlu0 %730
      %732 = vrot.lane.b32.xlu0 %v425, 108
      %v733 = vpop.permute.xlu0 %732
      %vm734 = vcmask 883712
      %v735 = vsel %vm734, %v729, %v731
      %v736 = vsel %vm734, %v731, %v733
      %v738 = vsel %vm435, %v408, 0
      %v741 = vsel %vm439, %v735, 0
      %v744 = vsel %vm439, %v736, 0
      %v747 = vsel %vm439, %v733, 0
      %749 = vmatpush.bf16.msra.mxu0 0
      %750 = vmatpush.bf16.msra.mxu0 0
      %751 = vmatpush.bf16.msra.mxu0 0
      %752 = vmatpush.bf16.msra.mxu0 0
      %753 = vmatpush.bf16.msra.mxu0 0
      %754 = vmatpush.bf16.msra.mxu0 0
      %755 = vmatpush.bf16.msra.mxu0 0
      %756 = vmatpush.bf16.msra.mxu0 %v741
      %757 = vmatmul.bf16.gmra.mxu0 %v738
      %v758 = vpop.f32.mrf.mxu0
      %v759 = vadd.f32 0.0, %v758
      %v760 = vpop.f32.mrf.mxu0
      %761 = vdwg.mxu0
      %762 = vmatpush.bf16.msra.mxu0 0
      %763 = vmatpush.bf16.msra.mxu0 0
      %764 = vmatpush.bf16.msra.mxu0 0
      %765 = vmatpush.bf16.msra.mxu0 0
      %766 = vmatpush.bf16.msra.mxu0 0
      %767 = vmatpush.bf16.msra.mxu0 0
      %768 = vmatpush.bf16.msra.mxu0 0
      %769 = vmatpush.bf16.msra.mxu0 %v744
      %770 = vmatmul.bf16.gmra.mxu0 %v738
      %v771 = vpop.f32.mrf.mxu0
      %v772 = vadd.f32 0.0, %v771
      %v773 = vpop.f32.mrf.mxu0
      %774 = vdwg.mxu0
      %775 = vmatpush.bf16.msra.mxu0 0
      %776 = vmatpush.bf16.msra.mxu0 0
      %777 = vmatpush.bf16.msra.mxu0 0
      %778 = vmatpush.bf16.msra.mxu0 0
      %779 = vmatpush.bf16.msra.mxu0 0
      %780 = vmatpush.bf16.msra.mxu0 0
      %781 = vmatpush.bf16.msra.mxu0 0
      %782 = vmatpush.bf16.msra.mxu0 %v747
      %783 = vmatmul.bf16.gmra.mxu0 %v738
      %v784 = vpop.f32.mrf.mxu0
      %v785 = vadd.f32 0.0, %v784
      %v786 = vpop.f32.mrf.mxu0
      %787 = vdwg.mxu0
      %v788 = vadd.f32 %v725, %v759
      %v789 = vadd.f32 %v726, %v772
      %v790 = vadd.f32 %v727, %v785
      %791 = vrot.lane.b32.xlu0 %v423, 92
      %v792 = vpop.permute.xlu0 %791
      %793 = vrot.lane.b32.xlu0 %v424, 92
      %v794 = vpop.permute.xlu0 %793
      %795 = vrot.lane.b32.xlu0 %v425, 92
      %v796 = vpop.permute.xlu0 %795
      %vm797 = vcmask 752640
      %v798 = vsel %vm797, %v792, %v794
      %v799 = vsel %vm797, %v794, %v796
      %v801 = vsel %vm435, %v410, 0
      %v804 = vsel %vm439, %v798, 0
      %v807 = vsel %vm439, %v799, 0
      %v810 = vsel %vm439, %v796, 0
      %812 = vmatpush.bf16.msra.mxu0 0
      %813 = vmatpush.bf16.msra.mxu0 0
      %814 = vmatpush.bf16.msra.mxu0 0
      %815 = vmatpush.bf16.msra.mxu0 0
      %816 = vmatpush.bf16.msra.mxu0 0
      %817 = vmatpush.bf16.msra.mxu0 0
      %818 = vmatpush.bf16.msra.mxu0 0
      %819 = vmatpush.bf16.msra.mxu0 %v804
      %820 = vmatmul.bf16.gmra.mxu0 %v801
      %v821 = vpop.f32.mrf.mxu0
      %v822 = vadd.f32 0.0, %v821
      %v823 = vpop.f32.mrf.mxu0
      %824 = vdwg.mxu0
      %825 = vmatpush.bf16.msra.mxu0 0
      %826 = vmatpush.bf16.msra.mxu0 0
      %827 = vmatpush.bf16.msra.mxu0 0
      %828 = vmatpush.bf16.msra.mxu0 0
      %829 = vmatpush.bf16.msra.mxu0 0
      %830 = vmatpush.bf16.msra.mxu0 0
      %831 = vmatpush.bf16.msra.mxu0 0
      %832 = vmatpush.bf16.msra.mxu0 %v807
      %833 = vmatmul.bf16.gmra.mxu0 %v801
      %v834 = vpop.f32.mrf.mxu0
      %v835 = vadd.f32 0.0, %v834
      %v836 = vpop.f32.mrf.mxu0
      %837 = vdwg.mxu0
      %838 = vmatpush.bf16.msra.mxu0 0
      %839 = vmatpush.bf16.msra.mxu0 0
      %840 = vmatpush.bf16.msra.mxu0 0
      %841 = vmatpush.bf16.msra.mxu0 0
      %842 = vmatpush.bf16.msra.mxu0 0
      %843 = vmatpush.bf16.msra.mxu0 0
      %844 = vmatpush.bf16.msra.mxu0 0
      %845 = vmatpush.bf16.msra.mxu0 %v810
      %846 = vmatmul.bf16.gmra.mxu0 %v801
      %v847 = vpop.f32.mrf.mxu0
      %v848 = vadd.f32 0.0, %v847
      %v849 = vpop.f32.mrf.mxu0
      %850 = vdwg.mxu0
      %v851 = vadd.f32 %v788, %v822
      %v852 = vadd.f32 %v789, %v835
      %v853 = vadd.f32 %v790, %v848
      %854 = vrot.lane.b32.xlu0 %v423, 91
      %v855 = vpop.permute.xlu0 %854
      %856 = vrot.lane.b32.xlu0 %v424, 91
      %v857 = vpop.permute.xlu0 %856
      %858 = vrot.lane.b32.xlu0 %v425, 91
      %v859 = vpop.permute.xlu0 %858
      %vm860 = vcmask 744448
      %v861 = vsel %vm860, %v855, %v857
      %v862 = vsel %vm860, %v857, %v859
      %v864 = vsel %vm435, %v412, 0
      %v867 = vsel %vm439, %v861, 0
      %v870 = vsel %vm439, %v862, 0
      %v873 = vsel %vm439, %v859, 0
      %875 = vmatpush.bf16.msra.mxu0 0
      %876 = vmatpush.bf16.msra.mxu0 0
      %877 = vmatpush.bf16.msra.mxu0 0
      %878 = vmatpush.bf16.msra.mxu0 0
      %879 = vmatpush.bf16.msra.mxu0 0
      %880 = vmatpush.bf16.msra.mxu0 0
      %881 = vmatpush.bf16.msra.mxu0 0
      %882 = vmatpush.bf16.msra.mxu0 %v867
      %883 = vmatmul.bf16.gmra.mxu0 %v864
      %v884 = vpop.f32.mrf.mxu0
      %v885 = vadd.f32 0.0, %v884
      %v886 = vpop.f32.mrf.mxu0
      %887 = vdwg.mxu0
      %888 = vmatpush.bf16.msra.mxu0 0
      %889 = vmatpush.bf16.msra.mxu0 0
      %890 = vmatpush.bf16.msra.mxu0 0
      %891 = vmatpush.bf16.msra.mxu0 0
      %892 = vmatpush.bf16.msra.mxu0 0
      %893 = vmatpush.bf16.msra.mxu0 0
      %894 = vmatpush.bf16.msra.mxu0 0
      %895 = vmatpush.bf16.msra.mxu0 %v870
      %896 = vmatmul.bf16.gmra.mxu0 %v864
      %v897 = vpop.f32.mrf.mxu0
      %v898 = vadd.f32 0.0, %v897
      %v899 = vpop.f32.mrf.mxu0
      %900 = vdwg.mxu0
      %901 = vmatpush.bf16.msra.mxu0 0
      %902 = vmatpush.bf16.msra.mxu0 0
      %903 = vmatpush.bf16.msra.mxu0 0
      %904 = vmatpush.bf16.msra.mxu0 0
      %905 = vmatpush.bf16.msra.mxu0 0
      %906 = vmatpush.bf16.msra.mxu0 0
      %907 = vmatpush.bf16.msra.mxu0 0
      %908 = vmatpush.bf16.msra.mxu0 %v873
      %909 = vmatmul.bf16.gmra.mxu0 %v864
      %v910 = vpop.f32.mrf.mxu0
      %v911 = vadd.f32 0.0, %v910
      %v912 = vpop.f32.mrf.mxu0
      %913 = vdwg.mxu0
      %v914 = vadd.f32 %v851, %v885
      %v915 = vadd.f32 %v852, %v898
      %v916 = vadd.f32 %v853, %v911
      %917 = vrot.lane.b32.xlu0 %v423, 90
      %v918 = vpop.permute.xlu0 %917
      %919 = vrot.lane.b32.xlu0 %v424, 90
      %v920 = vpop.permute.xlu0 %919
      %921 = vrot.lane.b32.xlu0 %v425, 90
      %v922 = vpop.permute.xlu0 %921
      %vm923 = vcmask 736256
      %v924 = vsel %vm923, %v918, %v920
      %v925 = vsel %vm923, %v920, %v922
      %v927 = vsel %vm435, %v414, 0
      %v930 = vsel %vm439, %v924, 0
      %v933 = vsel %vm439, %v925, 0
      %v936 = vsel %vm439, %v922, 0
      %938 = vmatpush.bf16.msra.mxu0 0
      %939 = vmatpush.bf16.msra.mxu0 0
      %940 = vmatpush.bf16.msra.mxu0 0
      %941 = vmatpush.bf16.msra.mxu0 0
      %942 = vmatpush.bf16.msra.mxu0 0
      %943 = vmatpush.bf16.msra.mxu0 0
      %944 = vmatpush.bf16.msra.mxu0 0
      %945 = vmatpush.bf16.msra.mxu0 %v930
      %946 = vmatmul.bf16.gmra.mxu0 %v927
      %v947 = vpop.f32.mrf.mxu0
      %v948 = vadd.f32 0.0, %v947
      %v949 = vpop.f32.mrf.mxu0
      %950 = vdwg.mxu0
      %951 = vmatpush.bf16.msra.mxu0 0
      %952 = vmatpush.bf16.msra.mxu0 0
      %953 = vmatpush.bf16.msra.mxu0 0
      %954 = vmatpush.bf16.msra.mxu0 0
      %955 = vmatpush.bf16.msra.mxu0 0
      %956 = vmatpush.bf16.msra.mxu0 0
      %957 = vmatpush.bf16.msra.mxu0 0
      %958 = vmatpush.bf16.msra.mxu0 %v933
      %959 = vmatmul.bf16.gmra.mxu0 %v927
      %v960 = vpop.f32.mrf.mxu0
      %v961 = vadd.f32 0.0, %v960
      %v962 = vpop.f32.mrf.mxu0
      %963 = vdwg.mxu0
      %964 = vmatpush.bf16.msra.mxu0 0
      %965 = vmatpush.bf16.msra.mxu0 0
      %966 = vmatpush.bf16.msra.mxu0 0
      %967 = vmatpush.bf16.msra.mxu0 0
      %968 = vmatpush.bf16.msra.mxu0 0
      %969 = vmatpush.bf16.msra.mxu0 0
      %970 = vmatpush.bf16.msra.mxu0 0
      %971 = vmatpush.bf16.msra.mxu0 %v936
      %972 = vmatmul.bf16.gmra.mxu0 %v927
      %v973 = vpop.f32.mrf.mxu0
      %v974 = vadd.f32 0.0, %v973
      %v975 = vpop.f32.mrf.mxu0
      %976 = vdwg.mxu0
      %v977 = vadd.f32 %v914, %v948
      %v978 = vadd.f32 %v915, %v961
      %v979 = vadd.f32 %v916, %v974
      %981 = vset.pattern.permute.xlu0 0
      %982 = vperm.xlu0 %981, %v415
      %v983 = vpop.permute.xlu0 %982
      %v985 = vadd.f32 %v977, %v983
      %v986 = vadd.f32 %v978, %v983
      %v987 = vadd.f32 %v979, %v983
      %vm988 = vcmp.gt.f32.partialorder %v985, 0.0
      %vm989 = vcmp.gt.f32.partialorder %v986, 0.0
      %vm990 = vcmp.gt.f32.partialorder %v987, 0.0
      %v991 = vmul.f32 %v985, 0.02
      %v992 = vmul.f32 %v986, 0.02
      %v993 = vmul.f32 %v987, 0.02
      %v994 = vsel %vm988, %v985, %v991
      %v995 = vsel %vm989, %v986, %v992
      %v996 = vsel %vm990, %v987, %v993
      %v998 = vperm.slane %v397, 0
      %v999 = vperm.slane %v397, 1
      %v1000 = vperm.slane %v397, 2
      %v1004 = vmul.f32 %v994, %v998
      %v1005 = vmul.f32 %v995, %v999
      %v1006 = vmul.f32 %v996, %v1000
      %v1007 = vpack.c.bf16 %v1005, %v1004
      %v1008 = vpack.c.bf16 %v1006, %v1006
      %v1011 = vrot.slane %v1007, 6
      %v1012 = vrot.slane %v1008, 6
      %v1013 = vrot.slane %v1011, 4
      %v1014 = vrot.slane %v1012, 4
      %1015 = vrot.lane.b32.xlu0 %v1011, 19
      %v1016 = vpop.permute.xlu0 %1015
      %1017 = vrot.lane.b32.xlu0 %v1012, 19
      %v1018 = vpop.permute.xlu0 %1017
      %1019 = vrot.lane.b32.xlu0 %v1013, 19
      %v1020 = vpop.permute.xlu0 %1019
      %1021 = vrot.lane.b32.xlu0 %v1014, 19
      %v1022 = vpop.permute.xlu0 %1021
      %v1023 = vrot.slane %v1016, 4
      %v1024 = vrot.slane %v1020, 4
      %v1025 = vsel %vm386, %v1023, %v1016
      %v1026 = vsel %vm386, %v1023, %v1018
      %v1027 = vsel %vm386, %v1024, %v1020
      %v1028 = vsel %vm386, %v1024, %v1022
      %vm1033 = vcmask 1043610
      %vm1034 = vcmask 1047558
      %vm1035 = vmor %vm1034, %vm1033
      %1036 = vst.msk [vmem:[#allocation2] sm:$0xcc] %vm1035, %v1025
      %vm1037 = vcmask 707586
      %1038 = vst.msk [vmem:[#allocation2 + $0x8] sm:$0xc] %vm1037, %v1026
      %1039 = vst.msk [vmem:[#allocation2 + $0xc] sm:$0x33] %vm393, %v1027
      %1040 = vst.msk [vmem:[#allocation2 + $0x14] sm:$0x3] %vm395, %v1028
      %v1041 = vld [vmem:[%s2] sm:$0xf]
      %s1042 = scalar_lea.vmem %s2, 4
      %v1043 = vld [vmem:[%s1042] sm:$0xf]
      %s1044 = scalar_lea.vmem %s2, 8
      %v1045 = vld [vmem:[%s1044] sm:$0xf]
      %s1046 = scalar_lea.vmem %s2, 12
      %v1047 = vld [vmem:[%s1046] sm:$0xf]
      %s1048 = scalar_lea.vmem %s2, 16
      %v1049 = vld [vmem:[%s1048] sm:$0xf]
      %s1050 = scalar_lea.vmem %s2, 20
      %v1051 = vld [vmem:[%s1050] sm:$0xf]
      %s1052 = scalar_lea.vmem %s2, 24
      %v1053 = vld [vmem:[%s1052] sm:$0xf]
      %s1054 = scalar_lea.vmem %s2, 28
      %v1055 = vld [vmem:[%s1054] sm:$0xf]
      %s1056 = scalar_lea.vmem %s2, 32
      %v1057 = vld [vmem:[%s1056] sm:$0xf]
      %v1058 = vld [vmem:[%s6] sm:$0xff]
      %v1059 = vld [vmem:[#allocation2] sm:$0xff]
      %v1060 = vld [vmem:[#allocation2 + $0x8] sm:$0xf]
      %v1061 = vld [vmem:[#allocation2 + $0xc] sm:$0x33]
      %v1062 = vld [vmem:[#allocation2 + $0x14] sm:$0x3]
      %v1067 = vunpack.c.l.b16 %v1059
      %v1068 = vunpack.c.h.b16 %v1059
      %v1069 = vunpack.c.l.b16 %v1060
      %v1070 = vunpack.c.l.b16 %v1061
      %v1071 = vunpack.c.h.b16 %v1061
      %v1072 = vunpack.c.l.b16 %v1062
      %v1073 = vpack.c.b16 %v1070, %v1067
      %v1074 = vpack.c.b16 %v1071, %v1068
      %v1075 = vpack.c.b16 %v1072, %v1069
      %1076 = vrot.lane.b32.xlu0 %v1073, 127
      %v1077 = vpop.permute.xlu0 %1076
      %1078 = vrot.lane.b32.xlu0 %v1074, 127
      %v1079 = vpop.permute.xlu0 %1078
      %1080 = vrot.lane.b32.xlu0 %v1075, 127
      %v1081 = vpop.permute.xlu0 %1080
      %v1082 = vsel %vm432, %v1077, %v1079
      %v1083 = vsel %vm432, %v1079, %v1081
      %vm1084 = vcmask 97280
      %v1086 = vsel %vm1084, %v1043, 0
      %vm1088 = vcmask 1045504
      %v1090 = vsel %vm1088, %v1082, 0
      %v1093 = vsel %vm1088, %v1083, 0
      %v1096 = vsel %vm1088, %v1081, 0
      %1098 = vmatpush.bf16.msra.mxu0 0
      %1099 = vmatpush.bf16.msra.mxu0 0
      %1100 = vmatpush.bf16.msra.mxu0 0
      %1101 = vmatpush.bf16.msra.mxu0 0
      %1102 = vmatpush.bf16.msra.mxu0 0
      %1103 = vmatpush.bf16.msra.mxu0 0
      %1104 = vmatpush.bf16.msra.mxu0 0
      %1105 = vmatpush.bf16.msra.mxu0 %v1090
      %1106 = vmatmul.bf16.gmra.mxu0 %v1086
      %v1107 = vpop.f32.mrf.mxu0
      %v1108 = vadd.f32 0.0, %v1107
      %v1109 = vpop.f32.mrf.mxu0
      %1110 = vdwg.mxu0
      %1111 = vmatpush.bf16.msra.mxu0 0
      %1112 = vmatpush.bf16.msra.mxu0 0
      %1113 = vmatpush.bf16.msra.mxu0 0
      %1114 = vmatpush.bf16.msra.mxu0 0
      %1115 = vmatpush.bf16.msra.mxu0 0
      %1116 = vmatpush.bf16.msra.mxu0 0
      %1117 = vmatpush.bf16.msra.mxu0 0
      %1118 = vmatpush.bf16.msra.mxu0 %v1093
      %1119 = vmatmul.bf16.gmra.mxu0 %v1086
      %v1120 = vpop.f32.mrf.mxu0
      %v1121 = vadd.f32 0.0, %v1120
      %v1122 = vpop.f32.mrf.mxu0
      %1123 = vdwg.mxu0
      %1124 = vmatpush.bf16.msra.mxu0 0
      %1125 = vmatpush.bf16.msra.mxu0 0
      %1126 = vmatpush.bf16.msra.mxu0 0
      %1127 = vmatpush.bf16.msra.mxu0 0
      %1128 = vmatpush.bf16.msra.mxu0 0
      %1129 = vmatpush.bf16.msra.mxu0 0
      %1130 = vmatpush.bf16.msra.mxu0 0
      %1131 = vmatpush.bf16.msra.mxu0 %v1096
      %1132 = vmatmul.bf16.gmra.mxu0 %v1086
      %v1133 = vpop.f32.mrf.mxu0
      %v1134 = vadd.f32 0.0, %v1133
      %v1135 = vpop.f32.mrf.mxu0
      %1136 = vdwg.mxu0
      %v1138 = vsel %vm1084, %v1041, 0
      %v1141 = vsel %vm1088, %v1073, 0
      %v1144 = vsel %vm1088, %v1074, 0
      %v1147 = vsel %vm1088, %v1075, 0
      %1149 = vmatpush.bf16.msra.mxu0 0
      %1150 = vmatpush.bf16.msra.mxu0 0
      %1151 = vmatpush.bf16.msra.mxu0 0
      %1152 = vmatpush.bf16.msra.mxu0 0
      %1153 = vmatpush.bf16.msra.mxu0 0
      %1154 = vmatpush.bf16.msra.mxu0 0
      %1155 = vmatpush.bf16.msra.mxu0 0
      %1156 = vmatpush.bf16.msra.mxu0 %v1141
      %1157 = vmatmul.bf16.gmra.mxu0 %v1138
      %v1158 = vpop.f32.mrf.mxu0
      %v1159 = vadd.f32 %v1108, %v1158
      %v1160 = vpop.f32.mrf.mxu0
      %1161 = vdwg.mxu0
      %1162 = vmatpush.bf16.msra.mxu0 0
      %1163 = vmatpush.bf16.msra.mxu0 0
      %1164 = vmatpush.bf16.msra.mxu0 0
      %1165 = vmatpush.bf16.msra.mxu0 0
      %1166 = vmatpush.bf16.msra.mxu0 0
      %1167 = vmatpush.bf16.msra.mxu0 0
      %1168 = vmatpush.bf16.msra.mxu0 0
      %1169 = vmatpush.bf16.msra.mxu0 %v1144
      %1170 = vmatmul.bf16.gmra.mxu0 %v1138
      %v1171 = vpop.f32.mrf.mxu0
      %v1172 = vadd.f32 %v1121, %v1171
      %v1173 = vpop.f32.mrf.mxu0
      %1174 = vdwg.mxu0
      %1175 = vmatpush.bf16.msra.mxu0 0
      %1176 = vmatpush.bf16.msra.mxu0 0
      %1177 = vmatpush.bf16.msra.mxu0 0
      %1178 = vmatpush.bf16.msra.mxu0 0
      %1179 = vmatpush.bf16.msra.mxu0 0
      %1180 = vmatpush.bf16.msra.mxu0 0
      %1181 = vmatpush.bf16.msra.mxu0 0
      %1182 = vmatpush.bf16.msra.mxu0 %v1147
      %1183 = vmatmul.bf16.gmra.mxu0 %v1138
      %v1184 = vpop.f32.mrf.mxu0
      %v1185 = vadd.f32 %v1134, %v1184
      %v1186 = vpop.f32.mrf.mxu0
      %1187 = vdwg.mxu0
      %1188 = vrot.lane.b32.xlu0 %v1073, 126
      %v1189 = vpop.permute.xlu0 %1188
      %1190 = vrot.lane.b32.xlu0 %v1074, 126
      %v1191 = vpop.permute.xlu0 %1190
      %1192 = vrot.lane.b32.xlu0 %v1075, 126
      %v1193 = vpop.permute.xlu0 %1192
      %v1194 = vsel %vm545, %v1189, %v1191
      %v1195 = vsel %vm545, %v1191, %v1193
      %v1197 = vsel %vm1084, %v1045, 0
      %v1200 = vsel %vm1088, %v1194, 0
      %v1203 = vsel %vm1088, %v1195, 0
      %v1206 = vsel %vm1088, %v1193, 0
      %1208 = vmatpush.bf16.msra.mxu0 0
      %1209 = vmatpush.bf16.msra.mxu0 0
      %1210 = vmatpush.bf16.msra.mxu0 0
      %1211 = vmatpush.bf16.msra.mxu0 0
      %1212 = vmatpush.bf16.msra.mxu0 0
      %1213 = vmatpush.bf16.msra.mxu0 0
      %1214 = vmatpush.bf16.msra.mxu0 0
      %1215 = vmatpush.bf16.msra.mxu0 %v1200
      %1216 = vmatmul.bf16.gmra.mxu0 %v1197
      %v1217 = vpop.f32.mrf.mxu0
      %v1218 = vadd.f32 0.0, %v1217
      %v1219 = vpop.f32.mrf.mxu0
      %1220 = vdwg.mxu0
      %1221 = vmatpush.bf16.msra.mxu0 0
      %1222 = vmatpush.bf16.msra.mxu0 0
      %1223 = vmatpush.bf16.msra.mxu0 0
      %1224 = vmatpush.bf16.msra.mxu0 0
      %1225 = vmatpush.bf16.msra.mxu0 0
      %1226 = vmatpush.bf16.msra.mxu0 0
      %1227 = vmatpush.bf16.msra.mxu0 0
      %1228 = vmatpush.bf16.msra.mxu0 %v1203
      %1229 = vmatmul.bf16.gmra.mxu0 %v1197
      %v1230 = vpop.f32.mrf.mxu0
      %v1231 = vadd.f32 0.0, %v1230
      %v1232 = vpop.f32.mrf.mxu0
      %1233 = vdwg.mxu0
      %1234 = vmatpush.bf16.msra.mxu0 0
      %1235 = vmatpush.bf16.msra.mxu0 0
      %1236 = vmatpush.bf16.msra.mxu0 0
      %1237 = vmatpush.bf16.msra.mxu0 0
      %1238 = vmatpush.bf16.msra.mxu0 0
      %1239 = vmatpush.bf16.msra.mxu0 0
      %1240 = vmatpush.bf16.msra.mxu0 0
      %1241 = vmatpush.bf16.msra.mxu0 %v1206
      %1242 = vmatmul.bf16.gmra.mxu0 %v1197
      %v1243 = vpop.f32.mrf.mxu0
      %v1244 = vadd.f32 0.0, %v1243
      %v1245 = vpop.f32.mrf.mxu0
      %1246 = vdwg.mxu0
      %v1247 = vadd.f32 %v1159, %v1218
      %v1248 = vadd.f32 %v1172, %v1231
      %v1249 = vadd.f32 %v1185, %v1244
      %1250 = vrot.lane.b32.xlu0 %v1073, 110
      %v1251 = vpop.permute.xlu0 %1250
      %1252 = vrot.lane.b32.xlu0 %v1074, 110
      %v1253 = vpop.permute.xlu0 %1252
      %1254 = vrot.lane.b32.xlu0 %v1075, 110
      %v1255 = vpop.permute.xlu0 %1254
      %v1256 = vsel %vm608, %v1251, %v1253
      %v1257 = vsel %vm608, %v1253, %v1255
      %v1259 = vsel %vm1084, %v1047, 0
      %v1262 = vsel %vm1088, %v1256, 0
      %v1265 = vsel %vm1088, %v1257, 0
      %v1268 = vsel %vm1088, %v1255, 0
      %1270 = vmatpush.bf16.msra.mxu0 0
      %1271 = vmatpush.bf16.msra.mxu0 0
      %1272 = vmatpush.bf16.msra.mxu0 0
      %1273 = vmatpush.bf16.msra.mxu0 0
      %1274 = vmatpush.bf16.msra.mxu0 0
      %1275 = vmatpush.bf16.msra.mxu0 0
      %1276 = vmatpush.bf16.msra.mxu0 0
      %1277 = vmatpush.bf16.msra.mxu0 %v1262
      %1278 = vmatmul.bf16.gmra.mxu0 %v1259
      %v1279 = vpop.f32.mrf.mxu0
      %v1280 = vadd.f32 0.0, %v1279
      %v1281 = vpop.f32.mrf.mxu0
      %1282 = vdwg.mxu0
      %1283 = vmatpush.bf16.msra.mxu0 0
      %1284 = vmatpush.bf16.msra.mxu0 0
      %1285 = vmatpush.bf16.msra.mxu0 0
      %1286 = vmatpush.bf16.msra.mxu0 0
      %1287 = vmatpush.bf16.msra.mxu0 0
      %1288 = vmatpush.bf16.msra.mxu0 0
      %1289 = vmatpush.bf16.msra.mxu0 0
      %1290 = vmatpush.bf16.msra.mxu0 %v1265
      %1291 = vmatmul.bf16.gmra.mxu0 %v1259
      %v1292 = vpop.f32.mrf.mxu0
      %v1293 = vadd.f32 0.0, %v1292
      %v1294 = vpop.f32.mrf.mxu0
      %1295 = vdwg.mxu0
      %1296 = vmatpush.bf16.msra.mxu0 0
      %1297 = vmatpush.bf16.msra.mxu0 0
      %1298 = vmatpush.bf16.msra.mxu0 0
      %1299 = vmatpush.bf16.msra.mxu0 0
      %1300 = vmatpush.bf16.msra.mxu0 0
      %1301 = vmatpush.bf16.msra.mxu0 0
      %1302 = vmatpush.bf16.msra.mxu0 0
      %1303 = vmatpush.bf16.msra.mxu0 %v1268
      %1304 = vmatmul.bf16.gmra.mxu0 %v1259
      %v1305 = vpop.f32.mrf.mxu0
      %v1306 = vadd.f32 0.0, %v1305
      %v1307 = vpop.f32.mrf.mxu0
      %1308 = vdwg.mxu0
      %v1309 = vadd.f32 %v1247, %v1280
      %v1310 = vadd.f32 %v1248, %v1293
      %v1311 = vadd.f32 %v1249, %v1306
      %1312 = vrot.lane.b32.xlu0 %v1073, 109
      %v1313 = vpop.permute.xlu0 %1312
      %1314 = vrot.lane.b32.xlu0 %v1074, 109
      %v1315 = vpop.permute.xlu0 %1314
      %1316 = vrot.lane.b32.xlu0 %v1075, 109
      %v1317 = vpop.permute.xlu0 %1316
      %v1318 = vsel %vm671, %v1313, %v1315
      %v1319 = vsel %vm671, %v1315, %v1317
      %v1321 = vsel %vm1084, %v1049, 0
      %v1324 = vsel %vm1088, %v1318, 0
      %v1327 = vsel %vm1088, %v1319, 0
      %v1330 = vsel %vm1088, %v1317, 0
      %1332 = vmatpush.bf16.msra.mxu0 0
      %1333 = vmatpush.bf16.msra.mxu0 0
      %1334 = vmatpush.bf16.msra.mxu0 0
      %1335 = vmatpush.bf16.msra.mxu0 0
      %1336 = vmatpush.bf16.msra.mxu0 0
      %1337 = vmatpush.bf16.msra.mxu0 0
      %1338 = vmatpush.bf16.msra.mxu0 0
      %1339 = vmatpush.bf16.msra.mxu0 %v1324
      %1340 = vmatmul.bf16.gmra.mxu0 %v1321
      %v1341 = vpop.f32.mrf.mxu0
      %v1342 = vadd.f32 0.0, %v1341
      %v1343 = vpop.f32.mrf.mxu0
      %1344 = vdwg.mxu0
      %1345 = vmatpush.bf16.msra.mxu0 0
      %1346 = vmatpush.bf16.msra.mxu0 0
      %1347 = vmatpush.bf16.msra.mxu0 0
      %1348 = vmatpush.bf16.msra.mxu0 0
      %1349 = vmatpush.bf16.msra.mxu0 0
      %1350 = vmatpush.bf16.msra.mxu0 0
      %1351 = vmatpush.bf16.msra.mxu0 0
      %1352 = vmatpush.bf16.msra.mxu0 %v1327
      %1353 = vmatmul.bf16.gmra.mxu0 %v1321
      %v1354 = vpop.f32.mrf.mxu0
      %v1355 = vadd.f32 0.0, %v1354
      %v1356 = vpop.f32.mrf.mxu0
      %1357 = vdwg.mxu0
      %1358 = vmatpush.bf16.msra.mxu0 0
      %1359 = vmatpush.bf16.msra.mxu0 0
      %1360 = vmatpush.bf16.msra.mxu0 0
      %1361 = vmatpush.bf16.msra.mxu0 0
      %1362 = vmatpush.bf16.msra.mxu0 0
      %1363 = vmatpush.bf16.msra.mxu0 0
      %1364 = vmatpush.bf16.msra.mxu0 0
      %1365 = vmatpush.bf16.msra.mxu0 %v1330
      %1366 = vmatmul.bf16.gmra.mxu0 %v1321
      %v1367 = vpop.f32.mrf.mxu0
      %v1368 = vadd.f32 0.0, %v1367
      %v1369 = vpop.f32.mrf.mxu0
      %1370 = vdwg.mxu0
      %v1371 = vadd.f32 %v1309, %v1342
      %v1372 = vadd.f32 %v1310, %v1355
      %v1373 = vadd.f32 %v1311, %v1368
      %1374 = vrot.lane.b32.xlu0 %v1073, 108
      %v1375 = vpop.permute.xlu0 %1374
      %1376 = vrot.lane.b32.xlu0 %v1074, 108
      %v1377 = vpop.permute.xlu0 %1376
      %1378 = vrot.lane.b32.xlu0 %v1075, 108
      %v1379 = vpop.permute.xlu0 %1378
      %v1380 = vsel %vm734, %v1375, %v1377
      %v1381 = vsel %vm734, %v1377, %v1379
      %v1383 = vsel %vm1084, %v1051, 0
      %v1386 = vsel %vm1088, %v1380, 0
      %v1389 = vsel %vm1088, %v1381, 0
      %v1392 = vsel %vm1088, %v1379, 0
      %1394 = vmatpush.bf16.msra.mxu0 0
      %1395 = vmatpush.bf16.msra.mxu0 0
      %1396 = vmatpush.bf16.msra.mxu0 0
      %1397 = vmatpush.bf16.msra.mxu0 0
      %1398 = vmatpush.bf16.msra.mxu0 0
      %1399 = vmatpush.bf16.msra.mxu0 0
      %1400 = vmatpush.bf16.msra.mxu0 0
      %1401 = vmatpush.bf16.msra.mxu0 %v1386
      %1402 = vmatmul.bf16.gmra.mxu0 %v1383
      %v1403 = vpop.f32.mrf.mxu0
      %v1404 = vadd.f32 0.0, %v1403
      %v1405 = vpop.f32.mrf.mxu0
      %1406 = vdwg.mxu0
      %1407 = vmatpush.bf16.msra.mxu0 0
      %1408 = vmatpush.bf16.msra.mxu0 0
      %1409 = vmatpush.bf16.msra.mxu0 0
      %1410 = vmatpush.bf16.msra.mxu0 0
      %1411 = vmatpush.bf16.msra.mxu0 0
      %1412 = vmatpush.bf16.msra.mxu0 0
      %1413 = vmatpush.bf16.msra.mxu0 0
      %1414 = vmatpush.bf16.msra.mxu0 %v1389
      %1415 = vmatmul.bf16.gmra.mxu0 %v1383
      %v1416 = vpop.f32.mrf.mxu0
      %v1417 = vadd.f32 0.0, %v1416
      %v1418 = vpop.f32.mrf.mxu0
      %1419 = vdwg.mxu0
      %1420 = vmatpush.bf16.msra.mxu0 0
      %1421 = vmatpush.bf16.msra.mxu0 0
      %1422 = vmatpush.bf16.msra.mxu0 0
      %1423 = vmatpush.bf16.msra.mxu0 0
      %1424 = vmatpush.bf16.msra.mxu0 0
      %1425 = vmatpush.bf16.msra.mxu0 0
      %1426 = vmatpush.bf16.msra.mxu0 0
      %1427 = vmatpush.bf16.msra.mxu0 %v1392
      %1428 = vmatmul.bf16.gmra.mxu0 %v1383
      %v1429 = vpop.f32.mrf.mxu0
      %v1430 = vadd.f32 0.0, %v1429
      %v1431 = vpop.f32.mrf.mxu0
      %1432 = vdwg.mxu0
      %v1433 = vadd.f32 %v1371, %v1404
      %v1434 = vadd.f32 %v1372, %v1417
      %v1435 = vadd.f32 %v1373, %v1430
      %1436 = vrot.lane.b32.xlu0 %v1073, 92
      %v1437 = vpop.permute.xlu0 %1436
      %1438 = vrot.lane.b32.xlu0 %v1074, 92
      %v1439 = vpop.permute.xlu0 %1438
      %1440 = vrot.lane.b32.xlu0 %v1075, 92
      %v1441 = vpop.permute.xlu0 %1440
      %v1442 = vsel %vm797, %v1437, %v1439
      %v1443 = vsel %vm797, %v1439, %v1441
      %v1445 = vsel %vm1084, %v1053, 0
      %v1448 = vsel %vm1088, %v1442, 0
      %v1451 = vsel %vm1088, %v1443, 0
      %v1454 = vsel %vm1088, %v1441, 0
      %1456 = vmatpush.bf16.msra.mxu0 0
      %1457 = vmatpush.bf16.msra.mxu0 0
      %1458 = vmatpush.bf16.msra.mxu0 0
      %1459 = vmatpush.bf16.msra.mxu0 0
      %1460 = vmatpush.bf16.msra.mxu0 0
      %1461 = vmatpush.bf16.msra.mxu0 0
      %1462 = vmatpush.bf16.msra.mxu0 0
      %1463 = vmatpush.bf16.msra.mxu0 %v1448
      %1464 = vmatmul.bf16.gmra.mxu0 %v1445
      %v1465 = vpop.f32.mrf.mxu0
      %v1466 = vadd.f32 0.0, %v1465
      %v1467 = vpop.f32.mrf.mxu0
      %1468 = vdwg.mxu0
      %1469 = vmatpush.bf16.msra.mxu0 0
      %1470 = vmatpush.bf16.msra.mxu0 0
      %1471 = vmatpush.bf16.msra.mxu0 0
      %1472 = vmatpush.bf16.msra.mxu0 0
      %1473 = vmatpush.bf16.msra.mxu0 0
      %1474 = vmatpush.bf16.msra.mxu0 0
      %1475 = vmatpush.bf16.msra.mxu0 0
      %1476 = vmatpush.bf16.msra.mxu0 %v1451
      %1477 = vmatmul.bf16.gmra.mxu0 %v1445
      %v1478 = vpop.f32.mrf.mxu0
      %v1479 = vadd.f32 0.0, %v1478
      %v1480 = vpop.f32.mrf.mxu0
      %1481 = vdwg.mxu0
      %1482 = vmatpush.bf16.msra.mxu0 0
      %1483 = vmatpush.bf16.msra.mxu0 0
      %1484 = vmatpush.bf16.msra.mxu0 0
      %1485 = vmatpush.bf16.msra.mxu0 0
      %1486 = vmatpush.bf16.msra.mxu0 0
      %1487 = vmatpush.bf16.msra.mxu0 0
      %1488 = vmatpush.bf16.msra.mxu0 0
      %1489 = vmatpush.bf16.msra.mxu0 %v1454
      %1490 = vmatmul.bf16.gmra.mxu0 %v1445
      %v1491 = vpop.f32.mrf.mxu0
      %v1492 = vadd.f32 0.0, %v1491
      %v1493 = vpop.f32.mrf.mxu0
      %1494 = vdwg.mxu0
      %v1495 = vadd.f32 %v1433, %v1466
      %v1496 = vadd.f32 %v1434, %v1479
      %v1497 = vadd.f32 %v1435, %v1492
      %1498 = vrot.lane.b32.xlu0 %v1073, 91
      %v1499 = vpop.permute.xlu0 %1498
      %1500 = vrot.lane.b32.xlu0 %v1074, 91
      %v1501 = vpop.permute.xlu0 %1500
      %1502 = vrot.lane.b32.xlu0 %v1075, 91
      %v1503 = vpop.permute.xlu0 %1502
      %v1504 = vsel %vm860, %v1499, %v1501
      %v1505 = vsel %vm860, %v1501, %v1503
      %v1507 = vsel %vm1084, %v1055, 0
      %v1510 = vsel %vm1088, %v1504, 0
      %v1513 = vsel %vm1088, %v1505, 0
      %v1516 = vsel %vm1088, %v1503, 0
      %1518 = vmatpush.bf16.msra.mxu0 0
      %1519 = vmatpush.bf16.msra.mxu0 0
      %1520 = vmatpush.bf16.msra.mxu0 0
      %1521 = vmatpush.bf16.msra.mxu0 0
      %1522 = vmatpush.bf16.msra.mxu0 0
      %1523 = vmatpush.bf16.msra.mxu0 0
      %1524 = vmatpush.bf16.msra.mxu0 0
      %1525 = vmatpush.bf16.msra.mxu0 %v1510
      %1526 = vmatmul.bf16.gmra.mxu0 %v1507
      %v1527 = vpop.f32.mrf.mxu0
      %v1528 = vadd.f32 0.0, %v1527
      %v1529 = vpop.f32.mrf.mxu0
      %1530 = vdwg.mxu0
      %1531 = vmatpush.bf16.msra.mxu0 0
      %1532 = vmatpush.bf16.msra.mxu0 0
      %1533 = vmatpush.bf16.msra.mxu0 0
      %1534 = vmatpush.bf16.msra.mxu0 0
      %1535 = vmatpush.bf16.msra.mxu0 0
      %1536 = vmatpush.bf16.msra.mxu0 0
      %1537 = vmatpush.bf16.msra.mxu0 0
      %1538 = vmatpush.bf16.msra.mxu0 %v1513
      %1539 = vmatmul.bf16.gmra.mxu0 %v1507
      %v1540 = vpop.f32.mrf.mxu0
      %v1541 = vadd.f32 0.0, %v1540
      %v1542 = vpop.f32.mrf.mxu0
      %1543 = vdwg.mxu0
      %1544 = vmatpush.bf16.msra.mxu0 0
      %1545 = vmatpush.bf16.msra.mxu0 0
      %1546 = vmatpush.bf16.msra.mxu0 0
      %1547 = vmatpush.bf16.msra.mxu0 0
      %1548 = vmatpush.bf16.msra.mxu0 0
      %1549 = vmatpush.bf16.msra.mxu0 0
      %1550 = vmatpush.bf16.msra.mxu0 0
      %1551 = vmatpush.bf16.msra.mxu0 %v1516
      %1552 = vmatmul.bf16.gmra.mxu0 %v1507
      %v1553 = vpop.f32.mrf.mxu0
      %v1554 = vadd.f32 0.0, %v1553
      %v1555 = vpop.f32.mrf.mxu0
      %1556 = vdwg.mxu0
      %v1557 = vadd.f32 %v1495, %v1528
      %v1558 = vadd.f32 %v1496, %v1541
      %v1559 = vadd.f32 %v1497, %v1554
      %1560 = vrot.lane.b32.xlu0 %v1073, 90
      %v1561 = vpop.permute.xlu0 %1560
      %1562 = vrot.lane.b32.xlu0 %v1074, 90
      %v1563 = vpop.permute.xlu0 %1562
      %1564 = vrot.lane.b32.xlu0 %v1075, 90
      %v1565 = vpop.permute.xlu0 %1564
      %v1566 = vsel %vm923, %v1561, %v1563
      %v1567 = vsel %vm923, %v1563, %v1565
      %v1569 = vsel %vm1084, %v1057, 0
      %v1572 = vsel %vm1088, %v1566, 0
      %v1575 = vsel %vm1088, %v1567, 0
      %v1578 = vsel %vm1088, %v1565, 0
      %1580 = vmatpush.bf16.msra.mxu0 0
      %1581 = vmatpush.bf16.msra.mxu0 0
      %1582 = vmatpush.bf16.msra.mxu0 0
      %1583 = vmatpush.bf16.msra.mxu0 0
      %1584 = vmatpush.bf16.msra.mxu0 0
      %1585 = vmatpush.bf16.msra.mxu0 0
      %1586 = vmatpush.bf16.msra.mxu0 0
      %1587 = vmatpush.bf16.msra.mxu0 %v1572
      %1588 = vmatmul.bf16.gmra.mxu0 %v1569
      %v1589 = vpop.f32.mrf.mxu0
      %v1590 = vadd.f32 0.0, %v1589
      %v1591 = vpop.f32.mrf.mxu0
      %1592 = vdwg.mxu0
      %1593 = vmatpush.bf16.msra.mxu0 0
      %1594 = vmatpush.bf16.msra.mxu0 0
      %1595 = vmatpush.bf16.msra.mxu0 0
      %1596 = vmatpush.bf16.msra.mxu0 0
      %1597 = vmatpush.bf16.msra.mxu0 0
      %1598 = vmatpush.bf16.msra.mxu0 0
      %1599 = vmatpush.bf16.msra.mxu0 0
      %1600 = vmatpush.bf16.msra.mxu0 %v1575
      %1601 = vmatmul.bf16.gmra.mxu0 %v1569
      %v1602 = vpop.f32.mrf.mxu0
      %v1603 = vadd.f32 0.0, %v1602
      %v1604 = vpop.f32.mrf.mxu0
      %1605 = vdwg.mxu0
      %1606 = vmatpush.bf16.msra.mxu0 0
      %1607 = vmatpush.bf16.msra.mxu0 0
      %1608 = vmatpush.bf16.msra.mxu0 0
      %1609 = vmatpush.bf16.msra.mxu0 0
      %1610 = vmatpush.bf16.msra.mxu0 0
      %1611 = vmatpush.bf16.msra.mxu0 0
      %1612 = vmatpush.bf16.msra.mxu0 0
      %1613 = vmatpush.bf16.msra.mxu0 %v1578
      %1614 = vmatmul.bf16.gmra.mxu0 %v1569
      %v1615 = vpop.f32.mrf.mxu0
      %v1616 = vadd.f32 0.0, %v1615
      %v1617 = vpop.f32.mrf.mxu0
      %1618 = vdwg.mxu0
      %v1619 = vadd.f32 %v1557, %v1590
      %v1620 = vadd.f32 %v1558, %v1603
      %v1621 = vadd.f32 %v1559, %v1616
      %1623 = vset.pattern.permute.xlu0 1
      %1624 = vperm.xlu0 %1623, %v1058
      %v1625 = vpop.permute.xlu0 %1624
      %v1627 = vadd.f32 %v1619, %v1625
      %v1628 = vadd.f32 %v1620, %v1625
      %v1629 = vadd.f32 %v1621, %v1625
      %vm1630 = vcmp.gt.f32.partialorder %v1627, 0.0
      %vm1631 = vcmp.gt.f32.partialorder %v1628, 0.0
      %vm1632 = vcmp.gt.f32.partialorder %v1629, 0.0
      %v1633 = vmul.f32 %v1627, 0.02
      %v1634 = vmul.f32 %v1628, 0.02
      %v1635 = vmul.f32 %v1629, 0.02
      %v1636 = vsel %vm1630, %v1627, %v1633
      %v1637 = vsel %vm1631, %v1628, %v1634
      %v1638 = vsel %vm1632, %v1629, %v1635
      %v1639 = vmul.f32 %v1636, %v998
      %v1640 = vmul.f32 %v1637, %v999
      %v1641 = vmul.f32 %v1638, %v1000
      %v1642 = vpack.c.bf16 %v1640, %v1639
      %v1643 = vpack.c.bf16 %v1641, %v1641
      %v1646 = vrot.slane %v1642, 6
      %v1647 = vrot.slane %v1643, 6
      %v1648 = vrot.slane %v1646, 4
      %v1649 = vrot.slane %v1647, 4
      %1650 = vrot.lane.b32.xlu0 %v1646, 19
      %v1651 = vpop.permute.xlu0 %1650
      %1652 = vrot.lane.b32.xlu0 %v1647, 19
      %v1653 = vpop.permute.xlu0 %1652
      %1654 = vrot.lane.b32.xlu0 %v1648, 19
      %v1655 = vpop.permute.xlu0 %1654
      %1656 = vrot.lane.b32.xlu0 %v1649, 19
      %v1657 = vpop.permute.xlu0 %1656
      %v1658 = vrot.slane %v1651, 4
      %v1659 = vrot.slane %v1655, 4
      %v1660 = vsel %vm386, %v1658, %v1651
      %v1661 = vsel %vm386, %v1658, %v1653
      %v1662 = vsel %vm386, %v1659, %v1655
      %v1663 = vsel %vm386, %v1659, %v1657
      %1668 = vst.msk [vmem:[#allocation2 + $0xc] sm:$0xcc] %vm1035, %v1660
      %1669 = vst.msk [vmem:[#allocation2 + $0x14] sm:$0xc] %vm1037, %v1661
      %1670 = vst.msk [vmem:[#allocation2 + $0x18] sm:$0x33] %vm393, %v1662
      %1671 = vst.msk [vmem:[#allocation2 + $0x20] sm:$0x3] %vm395, %v1663
      %v1672 = vld [vmem:[%s3] sm:$0xf]
      %s1673 = scalar_lea.vmem %s3, 4
      %v1674 = vld [vmem:[%s1673] sm:$0xf]
      %s1675 = scalar_lea.vmem %s3, 8
      %v1676 = vld [vmem:[%s1675] sm:$0xf]
      %s1677 = scalar_lea.vmem %s3, 12
      %v1678 = vld [vmem:[%s1677] sm:$0xf]
      %s1679 = scalar_lea.vmem %s3, 16
      %v1680 = vld [vmem:[%s1679] sm:$0xf]
      %s1681 = scalar_lea.vmem %s3, 20
      %v1682 = vld [vmem:[%s1681] sm:$0xf]
      %s1683 = scalar_lea.vmem %s3, 24
      %v1684 = vld [vmem:[%s1683] sm:$0xf]
      %s1685 = scalar_lea.vmem %s3, 28
      %v1686 = vld [vmem:[%s1685] sm:$0xf]
      %s1687 = scalar_lea.vmem %s3, 32
      %v1688 = vld [vmem:[%s1687] sm:$0xf]
      %v1689 = vld [vmem:[%s6] sm:$0xff]
      %v1690 = vld [vmem:[#allocation2] sm:$0xff]
      %v1691 = vld [vmem:[#allocation2 + $0x8] sm:$0xf]
      %v1692 = vld [vmem:[#allocation2 + $0xc] sm:$0xff]
      %v1693 = vld [vmem:[#allocation2 + $0x14] sm:$0xf]
      %v1694 = vld [vmem:[#allocation2 + $0x18] sm:$0x33]
      %v1695 = vld [vmem:[#allocation2 + $0x20] sm:$0x3]
      %v1702 = vunpack.c.l.b16 %v1690
      %v1703 = vunpack.c.h.b16 %v1690
      %v1704 = vunpack.c.l.b16 %v1691
      %v1705 = vunpack.c.l.b16 %v1692
      %v1706 = vunpack.c.h.b16 %v1692
      %v1707 = vunpack.c.l.b16 %v1693
      %v1708 = vunpack.c.l.b16 %v1694
      %v1709 = vunpack.c.h.b16 %v1694
      %v1710 = vunpack.c.l.b16 %v1695
      %v1711 = vpack.c.b16 %v1705, %v1702
      %v1712 = vpack.c.b16 %v1706, %v1703
      %v1713 = vpack.c.b16 %v1707, %v1704
      %v1714 = vpack.c.b16 %v1708, %v1708
      %v1715 = vpack.c.b16 %v1709, %v1709
      %v1716 = vpack.c.b16 %v1710, %v1710
      %1717 = vrot.lane.b32.xlu0 %v1711, 127
      %v1718 = vpop.permute.xlu0 %1717
      %1719 = vrot.lane.b32.xlu0 %v1712, 127
      %v1720 = vpop.permute.xlu0 %1719
      %1721 = vrot.lane.b32.xlu0 %v1713, 127
      %v1722 = vpop.permute.xlu0 %1721
      %1723 = vrot.lane.b32.xlu0 %v1714, 127
      %v1724 = vpop.permute.xlu0 %1723
      %1725 = vrot.lane.b32.xlu0 %v1715, 127
      %v1726 = vpop.permute.xlu0 %1725
      %1727 = vrot.lane.b32.xlu0 %v1716, 127
      %v1728 = vpop.permute.xlu0 %1727
      %v1729 = vsel %vm432, %v1718, %v1720
      %v1730 = vsel %vm432, %v1720, %v1722
      %v1731 = vsel %vm432, %v1724, %v1726
      %v1732 = vsel %vm432, %v1726, %v1728
      %vm1736 = vcmask 162816
      %v1738 = vsel %vm1736, %v1674, 0
      %v1741 = vsel %vm439, %v1731, 0
      %v1744 = vsel %vm439, %v1732, 0
      %v1747 = vsel %vm439, %v1728, 0
      %1749 = vmatpush.bf16.msra.mxu0 0
      %1750 = vmatpush.bf16.msra.mxu0 0
      %1751 = vmatpush.bf16.msra.mxu0 0
      %1752 = vmatpush.bf16.msra.mxu0 0
      %1753 = vmatpush.bf16.msra.mxu0 0
      %1754 = vmatpush.bf16.msra.mxu0 0
      %1755 = vmatpush.bf16.msra.mxu0 %v1741
      %1756 = vmatpush.bf16.msra.mxu0 %v1729
      %1757 = vmatmul.bf16.gmra.mxu0 %v1738
      %v1758 = vpop.f32.mrf.mxu0
      %v1759 = vadd.f32 0.0, %v1758
      %v1760 = vpop.f32.mrf.mxu0
      %1761 = vdwg.mxu0
      %1762 = vmatpush.bf16.msra.mxu0 0
      %1763 = vmatpush.bf16.msra.mxu0 0
      %1764 = vmatpush.bf16.msra.mxu0 0
      %1765 = vmatpush.bf16.msra.mxu0 0
      %1766 = vmatpush.bf16.msra.mxu0 0
      %1767 = vmatpush.bf16.msra.mxu0 0
      %1768 = vmatpush.bf16.msra.mxu0 %v1744
      %1769 = vmatpush.bf16.msra.mxu0 %v1730
      %1770 = vmatmul.bf16.gmra.mxu0 %v1738
      %v1771 = vpop.f32.mrf.mxu0
      %v1772 = vadd.f32 0.0, %v1771
      %v1773 = vpop.f32.mrf.mxu0
      %1774 = vdwg.mxu0
      %1775 = vmatpush.bf16.msra.mxu0 0
      %1776 = vmatpush.bf16.msra.mxu0 0
      %1777 = vmatpush.bf16.msra.mxu0 0
      %1778 = vmatpush.bf16.msra.mxu0 0
      %1779 = vmatpush.bf16.msra.mxu0 0
      %1780 = vmatpush.bf16.msra.mxu0 0
      %1781 = vmatpush.bf16.msra.mxu0 %v1747
      %1782 = vmatpush.bf16.msra.mxu0 %v1722
      %1783 = vmatmul.bf16.gmra.mxu0 %v1738
      %v1784 = vpop.f32.mrf.mxu0
      %v1785 = vadd.f32 0.0, %v1784
      %v1786 = vpop.f32.mrf.mxu0
      %1787 = vdwg.mxu0
      %v1792 = vsel %vm1736, %v1672, 0
      %v1795 = vsel %vm439, %v1714, 0
      %v1798 = vsel %vm439, %v1715, 0
      %v1801 = vsel %vm439, %v1716, 0
      %1803 = vmatpush.bf16.msra.mxu0 0
      %1804 = vmatpush.bf16.msra.mxu0 0
      %1805 = vmatpush.bf16.msra.mxu0 0
      %1806 = vmatpush.bf16.msra.mxu0 0
      %1807 = vmatpush.bf16.msra.mxu0 0
      %1808 = vmatpush.bf16.msra.mxu0 0
      %1809 = vmatpush.bf16.msra.mxu0 %v1795
      %1810 = vmatpush.bf16.msra.mxu0 %v1711
      %1811 = vmatmul.bf16.gmra.mxu0 %v1792
      %v1812 = vpop.f32.mrf.mxu0
      %v1813 = vadd.f32 %v1759, %v1812
      %v1814 = vpop.f32.mrf.mxu0
      %1815 = vdwg.mxu0
      %1816 = vmatpush.bf16.msra.mxu0 0
      %1817 = vmatpush.bf16.msra.mxu0 0
      %1818 = vmatpush.bf16.msra.mxu0 0
      %1819 = vmatpush.bf16.msra.mxu0 0
      %1820 = vmatpush.bf16.msra.mxu0 0
      %1821 = vmatpush.bf16.msra.mxu0 0
      %1822 = vmatpush.bf16.msra.mxu0 %v1798
      %1823 = vmatpush.bf16.msra.mxu0 %v1712
      %1824 = vmatmul.bf16.gmra.mxu0 %v1792
      %v1825 = vpop.f32.mrf.mxu0
      %v1826 = vadd.f32 %v1772, %v1825
      %v1827 = vpop.f32.mrf.mxu0
      %1828 = vdwg.mxu0
      %1829 = vmatpush.bf16.msra.mxu0 0
      %1830 = vmatpush.bf16.msra.mxu0 0
      %1831 = vmatpush.bf16.msra.mxu0 0
      %1832 = vmatpush.bf16.msra.mxu0 0
      %1833 = vmatpush.bf16.msra.mxu0 0
      %1834 = vmatpush.bf16.msra.mxu0 0
      %1835 = vmatpush.bf16.msra.mxu0 %v1801
      %1836 = vmatpush.bf16.msra.mxu0 %v1713
      %1837 = vmatmul.bf16.gmra.mxu0 %v1792
      %v1838 = vpop.f32.mrf.mxu0
      %v1839 = vadd.f32 %v1785, %v1838
      %v1840 = vpop.f32.mrf.mxu0
      %1841 = vdwg.mxu0
      %1842 = vrot.lane.b32.xlu0 %v1711, 126
      %v1843 = vpop.permute.xlu0 %1842
      %1844 = vrot.lane.b32.xlu0 %v1712, 126
      %v1845 = vpop.permute.xlu0 %1844
      %1846 = vrot.lane.b32.xlu0 %v1713, 126
      %v1847 = vpop.permute.xlu0 %1846
      %1848 = vrot.lane.b32.xlu0 %v1714, 126
      %v1849 = vpop.permute.xlu0 %1848
      %1850 = vrot.lane.b32.xlu0 %v1715, 126
      %v1851 = vpop.permute.xlu0 %1850
      %1852 = vrot.lane.b32.xlu0 %v1716, 126
      %v1853 = vpop.permute.xlu0 %1852
      %v1854 = vsel %vm545, %v1843, %v1845
      %v1855 = vsel %vm545, %v1845, %v1847
      %v1856 = vsel %vm545, %v1849, %v1851
      %v1857 = vsel %vm545, %v1851, %v1853
      %v1862 = vsel %vm1736, %v1676, 0
      %v1865 = vsel %vm439, %v1856, 0
      %v1868 = vsel %vm439, %v1857, 0
      %v1871 = vsel %vm439, %v1853, 0
      %1873 = vmatpush.bf16.msra.mxu0 0
      %1874 = vmatpush.bf16.msra.mxu0 0
      %1875 = vmatpush.bf16.msra.mxu0 0
      %1876 = vmatpush.bf16.msra.mxu0 0
      %1877 = vmatpush.bf16.msra.mxu0 0
      %1878 = vmatpush.bf16.msra.mxu0 0
      %1879 = vmatpush.bf16.msra.mxu0 %v1865
      %1880 = vmatpush.bf16.msra.mxu0 %v1854
      %1881 = vmatmul.bf16.gmra.mxu0 %v1862
      %v1882 = vpop.f32.mrf.mxu0
      %v1883 = vadd.f32 0.0, %v1882
      %v1884 = vpop.f32.mrf.mxu0
      %1885 = vdwg.mxu0
      %1886 = vmatpush.bf16.msra.mxu0 0
      %1887 = vmatpush.bf16.msra.mxu0 0
      %1888 = vmatpush.bf16.msra.mxu0 0
      %1889 = vmatpush.bf16.msra.mxu0 0
      %1890 = vmatpush.bf16.msra.mxu0 0
      %1891 = vmatpush.bf16.msra.mxu0 0
      %1892 = vmatpush.bf16.msra.mxu0 %v1868
      %1893 = vmatpush.bf16.msra.mxu0 %v1855
      %1894 = vmatmul.bf16.gmra.mxu0 %v1862
      %v1895 = vpop.f32.mrf.mxu0
      %v1896 = vadd.f32 0.0, %v1895
      %v1897 = vpop.f32.mrf.mxu0
      %1898 = vdwg.mxu0
      %1899 = vmatpush.bf16.msra.mxu0 0
      %1900 = vmatpush.bf16.msra.mxu0 0
      %1901 = vmatpush.bf16.msra.mxu0 0
      %1902 = vmatpush.bf16.msra.mxu0 0
      %1903 = vmatpush.bf16.msra.mxu0 0
      %1904 = vmatpush.bf16.msra.mxu0 0
      %1905 = vmatpush.bf16.msra.mxu0 %v1871
      %1906 = vmatpush.bf16.msra.mxu0 %v1847
      %1907 = vmatmul.bf16.gmra.mxu0 %v1862
      %v1908 = vpop.f32.mrf.mxu0
      %v1909 = vadd.f32 0.0, %v1908
      %v1910 = vpop.f32.mrf.mxu0
      %1911 = vdwg.mxu0
      %v1912 = vadd.f32 %v1813, %v1883
      %v1913 = vadd.f32 %v1826, %v1896
      %v1914 = vadd.f32 %v1839, %v1909
      %1915 = vrot.lane.b32.xlu0 %v1711, 110
      %v1916 = vpop.permute.xlu0 %1915
      %1917 = vrot.lane.b32.xlu0 %v1712, 110
      %v1918 = vpop.permute.xlu0 %1917
      %1919 = vrot.lane.b32.xlu0 %v1713, 110
      %v1920 = vpop.permute.xlu0 %1919
      %1921 = vrot.lane.b32.xlu0 %v1714, 110
      %v1922 = vpop.permute.xlu0 %1921
      %1923 = vrot.lane.b32.xlu0 %v1715, 110
      %v1924 = vpop.permute.xlu0 %1923
      %1925 = vrot.lane.b32.xlu0 %v1716, 110
      %v1926 = vpop.permute.xlu0 %1925
      %v1927 = vsel %vm608, %v1916, %v1918
      %v1928 = vsel %vm608, %v1918, %v1920
      %v1929 = vsel %vm608, %v1922, %v1924
      %v1930 = vsel %vm608, %v1924, %v1926
      %v1935 = vsel %vm1736, %v1678, 0
      %v1938 = vsel %vm439, %v1929, 0
      %v1941 = vsel %vm439, %v1930, 0
      %v1944 = vsel %vm439, %v1926, 0
      %1946 = vmatpush.bf16.msra.mxu0 0
      %1947 = vmatpush.bf16.msra.mxu0 0
      %1948 = vmatpush.bf16.msra.mxu0 0
      %1949 = vmatpush.bf16.msra.mxu0 0
      %1950 = vmatpush.bf16.msra.mxu0 0
      %1951 = vmatpush.bf16.msra.mxu0 0
      %1952 = vmatpush.bf16.msra.mxu0 %v1938
      %1953 = vmatpush.bf16.msra.mxu0 %v1927
      %1954 = vmatmul.bf16.gmra.mxu0 %v1935
      %v1955 = vpop.f32.mrf.mxu0
      %v1956 = vadd.f32 0.0, %v1955
      %v1957 = vpop.f32.mrf.mxu0
      %1958 = vdwg.mxu0
      %1959 = vmatpush.bf16.msra.mxu0 0
      %1960 = vmatpush.bf16.msra.mxu0 0
      %1961 = vmatpush.bf16.msra.mxu0 0
      %1962 = vmatpush.bf16.msra.mxu0 0
      %1963 = vmatpush.bf16.msra.mxu0 0
      %1964 = vmatpush.bf16.msra.mxu0 0
      %1965 = vmatpush.bf16.msra.mxu0 %v1941
      %1966 = vmatpush.bf16.msra.mxu0 %v1928
      %1967 = vmatmul.bf16.gmra.mxu0 %v1935
      %v1968 = vpop.f32.mrf.mxu0
      %v1969 = vadd.f32 0.0, %v1968
      %v1970 = vpop.f32.mrf.mxu0
      %1971 = vdwg.mxu0
      %1972 = vmatpush.bf16.msra.mxu0 0
      %1973 = vmatpush.bf16.msra.mxu0 0
      %1974 = vmatpush.bf16.msra.mxu0 0
      %1975 = vmatpush.bf16.msra.mxu0 0
      %1976 = vmatpush.bf16.msra.mxu0 0
      %1977 = vmatpush.bf16.msra.mxu0 0
      %1978 = vmatpush.bf16.msra.mxu0 %v1944
      %1979 = vmatpush.bf16.msra.mxu0 %v1920
      %1980 = vmatmul.bf16.gmra.mxu0 %v1935
      %v1981 = vpop.f32.mrf.mxu0
      %v1982 = vadd.f32 0.0, %v1981
      %v1983 = vpop.f32.mrf.mxu0
      %1984 = vdwg.mxu0
      %v1985 = vadd.f32 %v1912, %v1956
      %v1986 = vadd.f32 %v1913, %v1969
      %v1987 = vadd.f32 %v1914, %v1982
      %1988 = vrot.lane.b32.xlu0 %v1711, 109
      %v1989 = vpop.permute.xlu0 %1988
      %1990 = vrot.lane.b32.xlu0 %v1712, 109
      %v1991 = vpop.permute.xlu0 %1990
      %1992 = vrot.lane.b32.xlu0 %v1713, 109
      %v1993 = vpop.permute.xlu0 %1992
      %1994 = vrot.lane.b32.xlu0 %v1714, 109
      %v1995 = vpop.permute.xlu0 %1994
      %1996 = vrot.lane.b32.xlu0 %v1715, 109
      %v1997 = vpop.permute.xlu0 %1996
      %1998 = vrot.lane.b32.xlu0 %v1716, 109
      %v1999 = vpop.permute.xlu0 %1998
      %v2000 = vsel %vm671, %v1989, %v1991
      %v2001 = vsel %vm671, %v1991, %v1993
      %v2002 = vsel %vm671, %v1995, %v1997
      %v2003 = vsel %vm671, %v1997, %v1999
      %v2008 = vsel %vm1736, %v1680, 0
      %v2011 = vsel %vm439, %v2002, 0
      %v2014 = vsel %vm439, %v2003, 0
      %v2017 = vsel %vm439, %v1999, 0
      %2019 = vmatpush.bf16.msra.mxu0 0
      %2020 = vmatpush.bf16.msra.mxu0 0
      %2021 = vmatpush.bf16.msra.mxu0 0
      %2022 = vmatpush.bf16.msra.mxu0 0
      %2023 = vmatpush.bf16.msra.mxu0 0
      %2024 = vmatpush.bf16.msra.mxu0 0
      %2025 = vmatpush.bf16.msra.mxu0 %v2011
      %2026 = vmatpush.bf16.msra.mxu0 %v2000
      %2027 = vmatmul.bf16.gmra.mxu0 %v2008
      %v2028 = vpop.f32.mrf.mxu0
      %v2029 = vadd.f32 0.0, %v2028
      %v2030 = vpop.f32.mrf.mxu0
      %2031 = vdwg.mxu0
      %2032 = vmatpush.bf16.msra.mxu0 0
      %2033 = vmatpush.bf16.msra.mxu0 0
      %2034 = vmatpush.bf16.msra.mxu0 0
      %2035 = vmatpush.bf16.msra.mxu0 0
      %2036 = vmatpush.bf16.msra.mxu0 0
      %2037 = vmatpush.bf16.msra.mxu0 0
      %2038 = vmatpush.bf16.msra.mxu0 %v2014
      %2039 = vmatpush.bf16.msra.mxu0 %v2001
      %2040 = vmatmul.bf16.gmra.mxu0 %v2008
      %v2041 = vpop.f32.mrf.mxu0
      %v2042 = vadd.f32 0.0, %v2041
      %v2043 = vpop.f32.mrf.mxu0
      %2044 = vdwg.mxu0
      %2045 = vmatpush.bf16.msra.mxu0 0
      %2046 = vmatpush.bf16.msra.mxu0 0
      %2047 = vmatpush.bf16.msra.mxu0 0
      %2048 = vmatpush.bf16.msra.mxu0 0
      %2049 = vmatpush.bf16.msra.mxu0 0
      %2050 = vmatpush.bf16.msra.mxu0 0
      %2051 = vmatpush.bf16.msra.mxu0 %v2017
      %2052 = vmatpush.bf16.msra.mxu0 %v1993
      %2053 = vmatmul.bf16.gmra.mxu0 %v2008
      %v2054 = vpop.f32.mrf.mxu0
      %v2055 = vadd.f32 0.0, %v2054
      %v2056 = vpop.f32.mrf.mxu0
      %2057 = vdwg.mxu0
      %v2058 = vadd.f32 %v1985, %v2029
      %v2059 = vadd.f32 %v1986, %v2042
      %v2060 = vadd.f32 %v1987, %v2055
      %2061 = vrot.lane.b32.xlu0 %v1711, 108
      %v2062 = vpop.permute.xlu0 %2061
      %2063 = vrot.lane.b32.xlu0 %v1712, 108
      %v2064 = vpop.permute.xlu0 %2063
      %2065 = vrot.lane.b32.xlu0 %v1713, 108
      %v2066 = vpop.permute.xlu0 %2065
      %2067 = vrot.lane.b32.xlu0 %v1714, 108
      %v2068 = vpop.permute.xlu0 %2067
      %2069 = vrot.lane.b32.xlu0 %v1715, 108
      %v2070 = vpop.permute.xlu0 %2069
      %2071 = vrot.lane.b32.xlu0 %v1716, 108
      %v2072 = vpop.permute.xlu0 %2071
      %v2073 = vsel %vm734, %v2062, %v2064
      %v2074 = vsel %vm734, %v2064, %v2066
      %v2075 = vsel %vm734, %v2068, %v2070
      %v2076 = vsel %vm734, %v2070, %v2072
      %v2081 = vsel %vm1736, %v1682, 0
      %v2084 = vsel %vm439, %v2075, 0
      %v2087 = vsel %vm439, %v2076, 0
      %v2090 = vsel %vm439, %v2072, 0
      %2092 = vmatpush.bf16.msra.mxu0 0
      %2093 = vmatpush.bf16.msra.mxu0 0
      %2094 = vmatpush.bf16.msra.mxu0 0
      %2095 = vmatpush.bf16.msra.mxu0 0
      %2096 = vmatpush.bf16.msra.mxu0 0
      %2097 = vmatpush.bf16.msra.mxu0 0
      %2098 = vmatpush.bf16.msra.mxu0 %v2084
      %2099 = vmatpush.bf16.msra.mxu0 %v2073
      %2100 = vmatmul.bf16.gmra.mxu0 %v2081
      %v2101 = vpop.f32.mrf.mxu0
      %v2102 = vadd.f32 0.0, %v2101
      %v2103 = vpop.f32.mrf.mxu0
      %2104 = vdwg.mxu0
      %2105 = vmatpush.bf16.msra.mxu0 0
      %2106 = vmatpush.bf16.msra.mxu0 0
      %2107 = vmatpush.bf16.msra.mxu0 0
      %2108 = vmatpush.bf16.msra.mxu0 0
      %2109 = vmatpush.bf16.msra.mxu0 0
      %2110 = vmatpush.bf16.msra.mxu0 0
      %2111 = vmatpush.bf16.msra.mxu0 %v2087
      %2112 = vmatpush.bf16.msra.mxu0 %v2074
      %2113 = vmatmul.bf16.gmra.mxu0 %v2081
      %v2114 = vpop.f32.mrf.mxu0
      %v2115 = vadd.f32 0.0, %v2114
      %v2116 = vpop.f32.mrf.mxu0
      %2117 = vdwg.mxu0
      %2118 = vmatpush.bf16.msra.mxu0 0
      %2119 = vmatpush.bf16.msra.mxu0 0
      %2120 = vmatpush.bf16.msra.mxu0 0
      %2121 = vmatpush.bf16.msra.mxu0 0
      %2122 = vmatpush.bf16.msra.mxu0 0
      %2123 = vmatpush.bf16.msra.mxu0 0
      %2124 = vmatpush.bf16.msra.mxu0 %v2090
      %2125 = vmatpush.bf16.msra.mxu0 %v2066
      %2126 = vmatmul.bf16.gmra.mxu0 %v2081
      %v2127 = vpop.f32.mrf.mxu0
      %v2128 = vadd.f32 0.0, %v2127
      %v2129 = vpop.f32.mrf.mxu0
      %2130 = vdwg.mxu0
      %v2131 = vadd.f32 %v2058, %v2102
      %v2132 = vadd.f32 %v2059, %v2115
      %v2133 = vadd.f32 %v2060, %v2128
      %2134 = vrot.lane.b32.xlu0 %v1711, 92
      %v2135 = vpop.permute.xlu0 %2134
      %2136 = vrot.lane.b32.xlu0 %v1712, 92
      %v2137 = vpop.permute.xlu0 %2136
      %2138 = vrot.lane.b32.xlu0 %v1713, 92
      %v2139 = vpop.permute.xlu0 %2138
      %2140 = vrot.lane.b32.xlu0 %v1714, 92
      %v2141 = vpop.permute.xlu0 %2140
      %2142 = vrot.lane.b32.xlu0 %v1715, 92
      %v2143 = vpop.permute.xlu0 %2142
      %2144 = vrot.lane.b32.xlu0 %v1716, 92
      %v2145 = vpop.permute.xlu0 %2144
      %v2146 = vsel %vm797, %v2135, %v2137
      %v2147 = vsel %vm797, %v2137, %v2139
      %v2148 = vsel %vm797, %v2141, %v2143
      %v2149 = vsel %vm797, %v2143, %v2145
      %v2154 = vsel %vm1736, %v1684, 0
      %v2157 = vsel %vm439, %v2148, 0
      %v2160 = vsel %vm439, %v2149, 0
      %v2163 = vsel %vm439, %v2145, 0
      %2165 = vmatpush.bf16.msra.mxu0 0
      %2166 = vmatpush.bf16.msra.mxu0 0
      %2167 = vmatpush.bf16.msra.mxu0 0
      %2168 = vmatpush.bf16.msra.mxu0 0
      %2169 = vmatpush.bf16.msra.mxu0 0
      %2170 = vmatpush.bf16.msra.mxu0 0
      %2171 = vmatpush.bf16.msra.mxu0 %v2157
      %2172 = vmatpush.bf16.msra.mxu0 %v2146
      %2173 = vmatmul.bf16.gmra.mxu0 %v2154
      %v2174 = vpop.f32.mrf.mxu0
      %v2175 = vadd.f32 0.0, %v2174
      %v2176 = vpop.f32.mrf.mxu0
      %2177 = vdwg.mxu0
      %2178 = vmatpush.bf16.msra.mxu0 0
      %2179 = vmatpush.bf16.msra.mxu0 0
      %2180 = vmatpush.bf16.msra.mxu0 0
      %2181 = vmatpush.bf16.msra.mxu0 0
      %2182 = vmatpush.bf16.msra.mxu0 0
      %2183 = vmatpush.bf16.msra.mxu0 0
      %2184 = vmatpush.bf16.msra.mxu0 %v2160
      %2185 = vmatpush.bf16.msra.mxu0 %v2147
      %2186 = vmatmul.bf16.gmra.mxu0 %v2154
      %v2187 = vpop.f32.mrf.mxu0
      %v2188 = vadd.f32 0.0, %v2187
      %v2189 = vpop.f32.mrf.mxu0
      %2190 = vdwg.mxu0
      %2191 = vmatpush.bf16.msra.mxu0 0
      %2192 = vmatpush.bf16.msra.mxu0 0
      %2193 = vmatpush.bf16.msra.mxu0 0
      %2194 = vmatpush.bf16.msra.mxu0 0
      %2195 = vmatpush.bf16.msra.mxu0 0
      %2196 = vmatpush.bf16.msra.mxu0 0
      %2197 = vmatpush.bf16.msra.mxu0 %v2163
      %2198 = vmatpush.bf16.msra.mxu0 %v2139
      %2199 = vmatmul.bf16.gmra.mxu0 %v2154
      %v2200 = vpop.f32.mrf.mxu0
      %v2201 = vadd.f32 0.0, %v2200
      %v2202 = vpop.f32.mrf.mxu0
      %2203 = vdwg.mxu0
      %v2204 = vadd.f32 %v2131, %v2175
      %v2205 = vadd.f32 %v2132, %v2188
      %v2206 = vadd.f32 %v2133, %v2201
      %2207 = vrot.lane.b32.xlu0 %v1711, 91
      %v2208 = vpop.permute.xlu0 %2207
      %2209 = vrot.lane.b32.xlu0 %v1712, 91
      %v2210 = vpop.permute.xlu0 %2209
      %2211 = vrot.lane.b32.xlu0 %v1713, 91
      %v2212 = vpop.permute.xlu0 %2211
      %2213 = vrot.lane.b32.xlu0 %v1714, 91
      %v2214 = vpop.permute.xlu0 %2213
      %2215 = vrot.lane.b32.xlu0 %v1715, 91
      %v2216 = vpop.permute.xlu0 %2215
      %2217 = vrot.lane.b32.xlu0 %v1716, 91
      %v2218 = vpop.permute.xlu0 %2217
      %v2219 = vsel %vm860, %v2208, %v2210
      %v2220 = vsel %vm860, %v2210, %v2212
      %v2221 = vsel %vm860, %v2214, %v2216
      %v2222 = vsel %vm860, %v2216, %v2218
      %v2227 = vsel %vm1736, %v1686, 0
      %v2230 = vsel %vm439, %v2221, 0
      %v2233 = vsel %vm439, %v2222, 0
      %v2236 = vsel %vm439, %v2218, 0
      %2238 = vmatpush.bf16.msra.mxu0 0
      %2239 = vmatpush.bf16.msra.mxu0 0
      %2240 = vmatpush.bf16.msra.mxu0 0
      %2241 = vmatpush.bf16.msra.mxu0 0
      %2242 = vmatpush.bf16.msra.mxu0 0
      %2243 = vmatpush.bf16.msra.mxu0 0
      %2244 = vmatpush.bf16.msra.mxu0 %v2230
      %2245 = vmatpush.bf16.msra.mxu0 %v2219
      %2246 = vmatmul.bf16.gmra.mxu0 %v2227
      %v2247 = vpop.f32.mrf.mxu0
      %v2248 = vadd.f32 0.0, %v2247
      %v2249 = vpop.f32.mrf.mxu0
      %2250 = vdwg.mxu0
      %2251 = vmatpush.bf16.msra.mxu0 0
      %2252 = vmatpush.bf16.msra.mxu0 0
      %2253 = vmatpush.bf16.msra.mxu0 0
      %2254 = vmatpush.bf16.msra.mxu0 0
      %2255 = vmatpush.bf16.msra.mxu0 0
      %2256 = vmatpush.bf16.msra.mxu0 0
      %2257 = vmatpush.bf16.msra.mxu0 %v2233
      %2258 = vmatpush.bf16.msra.mxu0 %v2220
      %2259 = vmatmul.bf16.gmra.mxu0 %v2227
      %v2260 = vpop.f32.mrf.mxu0
      %v2261 = vadd.f32 0.0, %v2260
      %v2262 = vpop.f32.mrf.mxu0
      %2263 = vdwg.mxu0
      %2264 = vmatpush.bf16.msra.mxu0 0
      %2265 = vmatpush.bf16.msra.mxu0 0
      %2266 = vmatpush.bf16.msra.mxu0 0
      %2267 = vmatpush.bf16.msra.mxu0 0
      %2268 = vmatpush.bf16.msra.mxu0 0
      %2269 = vmatpush.bf16.msra.mxu0 0
      %2270 = vmatpush.bf16.msra.mxu0 %v2236
      %2271 = vmatpush.bf16.msra.mxu0 %v2212
      %2272 = vmatmul.bf16.gmra.mxu0 %v2227
      %v2273 = vpop.f32.mrf.mxu0
      %v2274 = vadd.f32 0.0, %v2273
      %v2275 = vpop.f32.mrf.mxu0
      %2276 = vdwg.mxu0
      %v2277 = vadd.f32 %v2204, %v2248
      %v2278 = vadd.f32 %v2205, %v2261
      %v2279 = vadd.f32 %v2206, %v2274
      %2280 = vrot.lane.b32.xlu0 %v1711, 90
      %v2281 = vpop.permute.xlu0 %2280
      %2282 = vrot.lane.b32.xlu0 %v1712, 90
      %v2283 = vpop.permute.xlu0 %2282
      %2284 = vrot.lane.b32.xlu0 %v1713, 90
      %v2285 = vpop.permute.xlu0 %2284
      %2286 = vrot.lane.b32.xlu0 %v1714, 90
      %v2287 = vpop.permute.xlu0 %2286
      %2288 = vrot.lane.b32.xlu0 %v1715, 90
      %v2289 = vpop.permute.xlu0 %2288
      %2290 = vrot.lane.b32.xlu0 %v1716, 90
      %v2291 = vpop.permute.xlu0 %2290
      %v2292 = vsel %vm923, %v2281, %v2283
      %v2293 = vsel %vm923, %v2283, %v2285
      %v2294 = vsel %vm923, %v2287, %v2289
      %v2295 = vsel %vm923, %v2289, %v2291
      %v2300 = vsel %vm1736, %v1688, 0
      %v2303 = vsel %vm439, %v2294, 0
      %v2306 = vsel %vm439, %v2295, 0
      %v2309 = vsel %vm439, %v2291, 0
      %2311 = vmatpush.bf16.msra.mxu0 0
      %2312 = vmatpush.bf16.msra.mxu0 0
      %2313 = vmatpush.bf16.msra.mxu0 0
      %2314 = vmatpush.bf16.msra.mxu0 0
      %2315 = vmatpush.bf16.msra.mxu0 0
      %2316 = vmatpush.bf16.msra.mxu0 0
      %2317 = vmatpush.bf16.msra.mxu0 %v2303
      %2318 = vmatpush.bf16.msra.mxu0 %v2292
      %2319 = vmatmul.bf16.gmra.mxu0 %v2300
      %v2320 = vpop.f32.mrf.mxu0
      %v2321 = vadd.f32 0.0, %v2320
      %v2322 = vpop.f32.mrf.mxu0
      %2323 = vdwg.mxu0
      %2324 = vmatpush.bf16.msra.mxu0 0
      %2325 = vmatpush.bf16.msra.mxu0 0
      %2326 = vmatpush.bf16.msra.mxu0 0
      %2327 = vmatpush.bf16.msra.mxu0 0
      %2328 = vmatpush.bf16.msra.mxu0 0
      %2329 = vmatpush.bf16.msra.mxu0 0
      %2330 = vmatpush.bf16.msra.mxu0 %v2306
      %2331 = vmatpush.bf16.msra.mxu0 %v2293
      %2332 = vmatmul.bf16.gmra.mxu0 %v2300
      %v2333 = vpop.f32.mrf.mxu0
      %v2334 = vadd.f32 0.0, %v2333
      %v2335 = vpop.f32.mrf.mxu0
      %2336 = vdwg.mxu0
      %2337 = vmatpush.bf16.msra.mxu0 0
      %2338 = vmatpush.bf16.msra.mxu0 0
      %2339 = vmatpush.bf16.msra.mxu0 0
      %2340 = vmatpush.bf16.msra.mxu0 0
      %2341 = vmatpush.bf16.msra.mxu0 0
      %2342 = vmatpush.bf16.msra.mxu0 0
      %2343 = vmatpush.bf16.msra.mxu0 %v2309
      %2344 = vmatpush.bf16.msra.mxu0 %v2285
      %2345 = vmatmul.bf16.gmra.mxu0 %v2300
      %v2346 = vpop.f32.mrf.mxu0
      %v2347 = vadd.f32 0.0, %v2346
      %v2348 = vpop.f32.mrf.mxu0
      %2349 = vdwg.mxu0
      %v2350 = vadd.f32 %v2277, %v2321
      %v2351 = vadd.f32 %v2278, %v2334
      %v2352 = vadd.f32 %v2279, %v2347
      %2354 = vset.pattern.permute.xlu0 2
      %2355 = vperm.xlu0 %2354, %v1689
      %v2356 = vpop.permute.xlu0 %2355
      %v2358 = vadd.f32 %v2350, %v2356
      %v2359 = vadd.f32 %v2351, %v2356
      %v2360 = vadd.f32 %v2352, %v2356
      %vm2361 = vcmp.gt.f32.partialorder %v2358, 0.0
      %vm2362 = vcmp.gt.f32.partialorder %v2359, 0.0
      %vm2363 = vcmp.gt.f32.partialorder %v2360, 0.0
      %v2364 = vmul.f32 %v2358, 0.02
      %v2365 = vmul.f32 %v2359, 0.02
      %v2366 = vmul.f32 %v2360, 0.02
      %v2367 = vsel %vm2361, %v2358, %v2364
      %v2368 = vsel %vm2362, %v2359, %v2365
      %v2369 = vsel %vm2363, %v2360, %v2366
      %v2370 = vmul.f32 %v2367, %v998
      %v2371 = vmul.f32 %v2368, %v999
      %v2372 = vmul.f32 %v2369, %v1000
      %v2373 = vpack.c.bf16 %v2371, %v2370
      %v2374 = vpack.c.bf16 %v2372, %v2372
      %v2377 = vrot.slane %v2373, 6
      %v2378 = vrot.slane %v2374, 6
      %v2379 = vrot.slane %v2377, 4
      %v2380 = vrot.slane %v2378, 4
      %2381 = vrot.lane.b32.xlu0 %v2377, 19
      %v2382 = vpop.permute.xlu0 %2381
      %2383 = vrot.lane.b32.xlu0 %v2378, 19
      %v2384 = vpop.permute.xlu0 %2383
      %2385 = vrot.lane.b32.xlu0 %v2379, 19
      %v2386 = vpop.permute.xlu0 %2385
      %2387 = vrot.lane.b32.xlu0 %v2380, 19
      %v2388 = vpop.permute.xlu0 %2387
      %v2389 = vrot.slane %v2382, 4
      %v2390 = vrot.slane %v2386, 4
      %v2391 = vsel %vm386, %v2389, %v2382
      %v2392 = vsel %vm386, %v2389, %v2384
      %v2393 = vsel %vm386, %v2390, %v2386
      %v2394 = vsel %vm386, %v2390, %v2388
      %2399 = vst.msk [vmem:[#allocation2 + $0x18] sm:$0xcc] %vm1035, %v2391
      %2400 = vst.msk [vmem:[#allocation2 + $0x20] sm:$0xc] %vm1037, %v2392
      %2401 = vst.msk [vmem:[#allocation2 + $0x24] sm:$0x33] %vm393, %v2393
      %2402 = vst.msk [vmem:[#allocation2 + $0x2c] sm:$0x3] %vm395, %v2394
      %v2403 = vld [vmem:[%s4] sm:$0xf]
      %s2404 = scalar_lea.vmem %s4, 4
      %v2405 = vld [vmem:[%s2404] sm:$0xf]
      %s2406 = scalar_lea.vmem %s4, 8
      %v2407 = vld [vmem:[%s2406] sm:$0xf]
      %s2408 = scalar_lea.vmem %s4, 12
      %v2409 = vld [vmem:[%s2408] sm:$0xf]
      %s2410 = scalar_lea.vmem %s4, 16
      %v2411 = vld [vmem:[%s2410] sm:$0xf]
      %s2412 = scalar_lea.vmem %s4, 20
      %v2413 = vld [vmem:[%s2412] sm:$0xf]
      %s2414 = scalar_lea.vmem %s4, 24
      %v2415 = vld [vmem:[%s2414] sm:$0xf]
      %s2416 = scalar_lea.vmem %s4, 28
      %v2417 = vld [vmem:[%s2416] sm:$0xf]
      %s2418 = scalar_lea.vmem %s4, 32
      %v2419 = vld [vmem:[%s2418] sm:$0xf]
      %v2420 = vld [vmem:[%s6] sm:$0xff]
      %v2421 = vld [vmem:[#allocation2] sm:$0xff]
      %v2422 = vld [vmem:[#allocation2 + $0x8] sm:$0xf]
      %v2423 = vld [vmem:[#allocation2 + $0xc] sm:$0xff]
      %v2424 = vld [vmem:[#allocation2 + $0x14] sm:$0xf]
      %v2425 = vld [vmem:[#allocation2 + $0x18] sm:$0xff]
      %v2426 = vld [vmem:[#allocation2 + $0x20] sm:$0xf]
      %v2427 = vld [vmem:[#allocation2 + $0x24] sm:$0x33]
      %v2428 = vld [vmem:[#allocation2 + $0x2c] sm:$0x3]
      %v2437 = vunpack.c.l.b16 %v2421
      %v2438 = vunpack.c.h.b16 %v2421
      %v2439 = vunpack.c.l.b16 %v2422
      %v2440 = vunpack.c.l.b16 %v2423
      %v2441 = vunpack.c.h.b16 %v2423
      %v2442 = vunpack.c.l.b16 %v2424
      %v2443 = vunpack.c.l.b16 %v2425
      %v2444 = vunpack.c.h.b16 %v2425
      %v2445 = vunpack.c.l.b16 %v2426
      %v2446 = vunpack.c.l.b16 %v2427
      %v2447 = vunpack.c.h.b16 %v2427
      %v2448 = vunpack.c.l.b16 %v2428
      %v2449 = vpack.c.b16 %v2440, %v2437
      %v2450 = vpack.c.b16 %v2441, %v2438
      %v2451 = vpack.c.b16 %v2442, %v2439
      %v2452 = vpack.c.b16 %v2446, %v2443
      %v2453 = vpack.c.b16 %v2447, %v2444
      %v2454 = vpack.c.b16 %v2448, %v2445
      %2455 = vrot.lane.b32.xlu0 %v2449, 127
      %v2456 = vpop.permute.xlu0 %2455
      %2457 = vrot.lane.b32.xlu0 %v2450, 127
      %v2458 = vpop.permute.xlu0 %2457
      %2459 = vrot.lane.b32.xlu0 %v2451, 127
      %v2460 = vpop.permute.xlu0 %2459
      %2461 = vrot.lane.b32.xlu0 %v2452, 127
      %v2462 = vpop.permute.xlu0 %2461
      %2463 = vrot.lane.b32.xlu0 %v2453, 127
      %v2464 = vpop.permute.xlu0 %2463
      %2465 = vrot.lane.b32.xlu0 %v2454, 127
      %v2466 = vpop.permute.xlu0 %2465
      %v2467 = vsel %vm432, %v2456, %v2458
      %v2468 = vsel %vm432, %v2458, %v2460
      %v2469 = vsel %vm432, %v2462, %v2464
      %v2470 = vsel %vm432, %v2464, %v2466
      %vm2474 = vcmask 228352
      %v2476 = vsel %vm2474, %v2405, 0
      %v2479 = vsel %vm1088, %v2469, 0
      %v2482 = vsel %vm1088, %v2470, 0
      %v2485 = vsel %vm1088, %v2466, 0
      %2487 = vmatpush.bf16.msra.mxu0 0
      %2488 = vmatpush.bf16.msra.mxu0 0
      %2489 = vmatpush.bf16.msra.mxu0 0
      %2490 = vmatpush.bf16.msra.mxu0 0
      %2491 = vmatpush.bf16.msra.mxu0 0
      %2492 = vmatpush.bf16.msra.mxu0 0
      %2493 = vmatpush.bf16.msra.mxu0 %v2479
      %2494 = vmatpush.bf16.msra.mxu0 %v2467
      %2495 = vmatmul.bf16.gmra.mxu0 %v2476
      %v2496 = vpop.f32.mrf.mxu0
      %v2497 = vadd.f32 0.0, %v2496
      %v2498 = vpop.f32.mrf.mxu0
      %2499 = vdwg.mxu0
      %2500 = vmatpush.bf16.msra.mxu0 0
      %2501 = vmatpush.bf16.msra.mxu0 0
      %2502 = vmatpush.bf16.msra.mxu0 0
      %2503 = vmatpush.bf16.msra.mxu0 0
      %2504 = vmatpush.bf16.msra.mxu0 0
      %2505 = vmatpush.bf16.msra.mxu0 0
      %2506 = vmatpush.bf16.msra.mxu0 %v2482
      %2507 = vmatpush.bf16.msra.mxu0 %v2468
      %2508 = vmatmul.bf16.gmra.mxu0 %v2476
      %v2509 = vpop.f32.mrf.mxu0
      %v2510 = vadd.f32 0.0, %v2509
      %v2511 = vpop.f32.mrf.mxu0
      %2512 = vdwg.mxu0
      %2513 = vmatpush.bf16.msra.mxu0 0
      %2514 = vmatpush.bf16.msra.mxu0 0
      %2515 = vmatpush.bf16.msra.mxu0 0
      %2516 = vmatpush.bf16.msra.mxu0 0
      %2517 = vmatpush.bf16.msra.mxu0 0
      %2518 = vmatpush.bf16.msra.mxu0 0
      %2519 = vmatpush.bf16.msra.mxu0 %v2485
      %2520 = vmatpush.bf16.msra.mxu0 %v2460
      %2521 = vmatmul.bf16.gmra.mxu0 %v2476
      %v2522 = vpop.f32.mrf.mxu0
      %v2523 = vadd.f32 0.0, %v2522
      %v2524 = vpop.f32.mrf.mxu0
      %2525 = vdwg.mxu0
      %v2530 = vsel %vm2474, %v2403, 0
      %v2533 = vsel %vm1088, %v2452, 0
      %v2536 = vsel %vm1088, %v2453, 0
      %v2539 = vsel %vm1088, %v2454, 0
      %2541 = vmatpush.bf16.msra.mxu0 0
      %2542 = vmatpush.bf16.msra.mxu0 0
      %2543 = vmatpush.bf16.msra.mxu0 0
      %2544 = vmatpush.bf16.msra.mxu0 0
      %2545 = vmatpush.bf16.msra.mxu0 0
      %2546 = vmatpush.bf16.msra.mxu0 0
      %2547 = vmatpush.bf16.msra.mxu0 %v2533
      %2548 = vmatpush.bf16.msra.mxu0 %v2449
      %2549 = vmatmul.bf16.gmra.mxu0 %v2530
      %v2550 = vpop.f32.mrf.mxu0
      %v2551 = vadd.f32 %v2497, %v2550
      %v2552 = vpop.f32.mrf.mxu0
      %2553 = vdwg.mxu0
      %2554 = vmatpush.bf16.msra.mxu0 0
      %2555 = vmatpush.bf16.msra.mxu0 0
      %2556 = vmatpush.bf16.msra.mxu0 0
      %2557 = vmatpush.bf16.msra.mxu0 0
      %2558 = vmatpush.bf16.msra.mxu0 0
      %2559 = vmatpush.bf16.msra.mxu0 0
      %2560 = vmatpush.bf16.msra.mxu0 %v2536
      %2561 = vmatpush.bf16.msra.mxu0 %v2450
      %2562 = vmatmul.bf16.gmra.mxu0 %v2530
      %v2563 = vpop.f32.mrf.mxu0
      %v2564 = vadd.f32 %v2510, %v2563
      %v2565 = vpop.f32.mrf.mxu0
      %2566 = vdwg.mxu0
      %2567 = vmatpush.bf16.msra.mxu0 0
      %2568 = vmatpush.bf16.msra.mxu0 0
      %2569 = vmatpush.bf16.msra.mxu0 0
      %2570 = vmatpush.bf16.msra.mxu0 0
      %2571 = vmatpush.bf16.msra.mxu0 0
      %2572 = vmatpush.bf16.msra.mxu0 0
      %2573 = vmatpush.bf16.msra.mxu0 %v2539
      %2574 = vmatpush.bf16.msra.mxu0 %v2451
      %2575 = vmatmul.bf16.gmra.mxu0 %v2530
      %v2576 = vpop.f32.mrf.mxu0
      %v2577 = vadd.f32 %v2523, %v2576
      %v2578 = vpop.f32.mrf.mxu0
      %2579 = vdwg.mxu0
      %2580 = vrot.lane.b32.xlu0 %v2449, 126
      %v2581 = vpop.permute.xlu0 %2580
      %2582 = vrot.lane.b32.xlu0 %v2450, 126
      %v2583 = vpop.permute.xlu0 %2582
      %2584 = vrot.lane.b32.xlu0 %v2451, 126
      %v2585 = vpop.permute.xlu0 %2584
      %2586 = vrot.lane.b32.xlu0 %v2452, 126
      %v2587 = vpop.permute.xlu0 %2586
      %2588 = vrot.lane.b32.xlu0 %v2453, 126
      %v2589 = vpop.permute.xlu0 %2588
      %2590 = vrot.lane.b32.xlu0 %v2454, 126
      %v2591 = vpop.permute.xlu0 %2590
      %v2592 = vsel %vm545, %v2581, %v2583
      %v2593 = vsel %vm545, %v2583, %v2585
      %v2594 = vsel %vm545, %v2587, %v2589
      %v2595 = vsel %vm545, %v2589, %v2591
      %v2600 = vsel %vm2474, %v2407, 0
      %v2603 = vsel %vm1088, %v2594, 0
      %v2606 = vsel %vm1088, %v2595, 0
      %v2609 = vsel %vm1088, %v2591, 0
      %2611 = vmatpush.bf16.msra.mxu0 0
      %2612 = vmatpush.bf16.msra.mxu0 0
      %2613 = vmatpush.bf16.msra.mxu0 0
      %2614 = vmatpush.bf16.msra.mxu0 0
      %2615 = vmatpush.bf16.msra.mxu0 0
      %2616 = vmatpush.bf16.msra.mxu0 0
      %2617 = vmatpush.bf16.msra.mxu0 %v2603
      %2618 = vmatpush.bf16.msra.mxu0 %v2592
      %2619 = vmatmul.bf16.gmra.mxu0 %v2600
      %v2620 = vpop.f32.mrf.mxu0
      %v2621 = vadd.f32 0.0, %v2620
      %v2622 = vpop.f32.mrf.mxu0
      %2623 = vdwg.mxu0
      %2624 = vmatpush.bf16.msra.mxu0 0
      %2625 = vmatpush.bf16.msra.mxu0 0
      %2626 = vmatpush.bf16.msra.mxu0 0
      %2627 = vmatpush.bf16.msra.mxu0 0
      %2628 = vmatpush.bf16.msra.mxu0 0
      %2629 = vmatpush.bf16.msra.mxu0 0
      %2630 = vmatpush.bf16.msra.mxu0 %v2606
      %2631 = vmatpush.bf16.msra.mxu0 %v2593
      %2632 = vmatmul.bf16.gmra.mxu0 %v2600
      %v2633 = vpop.f32.mrf.mxu0
      %v2634 = vadd.f32 0.0, %v2633
      %v2635 = vpop.f32.mrf.mxu0
      %2636 = vdwg.mxu0
      %2637 = vmatpush.bf16.msra.mxu0 0
      %2638 = vmatpush.bf16.msra.mxu0 0
      %2639 = vmatpush.bf16.msra.mxu0 0
      %2640 = vmatpush.bf16.msra.mxu0 0
      %2641 = vmatpush.bf16.msra.mxu0 0
      %2642 = vmatpush.bf16.msra.mxu0 0
      %2643 = vmatpush.bf16.msra.mxu0 %v2609
      %2644 = vmatpush.bf16.msra.mxu0 %v2585
      %2645 = vmatmul.bf16.gmra.mxu0 %v2600
      %v2646 = vpop.f32.mrf.mxu0
      %v2647 = vadd.f32 0.0, %v2646
      %v2648 = vpop.f32.mrf.mxu0
      %2649 = vdwg.mxu0
      %v2650 = vadd.f32 %v2551, %v2621
      %v2651 = vadd.f32 %v2564, %v2634
      %v2652 = vadd.f32 %v2577, %v2647
      %2653 = vrot.lane.b32.xlu0 %v2449, 110
      %v2654 = vpop.permute.xlu0 %2653
      %2655 = vrot.lane.b32.xlu0 %v2450, 110
      %v2656 = vpop.permute.xlu0 %2655
      %2657 = vrot.lane.b32.xlu0 %v2451, 110
      %v2658 = vpop.permute.xlu0 %2657
      %2659 = vrot.lane.b32.xlu0 %v2452, 110
      %v2660 = vpop.permute.xlu0 %2659
      %2661 = vrot.lane.b32.xlu0 %v2453, 110
      %v2662 = vpop.permute.xlu0 %2661
      %2663 = vrot.lane.b32.xlu0 %v2454, 110
      %v2664 = vpop.permute.xlu0 %2663
      %v2665 = vsel %vm608, %v2654, %v2656
      %v2666 = vsel %vm608, %v2656, %v2658
      %v2667 = vsel %vm608, %v2660, %v2662
      %v2668 = vsel %vm608, %v2662, %v2664
      %v2673 = vsel %vm2474, %v2409, 0
      %v2676 = vsel %vm1088, %v2667, 0
      %v2679 = vsel %vm1088, %v2668, 0
      %v2682 = vsel %vm1088, %v2664, 0
      %2684 = vmatpush.bf16.msra.mxu0 0
      %2685 = vmatpush.bf16.msra.mxu0 0
      %2686 = vmatpush.bf16.msra.mxu0 0
      %2687 = vmatpush.bf16.msra.mxu0 0
      %2688 = vmatpush.bf16.msra.mxu0 0
      %2689 = vmatpush.bf16.msra.mxu0 0
      %2690 = vmatpush.bf16.msra.mxu0 %v2676
      %2691 = vmatpush.bf16.msra.mxu0 %v2665
      %2692 = vmatmul.bf16.gmra.mxu0 %v2673
      %v2693 = vpop.f32.mrf.mxu0
      %v2694 = vadd.f32 0.0, %v2693
      %v2695 = vpop.f32.mrf.mxu0
      %2696 = vdwg.mxu0
      %2697 = vmatpush.bf16.msra.mxu0 0
      %2698 = vmatpush.bf16.msra.mxu0 0
      %2699 = vmatpush.bf16.msra.mxu0 0
      %2700 = vmatpush.bf16.msra.mxu0 0
      %2701 = vmatpush.bf16.msra.mxu0 0
      %2702 = vmatpush.bf16.msra.mxu0 0
      %2703 = vmatpush.bf16.msra.mxu0 %v2679
      %2704 = vmatpush.bf16.msra.mxu0 %v2666
      %2705 = vmatmul.bf16.gmra.mxu0 %v2673
      %v2706 = vpop.f32.mrf.mxu0
      %v2707 = vadd.f32 0.0, %v2706
      %v2708 = vpop.f32.mrf.mxu0
      %2709 = vdwg.mxu0
      %2710 = vmatpush.bf16.msra.mxu0 0
      %2711 = vmatpush.bf16.msra.mxu0 0
      %2712 = vmatpush.bf16.msra.mxu0 0
      %2713 = vmatpush.bf16.msra.mxu0 0
      %2714 = vmatpush.bf16.msra.mxu0 0
      %2715 = vmatpush.bf16.msra.mxu0 0
      %2716 = vmatpush.bf16.msra.mxu0 %v2682
      %2717 = vmatpush.bf16.msra.mxu0 %v2658
      %2718 = vmatmul.bf16.gmra.mxu0 %v2673
      %v2719 = vpop.f32.mrf.mxu0
      %v2720 = vadd.f32 0.0, %v2719
      %v2721 = vpop.f32.mrf.mxu0
      %2722 = vdwg.mxu0
      %v2723 = vadd.f32 %v2650, %v2694
      %v2724 = vadd.f32 %v2651, %v2707
      %v2725 = vadd.f32 %v2652, %v2720
      %2726 = vrot.lane.b32.xlu0 %v2449, 109
      %v2727 = vpop.permute.xlu0 %2726
      %2728 = vrot.lane.b32.xlu0 %v2450, 109
      %v2729 = vpop.permute.xlu0 %2728
      %2730 = vrot.lane.b32.xlu0 %v2451, 109
      %v2731 = vpop.permute.xlu0 %2730
      %2732 = vrot.lane.b32.xlu0 %v2452, 109
      %v2733 = vpop.permute.xlu0 %2732
      %2734 = vrot.lane.b32.xlu0 %v2453, 109
      %v2735 = vpop.permute.xlu0 %2734
      %2736 = vrot.lane.b32.xlu0 %v2454, 109
      %v2737 = vpop.permute.xlu0 %2736
      %v2738 = vsel %vm671, %v2727, %v2729
      %v2739 = vsel %vm671, %v2729, %v2731
      %v2740 = vsel %vm671, %v2733, %v2735
      %v2741 = vsel %vm671, %v2735, %v2737
      %v2746 = vsel %vm2474, %v2411, 0
      %v2749 = vsel %vm1088, %v2740, 0
      %v2752 = vsel %vm1088, %v2741, 0
      %v2755 = vsel %vm1088, %v2737, 0
      %2757 = vmatpush.bf16.msra.mxu0 0
      %2758 = vmatpush.bf16.msra.mxu0 0
      %2759 = vmatpush.bf16.msra.mxu0 0
      %2760 = vmatpush.bf16.msra.mxu0 0
      %2761 = vmatpush.bf16.msra.mxu0 0
      %2762 = vmatpush.bf16.msra.mxu0 0
      %2763 = vmatpush.bf16.msra.mxu0 %v2749
      %2764 = vmatpush.bf16.msra.mxu0 %v2738
      %2765 = vmatmul.bf16.gmra.mxu0 %v2746
      %v2766 = vpop.f32.mrf.mxu0
      %v2767 = vadd.f32 0.0, %v2766
      %v2768 = vpop.f32.mrf.mxu0
      %2769 = vdwg.mxu0
      %2770 = vmatpush.bf16.msra.mxu0 0
      %2771 = vmatpush.bf16.msra.mxu0 0
      %2772 = vmatpush.bf16.msra.mxu0 0
      %2773 = vmatpush.bf16.msra.mxu0 0
      %2774 = vmatpush.bf16.msra.mxu0 0
      %2775 = vmatpush.bf16.msra.mxu0 0
      %2776 = vmatpush.bf16.msra.mxu0 %v2752
      %2777 = vmatpush.bf16.msra.mxu0 %v2739
      %2778 = vmatmul.bf16.gmra.mxu0 %v2746
      %v2779 = vpop.f32.mrf.mxu0
      %v2780 = vadd.f32 0.0, %v2779
      %v2781 = vpop.f32.mrf.mxu0
      %2782 = vdwg.mxu0
      %2783 = vmatpush.bf16.msra.mxu0 0
      %2784 = vmatpush.bf16.msra.mxu0 0
      %2785 = vmatpush.bf16.msra.mxu0 0
      %2786 = vmatpush.bf16.msra.mxu0 0
      %2787 = vmatpush.bf16.msra.mxu0 0
      %2788 = vmatpush.bf16.msra.mxu0 0
      %2789 = vmatpush.bf16.msra.mxu0 %v2755
      %2790 = vmatpush.bf16.msra.mxu0 %v2731
      %2791 = vmatmul.bf16.gmra.mxu0 %v2746
      %v2792 = vpop.f32.mrf.mxu0
      %v2793 = vadd.f32 0.0, %v2792
      %v2794 = vpop.f32.mrf.mxu0
      %2795 = vdwg.mxu0
      %v2796 = vadd.f32 %v2723, %v2767
      %v2797 = vadd.f32 %v2724, %v2780
      %v2798 = vadd.f32 %v2725, %v2793
      %2799 = vrot.lane.b32.xlu0 %v2449, 108
      %v2800 = vpop.permute.xlu0 %2799
      %2801 = vrot.lane.b32.xlu0 %v2450, 108
      %v2802 = vpop.permute.xlu0 %2801
      %2803 = vrot.lane.b32.xlu0 %v2451, 108
      %v2804 = vpop.permute.xlu0 %2803
      %2805 = vrot.lane.b32.xlu0 %v2452, 108
      %v2806 = vpop.permute.xlu0 %2805
      %2807 = vrot.lane.b32.xlu0 %v2453, 108
      %v2808 = vpop.permute.xlu0 %2807
      %2809 = vrot.lane.b32.xlu0 %v2454, 108
      %v2810 = vpop.permute.xlu0 %2809
      %v2811 = vsel %vm734, %v2800, %v2802
      %v2812 = vsel %vm734, %v2802, %v2804
      %v2813 = vsel %vm734, %v2806, %v2808
      %v2814 = vsel %vm734, %v2808, %v2810
      %v2819 = vsel %vm2474, %v2413, 0
      %v2822 = vsel %vm1088, %v2813, 0
      %v2825 = vsel %vm1088, %v2814, 0
      %v2828 = vsel %vm1088, %v2810, 0
      %2830 = vmatpush.bf16.msra.mxu0 0
      %2831 = vmatpush.bf16.msra.mxu0 0
      %2832 = vmatpush.bf16.msra.mxu0 0
      %2833 = vmatpush.bf16.msra.mxu0 0
      %2834 = vmatpush.bf16.msra.mxu0 0
      %2835 = vmatpush.bf16.msra.mxu0 0
      %2836 = vmatpush.bf16.msra.mxu0 %v2822
      %2837 = vmatpush.bf16.msra.mxu0 %v2811
      %2838 = vmatmul.bf16.gmra.mxu0 %v2819
      %v2839 = vpop.f32.mrf.mxu0
      %v2840 = vadd.f32 0.0, %v2839
      %v2841 = vpop.f32.mrf.mxu0
      %2842 = vdwg.mxu0
      %2843 = vmatpush.bf16.msra.mxu0 0
      %2844 = vmatpush.bf16.msra.mxu0 0
      %2845 = vmatpush.bf16.msra.mxu0 0
      %2846 = vmatpush.bf16.msra.mxu0 0
      %2847 = vmatpush.bf16.msra.mxu0 0
      %2848 = vmatpush.bf16.msra.mxu0 0
      %2849 = vmatpush.bf16.msra.mxu0 %v2825
      %2850 = vmatpush.bf16.msra.mxu0 %v2812
      %2851 = vmatmul.bf16.gmra.mxu0 %v2819
      %v2852 = vpop.f32.mrf.mxu0
      %v2853 = vadd.f32 0.0, %v2852
      %v2854 = vpop.f32.mrf.mxu0
      %2855 = vdwg.mxu0
      %2856 = vmatpush.bf16.msra.mxu0 0
      %2857 = vmatpush.bf16.msra.mxu0 0
      %2858 = vmatpush.bf16.msra.mxu0 0
      %2859 = vmatpush.bf16.msra.mxu0 0
      %2860 = vmatpush.bf16.msra.mxu0 0
      %2861 = vmatpush.bf16.msra.mxu0 0
      %2862 = vmatpush.bf16.msra.mxu0 %v2828
      %2863 = vmatpush.bf16.msra.mxu0 %v2804
      %2864 = vmatmul.bf16.gmra.mxu0 %v2819
      %v2865 = vpop.f32.mrf.mxu0
      %v2866 = vadd.f32 0.0, %v2865
      %v2867 = vpop.f32.mrf.mxu0
      %2868 = vdwg.mxu0
      %v2869 = vadd.f32 %v2796, %v2840
      %v2870 = vadd.f32 %v2797, %v2853
      %v2871 = vadd.f32 %v2798, %v2866
      %2872 = vrot.lane.b32.xlu0 %v2449, 92
      %v2873 = vpop.permute.xlu0 %2872
      %2874 = vrot.lane.b32.xlu0 %v2450, 92
      %v2875 = vpop.permute.xlu0 %2874
      %2876 = vrot.lane.b32.xlu0 %v2451, 92
      %v2877 = vpop.permute.xlu0 %2876
      %2878 = vrot.lane.b32.xlu0 %v2452, 92
      %v2879 = vpop.permute.xlu0 %2878
      %2880 = vrot.lane.b32.xlu0 %v2453, 92
      %v2881 = vpop.permute.xlu0 %2880
      %2882 = vrot.lane.b32.xlu0 %v2454, 92
      %v2883 = vpop.permute.xlu0 %2882
      %v2884 = vsel %vm797, %v2873, %v2875
      %v2885 = vsel %vm797, %v2875, %v2877
      %v2886 = vsel %vm797, %v2879, %v2881
      %v2887 = vsel %vm797, %v2881, %v2883
      %v2892 = vsel %vm2474, %v2415, 0
      %v2895 = vsel %vm1088, %v2886, 0
      %v2898 = vsel %vm1088, %v2887, 0
      %v2901 = vsel %vm1088, %v2883, 0
      %2903 = vmatpush.bf16.msra.mxu0 0
      %2904 = vmatpush.bf16.msra.mxu0 0
      %2905 = vmatpush.bf16.msra.mxu0 0
      %2906 = vmatpush.bf16.msra.mxu0 0
      %2907 = vmatpush.bf16.msra.mxu0 0
      %2908 = vmatpush.bf16.msra.mxu0 0
      %2909 = vmatpush.bf16.msra.mxu0 %v2895
      %2910 = vmatpush.bf16.msra.mxu0 %v2884
      %2911 = vmatmul.bf16.gmra.mxu0 %v2892
      %v2912 = vpop.f32.mrf.mxu0
      %v2913 = vadd.f32 0.0, %v2912
      %v2914 = vpop.f32.mrf.mxu0
      %2915 = vdwg.mxu0
      %2916 = vmatpush.bf16.msra.mxu0 0
      %2917 = vmatpush.bf16.msra.mxu0 0
      %2918 = vmatpush.bf16.msra.mxu0 0
      %2919 = vmatpush.bf16.msra.mxu0 0
      %2920 = vmatpush.bf16.msra.mxu0 0
      %2921 = vmatpush.bf16.msra.mxu0 0
      %2922 = vmatpush.bf16.msra.mxu0 %v2898
      %2923 = vmatpush.bf16.msra.mxu0 %v2885
      %2924 = vmatmul.bf16.gmra.mxu0 %v2892
      %v2925 = vpop.f32.mrf.mxu0
      %v2926 = vadd.f32 0.0, %v2925
      %v2927 = vpop.f32.mrf.mxu0
      %2928 = vdwg.mxu0
      %2929 = vmatpush.bf16.msra.mxu0 0
      %2930 = vmatpush.bf16.msra.mxu0 0
      %2931 = vmatpush.bf16.msra.mxu0 0
      %2932 = vmatpush.bf16.msra.mxu0 0
      %2933 = vmatpush.bf16.msra.mxu0 0
      %2934 = vmatpush.bf16.msra.mxu0 0
      %2935 = vmatpush.bf16.msra.mxu0 %v2901
      %2936 = vmatpush.bf16.msra.mxu0 %v2877
      %2937 = vmatmul.bf16.gmra.mxu0 %v2892
      %v2938 = vpop.f32.mrf.mxu0
      %v2939 = vadd.f32 0.0, %v2938
      %v2940 = vpop.f32.mrf.mxu0
      %2941 = vdwg.mxu0
      %v2942 = vadd.f32 %v2869, %v2913
      %v2943 = vadd.f32 %v2870, %v2926
      %v2944 = vadd.f32 %v2871, %v2939
      %2945 = vrot.lane.b32.xlu0 %v2449, 91
      %v2946 = vpop.permute.xlu0 %2945
      %2947 = vrot.lane.b32.xlu0 %v2450, 91
      %v2948 = vpop.permute.xlu0 %2947
      %2949 = vrot.lane.b32.xlu0 %v2451, 91
      %v2950 = vpop.permute.xlu0 %2949
      %2951 = vrot.lane.b32.xlu0 %v2452, 91
      %v2952 = vpop.permute.xlu0 %2951
      %2953 = vrot.lane.b32.xlu0 %v2453, 91
      %v2954 = vpop.permute.xlu0 %2953
      %2955 = vrot.lane.b32.xlu0 %v2454, 91
      %v2956 = vpop.permute.xlu0 %2955
      %v2957 = vsel %vm860, %v2946, %v2948
      %v2958 = vsel %vm860, %v2948, %v2950
      %v2959 = vsel %vm860, %v2952, %v2954
      %v2960 = vsel %vm860, %v2954, %v2956
      %v2965 = vsel %vm2474, %v2417, 0
      %v2968 = vsel %vm1088, %v2959, 0
      %v2971 = vsel %vm1088, %v2960, 0
      %v2974 = vsel %vm1088, %v2956, 0
      %2976 = vmatpush.bf16.msra.mxu0 0
      %2977 = vmatpush.bf16.msra.mxu0 0
      %2978 = vmatpush.bf16.msra.mxu0 0
      %2979 = vmatpush.bf16.msra.mxu0 0
      %2980 = vmatpush.bf16.msra.mxu0 0
      %2981 = vmatpush.bf16.msra.mxu0 0
      %2982 = vmatpush.bf16.msra.mxu0 %v2968
      %2983 = vmatpush.bf16.msra.mxu0 %v2957
      %2984 = vmatmul.bf16.gmra.mxu0 %v2965
      %v2985 = vpop.f32.mrf.mxu0
      %v2986 = vadd.f32 0.0, %v2985
      %v2987 = vpop.f32.mrf.mxu0
      %2988 = vdwg.mxu0
      %2989 = vmatpush.bf16.msra.mxu0 0
      %2990 = vmatpush.bf16.msra.mxu0 0
      %2991 = vmatpush.bf16.msra.mxu0 0
      %2992 = vmatpush.bf16.msra.mxu0 0
      %2993 = vmatpush.bf16.msra.mxu0 0
      %2994 = vmatpush.bf16.msra.mxu0 0
      %2995 = vmatpush.bf16.msra.mxu0 %v2971
      %2996 = vmatpush.bf16.msra.mxu0 %v2958
      %2997 = vmatmul.bf16.gmra.mxu0 %v2965
      %v2998 = vpop.f32.mrf.mxu0
      %v2999 = vadd.f32 0.0, %v2998
      %v3000 = vpop.f32.mrf.mxu0
      %3001 = vdwg.mxu0
      %3002 = vmatpush.bf16.msra.mxu0 0
      %3003 = vmatpush.bf16.msra.mxu0 0
      %3004 = vmatpush.bf16.msra.mxu0 0
      %3005 = vmatpush.bf16.msra.mxu0 0
      %3006 = vmatpush.bf16.msra.mxu0 0
      %3007 = vmatpush.bf16.msra.mxu0 0
      %3008 = vmatpush.bf16.msra.mxu0 %v2974
      %3009 = vmatpush.bf16.msra.mxu0 %v2950
      %3010 = vmatmul.bf16.gmra.mxu0 %v2965
      %v3011 = vpop.f32.mrf.mxu0
      %v3012 = vadd.f32 0.0, %v3011
      %v3013 = vpop.f32.mrf.mxu0
      %3014 = vdwg.mxu0
      %v3015 = vadd.f32 %v2942, %v2986
      %v3016 = vadd.f32 %v2943, %v2999
      %v3017 = vadd.f32 %v2944, %v3012
      %3018 = vrot.lane.b32.xlu0 %v2449, 90
      %v3019 = vpop.permute.xlu0 %3018
      %3020 = vrot.lane.b32.xlu0 %v2450, 90
      %v3021 = vpop.permute.xlu0 %3020
      %3022 = vrot.lane.b32.xlu0 %v2451, 90
      %v3023 = vpop.permute.xlu0 %3022
      %3024 = vrot.lane.b32.xlu0 %v2452, 90
      %v3025 = vpop.permute.xlu0 %3024
      %3026 = vrot.lane.b32.xlu0 %v2453, 90
      %v3027 = vpop.permute.xlu0 %3026
      %3028 = vrot.lane.b32.xlu0 %v2454, 90
      %v3029 = vpop.permute.xlu0 %3028
      %v3030 = vsel %vm923, %v3019, %v3021
      %v3031 = vsel %vm923, %v3021, %v3023
      %v3032 = vsel %vm923, %v3025, %v3027
      %v3033 = vsel %vm923, %v3027, %v3029
      %v3038 = vsel %vm2474, %v2419, 0
      %v3041 = vsel %vm1088, %v3032, 0
      %v3044 = vsel %vm1088, %v3033, 0
      %v3047 = vsel %vm1088, %v3029, 0
      %3049 = vmatpush.bf16.msra.mxu0 0
      %3050 = vmatpush.bf16.msra.mxu0 0
      %3051 = vmatpush.bf16.msra.mxu0 0
      %3052 = vmatpush.bf16.msra.mxu0 0
      %3053 = vmatpush.bf16.msra.mxu0 0
      %3054 = vmatpush.bf16.msra.mxu0 0
      %3055 = vmatpush.bf16.msra.mxu0 %v3041
      %3056 = vmatpush.bf16.msra.mxu0 %v3030
      %3057 = vmatmul.bf16.gmra.mxu0 %v3038
      %v3058 = vpop.f32.mrf.mxu0
      %v3059 = vadd.f32 0.0, %v3058
      %v3060 = vpop.f32.mrf.mxu0
      %3061 = vdwg.mxu0
      %3062 = vmatpush.bf16.msra.mxu0 0
      %3063 = vmatpush.bf16.msra.mxu0 0
      %3064 = vmatpush.bf16.msra.mxu0 0
      %3065 = vmatpush.bf16.msra.mxu0 0
      %3066 = vmatpush.bf16.msra.mxu0 0
      %3067 = vmatpush.bf16.msra.mxu0 0
      %3068 = vmatpush.bf16.msra.mxu0 %v3044
      %3069 = vmatpush.bf16.msra.mxu0 %v3031
      %3070 = vmatmul.bf16.gmra.mxu0 %v3038
      %v3071 = vpop.f32.mrf.mxu0
      %v3072 = vadd.f32 0.0, %v3071
      %v3073 = vpop.f32.mrf.mxu0
      %3074 = vdwg.mxu0
      %3075 = vmatpush.bf16.msra.mxu0 0
      %3076 = vmatpush.bf16.msra.mxu0 0
      %3077 = vmatpush.bf16.msra.mxu0 0
      %3078 = vmatpush.bf16.msra.mxu0 0
      %3079 = vmatpush.bf16.msra.mxu0 0
      %3080 = vmatpush.bf16.msra.mxu0 0
      %3081 = vmatpush.bf16.msra.mxu0 %v3047
      %3082 = vmatpush.bf16.msra.mxu0 %v3023
      %3083 = vmatmul.bf16.gmra.mxu0 %v3038
      %v3084 = vpop.f32.mrf.mxu0
      %v3085 = vadd.f32 0.0, %v3084
      %v3086 = vpop.f32.mrf.mxu0
      %3087 = vdwg.mxu0
      %v3088 = vadd.f32 %v3015, %v3059
      %v3089 = vadd.f32 %v3016, %v3072
      %v3090 = vadd.f32 %v3017, %v3085
      %3092 = vset.pattern.permute.xlu0 3
      %3093 = vperm.xlu0 %3092, %v2420
      %v3094 = vpop.permute.xlu0 %3093
      %v3096 = vadd.f32 %v3088, %v3094
      %v3097 = vadd.f32 %v3089, %v3094
      %v3098 = vadd.f32 %v3090, %v3094
      %vm3099 = vcmp.gt.f32.partialorder %v3096, 0.0
      %vm3100 = vcmp.gt.f32.partialorder %v3097, 0.0
      %vm3101 = vcmp.gt.f32.partialorder %v3098, 0.0
      %v3102 = vmul.f32 %v3096, 0.02
      %v3103 = vmul.f32 %v3097, 0.02
      %v3104 = vmul.f32 %v3098, 0.02
      %v3105 = vsel %vm3099, %v3096, %v3102
      %v3106 = vsel %vm3100, %v3097, %v3103
      %v3107 = vsel %vm3101, %v3098, %v3104
      %v3108 = vmul.f32 %v3105, %v998
      %v3109 = vmul.f32 %v3106, %v999
      %v3110 = vmul.f32 %v3107, %v1000
      %v3111 = vpack.c.bf16 %v3109, %v3108
      %v3112 = vpack.c.bf16 %v3110, %v3110
      %v3115 = vrot.slane %v3111, 6
      %v3116 = vrot.slane %v3112, 6
      %v3117 = vrot.slane %v3115, 4
      %v3118 = vrot.slane %v3116, 4
      %3119 = vrot.lane.b32.xlu0 %v3115, 19
      %v3120 = vpop.permute.xlu0 %3119
      %3121 = vrot.lane.b32.xlu0 %v3116, 19
      %v3122 = vpop.permute.xlu0 %3121
      %3123 = vrot.lane.b32.xlu0 %v3117, 19
      %v3124 = vpop.permute.xlu0 %3123
      %3125 = vrot.lane.b32.xlu0 %v3118, 19
      %v3126 = vpop.permute.xlu0 %3125
      %v3127 = vrot.slane %v3120, 4
      %v3128 = vrot.slane %v3124, 4
      %v3129 = vsel %vm386, %v3127, %v3120
      %v3130 = vsel %vm386, %v3127, %v3122
      %v3131 = vsel %vm386, %v3128, %v3124
      %v3132 = vsel %vm386, %v3128, %v3126
      %3137 = vst.msk [vmem:[#allocation2 + $0x24] sm:$0xcc] %vm1035, %v3129
      %3138 = vst.msk [vmem:[#allocation2 + $0x2c] sm:$0xc] %vm1037, %v3130
      %3139 = vst.msk [vmem:[#allocation2 + $0x30] sm:$0x33] %vm393, %v3131
      %3140 = vst.msk [vmem:[#allocation2 + $0x38] sm:$0x3] %vm395, %v3132
      %v3141 = vld [vmem:[%s5] sm:$0x3]
      %s3142 = scalar_lea.vmem %s5, 2
      %v3143 = vld [vmem:[%s3142] sm:$0x3]
      %s3144 = scalar_lea.vmem %s5, 4
      %v3145 = vld [vmem:[%s3144] sm:$0x3]
      %s3146 = scalar_lea.vmem %s5, 6
      %v3147 = vld [vmem:[%s3146] sm:$0x3]
      %s3148 = scalar_lea.vmem %s5, 8
      %v3149 = vld [vmem:[%s3148] sm:$0x3]
      %s3150 = scalar_lea.vmem %s5, 10
      %v3151 = vld [vmem:[%s3150] sm:$0x3]
      %s3152 = scalar_lea.vmem %s5, 12
      %v3153 = vld [vmem:[%s3152] sm:$0x3]
      %s3154 = scalar_lea.vmem %s5, 14
      %v3155 = vld [vmem:[%s3154] sm:$0x3]
      %s3156 = scalar_lea.vmem %s5, 16
      %v3157 = vld [vmem:[%s3156] sm:$0x3]
      %v3158 = vld [vmem:[%s6] sm:$0xf]
      %v3159 = vld [vmem:[#allocation2] sm:$0xff]
      %v3160 = vld [vmem:[#allocation2 + $0xc] sm:$0xff]
      %v3161 = vld [vmem:[#allocation2 + $0x18] sm:$0xff]
      %v3162 = vld [vmem:[#allocation2 + $0x24] sm:$0xff]
      %v3163 = vld [vmem:[#allocation2 + $0x30] sm:$0x33]
      %v3169 = vunpack.c.l.b16 %v3159
      %v3170 = vunpack.c.h.b16 %v3159
      %v3171 = vunpack.c.l.b16 %v3160
      %v3172 = vunpack.c.h.b16 %v3160
      %v3173 = vunpack.c.l.b16 %v3161
      %v3174 = vunpack.c.h.b16 %v3161
      %v3175 = vunpack.c.l.b16 %v3162
      %v3176 = vunpack.c.h.b16 %v3162
      %v3177 = vunpack.c.l.b16 %v3163
      %v3178 = vunpack.c.h.b16 %v3163
      %v3179 = vpack.c.b16 %v3171, %v3169
      %v3180 = vpack.c.b16 %v3172, %v3170
      %v3181 = vpack.c.b16 %v3175, %v3173
      %v3182 = vpack.c.b16 %v3176, %v3174
      %v3183 = vpack.c.b16 %v3177, %v3177
      %v3184 = vpack.c.b16 %v3178, %v3178
      %3185 = vrot.lane.b32.xlu0 %v3179, 37
      %v3186 = vpop.permute.xlu0 %3185
      %3187 = vrot.lane.b32.xlu0 %v3180, 37
      %v3188 = vpop.permute.xlu0 %3187
      %3189 = vrot.lane.b32.xlu0 %v3181, 37
      %v3190 = vpop.permute.xlu0 %3189
      %3191 = vrot.lane.b32.xlu0 %v3182, 37
      %v3192 = vpop.permute.xlu0 %3191
      %3193 = vrot.lane.b32.xlu0 %v3183, 37
      %v3194 = vpop.permute.xlu0 %3193
      %3195 = vrot.lane.b32.xlu0 %v3184, 37
      %v3196 = vpop.permute.xlu0 %3195
      %vm3197 = vcmask 302080
      %v3198 = vsel %vm3197, %v3186, %v3188
      %v3199 = vsel %vm3197, %v3190, %v3192
      %v3200 = vsel %vm3197, %v3194, %v3196
      %vm3205 = vcmask 293888
      %v3207 = vsel %vm3205, %v3143, 0
      %v3210 = vsel %vm439, %v3200, 0
      %v3213 = vsel %vm439, %v3196, 0
      %3215 = vmatpush.bf16.msra.mxu0 0
      %3216 = vmatpush.bf16.msra.mxu0 0
      %3217 = vmatpush.bf16.msra.mxu0 0
      %3218 = vmatpush.bf16.msra.mxu0 0
      %3219 = vmatpush.bf16.msra.mxu0 0
      %3220 = vmatpush.bf16.msra.mxu0 %v3210
      %3221 = vmatpush.bf16.msra.mxu0 %v3199
      %3222 = vmatpush.bf16.msra.mxu0 %v3198
      %3223 = vmatmul.bf16.gmra.mxu0 %v3207
      %v3224 = vpop.f32.mrf.mxu0
      %v3225 = vadd.f32 0.0, %v3224
      %v3226 = vpop.f32.mrf.mxu0
      %3227 = vdwg.mxu0
      %3228 = vmatpush.bf16.msra.mxu0 0
      %3229 = vmatpush.bf16.msra.mxu0 0
      %3230 = vmatpush.bf16.msra.mxu0 0
      %3231 = vmatpush.bf16.msra.mxu0 0
      %3232 = vmatpush.bf16.msra.mxu0 0
      %3233 = vmatpush.bf16.msra.mxu0 %v3213
      %3234 = vmatpush.bf16.msra.mxu0 %v3192
      %3235 = vmatpush.bf16.msra.mxu0 %v3188
      %3236 = vmatmul.bf16.gmra.mxu0 %v3207
      %v3237 = vpop.f32.mrf.mxu0
      %v3238 = vadd.f32 0.0, %v3237
      %v3239 = vpop.f32.mrf.mxu0
      %3240 = vdwg.mxu0
      %3241 = vrot.lane.b32.xlu0 %v3179, 38
      %v3242 = vpop.permute.xlu0 %3241
      %3243 = vrot.lane.b32.xlu0 %v3180, 38
      %v3244 = vpop.permute.xlu0 %3243
      %3245 = vrot.lane.b32.xlu0 %v3181, 38
      %v3246 = vpop.permute.xlu0 %3245
      %3247 = vrot.lane.b32.xlu0 %v3182, 38
      %v3248 = vpop.permute.xlu0 %3247
      %3249 = vrot.lane.b32.xlu0 %v3183, 38
      %v3250 = vpop.permute.xlu0 %3249
      %3251 = vrot.lane.b32.xlu0 %v3184, 38
      %v3252 = vpop.permute.xlu0 %3251
      %vm3253 = vcmask 310272
      %v3254 = vsel %vm3253, %v3242, %v3244
      %v3255 = vsel %vm3253, %v3246, %v3248
      %v3256 = vsel %vm3253, %v3250, %v3252
      %v3262 = vsel %vm3205, %v3141, 0
      %v3265 = vsel %vm439, %v3256, 0
      %v3268 = vsel %vm439, %v3252, 0
      %3270 = vmatpush.bf16.msra.mxu0 0
      %3271 = vmatpush.bf16.msra.mxu0 0
      %3272 = vmatpush.bf16.msra.mxu0 0
      %3273 = vmatpush.bf16.msra.mxu0 0
      %3274 = vmatpush.bf16.msra.mxu0 0
      %3275 = vmatpush.bf16.msra.mxu0 %v3265
      %3276 = vmatpush.bf16.msra.mxu0 %v3255
      %3277 = vmatpush.bf16.msra.mxu0 %v3254
      %3278 = vmatmul.bf16.gmra.mxu0 %v3262
      %v3279 = vpop.f32.mrf.mxu0
      %v3280 = vadd.f32 %v3225, %v3279
      %v3281 = vpop.f32.mrf.mxu0
      %3282 = vdwg.mxu0
      %3283 = vmatpush.bf16.msra.mxu0 0
      %3284 = vmatpush.bf16.msra.mxu0 0
      %3285 = vmatpush.bf16.msra.mxu0 0
      %3286 = vmatpush.bf16.msra.mxu0 0
      %3287 = vmatpush.bf16.msra.mxu0 0
      %3288 = vmatpush.bf16.msra.mxu0 %v3268
      %3289 = vmatpush.bf16.msra.mxu0 %v3248
      %3290 = vmatpush.bf16.msra.mxu0 %v3244
      %3291 = vmatmul.bf16.gmra.mxu0 %v3262
      %v3292 = vpop.f32.mrf.mxu0
      %v3293 = vadd.f32 %v3238, %v3292
      %v3294 = vpop.f32.mrf.mxu0
      %3295 = vdwg.mxu0
      %3296 = vrot.lane.b32.xlu0 %v3179, 36
      %v3297 = vpop.permute.xlu0 %3296
      %3298 = vrot.lane.b32.xlu0 %v3180, 36
      %v3299 = vpop.permute.xlu0 %3298
      %3300 = vrot.lane.b32.xlu0 %v3181, 36
      %v3301 = vpop.permute.xlu0 %3300
      %3302 = vrot.lane.b32.xlu0 %v3182, 36
      %v3303 = vpop.permute.xlu0 %3302
      %3304 = vrot.lane.b32.xlu0 %v3183, 36
      %v3305 = vpop.permute.xlu0 %3304
      %3306 = vrot.lane.b32.xlu0 %v3184, 36
      %v3307 = vpop.permute.xlu0 %3306
      %vm3308 = vcmask 293888
      %v3309 = vsel %vm3308, %v3297, %v3299
      %v3310 = vsel %vm3308, %v3301, %v3303
      %v3311 = vsel %vm3308, %v3305, %v3307
      %v3317 = vsel %vm3205, %v3145, 0
      %v3320 = vsel %vm439, %v3311, 0
      %v3323 = vsel %vm439, %v3307, 0
      %3325 = vmatpush.bf16.msra.mxu0 0
      %3326 = vmatpush.bf16.msra.mxu0 0
      %3327 = vmatpush.bf16.msra.mxu0 0
      %3328 = vmatpush.bf16.msra.mxu0 0
      %3329 = vmatpush.bf16.msra.mxu0 0
      %3330 = vmatpush.bf16.msra.mxu0 %v3320
      %3331 = vmatpush.bf16.msra.mxu0 %v3310
      %3332 = vmatpush.bf16.msra.mxu0 %v3309
      %3333 = vmatmul.bf16.gmra.mxu0 %v3317
      %v3334 = vpop.f32.mrf.mxu0
      %v3335 = vadd.f32 0.0, %v3334
      %v3336 = vpop.f32.mrf.mxu0
      %3337 = vdwg.mxu0
      %3338 = vmatpush.bf16.msra.mxu0 0
      %3339 = vmatpush.bf16.msra.mxu0 0
      %3340 = vmatpush.bf16.msra.mxu0 0
      %3341 = vmatpush.bf16.msra.mxu0 0
      %3342 = vmatpush.bf16.msra.mxu0 0
      %3343 = vmatpush.bf16.msra.mxu0 %v3323
      %3344 = vmatpush.bf16.msra.mxu0 %v3303
      %3345 = vmatpush.bf16.msra.mxu0 %v3299
      %3346 = vmatmul.bf16.gmra.mxu0 %v3317
      %v3347 = vpop.f32.mrf.mxu0
      %v3348 = vadd.f32 0.0, %v3347
      %v3349 = vpop.f32.mrf.mxu0
      %3350 = vdwg.mxu0
      %v3351 = vadd.f32 %v3280, %v3335
      %v3352 = vadd.f32 %v3293, %v3348
      %3353 = vrot.lane.b32.xlu0 %v3179, 20
      %v3354 = vpop.permute.xlu0 %3353
      %3355 = vrot.lane.b32.xlu0 %v3180, 20
      %v3356 = vpop.permute.xlu0 %3355
      %3357 = vrot.lane.b32.xlu0 %v3181, 20
      %v3358 = vpop.permute.xlu0 %3357
      %3359 = vrot.lane.b32.xlu0 %v3182, 20
      %v3360 = vpop.permute.xlu0 %3359
      %3361 = vrot.lane.b32.xlu0 %v3183, 20
      %v3362 = vpop.permute.xlu0 %3361
      %3363 = vrot.lane.b32.xlu0 %v3184, 20
      %v3364 = vpop.permute.xlu0 %3363
      %vm3365 = vcmask 162816
      %v3366 = vsel %vm3365, %v3354, %v3356
      %v3367 = vsel %vm3365, %v3358, %v3360
      %v3368 = vsel %vm3365, %v3362, %v3364
      %v3374 = vsel %vm3205, %v3147, 0
      %v3377 = vsel %vm439, %v3368, 0
      %v3380 = vsel %vm439, %v3364, 0
      %3382 = vmatpush.bf16.msra.mxu0 0
      %3383 = vmatpush.bf16.msra.mxu0 0
      %3384 = vmatpush.bf16.msra.mxu0 0
      %3385 = vmatpush.bf16.msra.mxu0 0
      %3386 = vmatpush.bf16.msra.mxu0 0
      %3387 = vmatpush.bf16.msra.mxu0 %v3377
      %3388 = vmatpush.bf16.msra.mxu0 %v3367
      %3389 = vmatpush.bf16.msra.mxu0 %v3366
      %3390 = vmatmul.bf16.gmra.mxu0 %v3374
      %v3391 = vpop.f32.mrf.mxu0
      %v3392 = vadd.f32 0.0, %v3391
      %v3393 = vpop.f32.mrf.mxu0
      %3394 = vdwg.mxu0
      %3395 = vmatpush.bf16.msra.mxu0 0
      %3396 = vmatpush.bf16.msra.mxu0 0
      %3397 = vmatpush.bf16.msra.mxu0 0
      %3398 = vmatpush.bf16.msra.mxu0 0
      %3399 = vmatpush.bf16.msra.mxu0 0
      %3400 = vmatpush.bf16.msra.mxu0 %v3380
      %3401 = vmatpush.bf16.msra.mxu0 %v3360
      %3402 = vmatpush.bf16.msra.mxu0 %v3356
      %3403 = vmatmul.bf16.gmra.mxu0 %v3374
      %v3404 = vpop.f32.mrf.mxu0
      %v3405 = vadd.f32 0.0, %v3404
      %v3406 = vpop.f32.mrf.mxu0
      %3407 = vdwg.mxu0
      %v3408 = vadd.f32 %v3351, %v3392
      %v3409 = vadd.f32 %v3352, %v3405
      %3410 = vrot.lane.b32.xlu0 %v3179, 19
      %v3411 = vpop.permute.xlu0 %3410
      %3412 = vrot.lane.b32.xlu0 %v3180, 19
      %v3413 = vpop.permute.xlu0 %3412
      %3414 = vrot.lane.b32.xlu0 %v3181, 19
      %v3415 = vpop.permute.xlu0 %3414
      %3416 = vrot.lane.b32.xlu0 %v3182, 19
      %v3417 = vpop.permute.xlu0 %3416
      %3418 = vrot.lane.b32.xlu0 %v3183, 19
      %v3419 = vpop.permute.xlu0 %3418
      %3420 = vrot.lane.b32.xlu0 %v3184, 19
      %v3421 = vpop.permute.xlu0 %3420
      %v3422 = vsel %vm386, %v3411, %v3413
      %v3423 = vsel %vm386, %v3415, %v3417
      %v3424 = vsel %vm386, %v3419, %v3421
      %v3430 = vsel %vm3205, %v3149, 0
      %v3433 = vsel %vm439, %v3424, 0
      %v3436 = vsel %vm439, %v3421, 0
      %3438 = vmatpush.bf16.msra.mxu0 0
      %3439 = vmatpush.bf16.msra.mxu0 0
      %3440 = vmatpush.bf16.msra.mxu0 0
      %3441 = vmatpush.bf16.msra.mxu0 0
      %3442 = vmatpush.bf16.msra.mxu0 0
      %3443 = vmatpush.bf16.msra.mxu0 %v3433
      %3444 = vmatpush.bf16.msra.mxu0 %v3423
      %3445 = vmatpush.bf16.msra.mxu0 %v3422
      %3446 = vmatmul.bf16.gmra.mxu0 %v3430
      %v3447 = vpop.f32.mrf.mxu0
      %v3448 = vadd.f32 0.0, %v3447
      %v3449 = vpop.f32.mrf.mxu0
      %3450 = vdwg.mxu0
      %3451 = vmatpush.bf16.msra.mxu0 0
      %3452 = vmatpush.bf16.msra.mxu0 0
      %3453 = vmatpush.bf16.msra.mxu0 0
      %3454 = vmatpush.bf16.msra.mxu0 0
      %3455 = vmatpush.bf16.msra.mxu0 0
      %3456 = vmatpush.bf16.msra.mxu0 %v3436
      %3457 = vmatpush.bf16.msra.mxu0 %v3417
      %3458 = vmatpush.bf16.msra.mxu0 %v3413
      %3459 = vmatmul.bf16.gmra.mxu0 %v3430
      %v3460 = vpop.f32.mrf.mxu0
      %v3461 = vadd.f32 0.0, %v3460
      %v3462 = vpop.f32.mrf.mxu0
      %3463 = vdwg.mxu0
      %v3464 = vadd.f32 %v3408, %v3448
      %v3465 = vadd.f32 %v3409, %v3461
      %3466 = vrot.lane.b32.xlu0 %v3179, 18
      %v3467 = vpop.permute.xlu0 %3466
      %3468 = vrot.lane.b32.xlu0 %v3180, 18
      %v3469 = vpop.permute.xlu0 %3468
      %3470 = vrot.lane.b32.xlu0 %v3181, 18
      %v3471 = vpop.permute.xlu0 %3470
      %3472 = vrot.lane.b32.xlu0 %v3182, 18
      %v3473 = vpop.permute.xlu0 %3472
      %3474 = vrot.lane.b32.xlu0 %v3183, 18
      %v3475 = vpop.permute.xlu0 %3474
      %3476 = vrot.lane.b32.xlu0 %v3184, 18
      %v3477 = vpop.permute.xlu0 %3476
      %vm3478 = vcmask 146432
      %v3479 = vsel %vm3478, %v3467, %v3469
      %v3480 = vsel %vm3478, %v3471, %v3473
      %v3481 = vsel %vm3478, %v3475, %v3477
      %v3487 = vsel %vm3205, %v3151, 0
      %v3490 = vsel %vm439, %v3481, 0
      %v3493 = vsel %vm439, %v3477, 0
      %3495 = vmatpush.bf16.msra.mxu0 0
      %3496 = vmatpush.bf16.msra.mxu0 0
      %3497 = vmatpush.bf16.msra.mxu0 0
      %3498 = vmatpush.bf16.msra.mxu0 0
      %3499 = vmatpush.bf16.msra.mxu0 0
      %3500 = vmatpush.bf16.msra.mxu0 %v3490
      %3501 = vmatpush.bf16.msra.mxu0 %v3480
      %3502 = vmatpush.bf16.msra.mxu0 %v3479
      %3503 = vmatmul.bf16.gmra.mxu0 %v3487
      %v3504 = vpop.f32.mrf.mxu0
      %v3505 = vadd.f32 0.0, %v3504
      %v3506 = vpop.f32.mrf.mxu0
      %3507 = vdwg.mxu0
      %3508 = vmatpush.bf16.msra.mxu0 0
      %3509 = vmatpush.bf16.msra.mxu0 0
      %3510 = vmatpush.bf16.msra.mxu0 0
      %3511 = vmatpush.bf16.msra.mxu0 0
      %3512 = vmatpush.bf16.msra.mxu0 0
      %3513 = vmatpush.bf16.msra.mxu0 %v3493
      %3514 = vmatpush.bf16.msra.mxu0 %v3473
      %3515 = vmatpush.bf16.msra.mxu0 %v3469
      %3516 = vmatmul.bf16.gmra.mxu0 %v3487
      %v3517 = vpop.f32.mrf.mxu0
      %v3518 = vadd.f32 0.0, %v3517
      %v3519 = vpop.f32.mrf.mxu0
      %3520 = vdwg.mxu0
      %v3521 = vadd.f32 %v3464, %v3505
      %v3522 = vadd.f32 %v3465, %v3518
      %v3523 = vld [vmem:[#allocation2] sm:$0xff]
      %v3524 = vld [vmem:[#allocation2 + $0x8] sm:$0xf]
      %v3525 = vld [vmem:[#allocation2 + $0xc] sm:$0xff]
      %v3526 = vld [vmem:[#allocation2 + $0x14] sm:$0xf]
      %v3527 = vld [vmem:[#allocation2 + $0x18] sm:$0xff]
      %v3528 = vld [vmem:[#allocation2 + $0x20] sm:$0xf]
      %v3529 = vld [vmem:[#allocation2 + $0x24] sm:$0xff]
      %v3530 = vld [vmem:[#allocation2 + $0x2c] sm:$0xf]
      %v3531 = vld [vmem:[#allocation2 + $0x30] sm:$0x33]
      %v3532 = vld [vmem:[#allocation2 + $0x38] sm:$0x3]
      %v3543 = vunpack.c.l.b16 %v3523
      %v3544 = vunpack.c.h.b16 %v3523
      %v3545 = vunpack.c.l.b16 %v3524
      %v3546 = vunpack.c.l.b16 %v3525
      %v3547 = vunpack.c.h.b16 %v3525
      %v3548 = vunpack.c.l.b16 %v3526
      %v3549 = vunpack.c.l.b16 %v3527
      %v3550 = vunpack.c.h.b16 %v3527
      %v3551 = vunpack.c.l.b16 %v3528
      %v3552 = vunpack.c.l.b16 %v3529
      %v3553 = vunpack.c.h.b16 %v3529
      %v3554 = vunpack.c.l.b16 %v3530
      %v3555 = vunpack.c.l.b16 %v3531
      %v3556 = vunpack.c.h.b16 %v3531
      %v3557 = vunpack.c.l.b16 %v3532
      %v3558 = vpack.c.b16 %v3546, %v3543
      %v3559 = vpack.c.b16 %v3547, %v3544
      %v3560 = vpack.c.b16 %v3548, %v3545
      %v3561 = vpack.c.b16 %v3552, %v3549
      %v3562 = vpack.c.b16 %v3553, %v3550
      %v3563 = vpack.c.b16 %v3554, %v3551
      %v3564 = vpack.c.b16 %v3555, %v3555
      %v3565 = vpack.c.b16 %v3556, %v3556
      %v3566 = vpack.c.b16 %v3557, %v3557
      %3567 = vrot.lane.b32.xlu0 %v3558, 2
      %v3568 = vpop.permute.xlu0 %3567
      %3569 = vrot.lane.b32.xlu0 %v3559, 2
      %v3570 = vpop.permute.xlu0 %3569
      %3571 = vrot.lane.b32.xlu0 %v3560, 2
      %v3572 = vpop.permute.xlu0 %3571
      %3573 = vrot.lane.b32.xlu0 %v3561, 2
      %v3574 = vpop.permute.xlu0 %3573
      %3575 = vrot.lane.b32.xlu0 %v3562, 2
      %v3576 = vpop.permute.xlu0 %3575
      %3577 = vrot.lane.b32.xlu0 %v3563, 2
      %v3578 = vpop.permute.xlu0 %3577
      %3579 = vrot.lane.b32.xlu0 %v3564, 2
      %v3580 = vpop.permute.xlu0 %3579
      %3581 = vrot.lane.b32.xlu0 %v3565, 2
      %v3582 = vpop.permute.xlu0 %3581
      %3583 = vrot.lane.b32.xlu0 %v3566, 2
      %v3584 = vpop.permute.xlu0 %3583
      %vm3585 = vcmask 15360
      %v3586 = vsel %vm3585, %v3568, %v3570
      %v3587 = vsel %vm3585, %v3570, %v3572
      %v3588 = vsel %vm3585, %v3574, %v3576
      %v3589 = vsel %vm3585, %v3576, %v3578
      %v3590 = vsel %vm3585, %v3580, %v3582
      %v3591 = vsel %vm3585, %v3582, %v3584
      %v3597 = vsel %vm3205, %v3153, 0
      %v3600 = vsel %vm439, %v3590, 0
      %v3603 = vsel %vm439, %v3591, 0
      %3605 = vmatpush.bf16.msra.mxu0 0
      %3606 = vmatpush.bf16.msra.mxu0 0
      %3607 = vmatpush.bf16.msra.mxu0 0
      %3608 = vmatpush.bf16.msra.mxu0 0
      %3609 = vmatpush.bf16.msra.mxu0 0
      %3610 = vmatpush.bf16.msra.mxu0 %v3600
      %3611 = vmatpush.bf16.msra.mxu0 %v3588
      %3612 = vmatpush.bf16.msra.mxu0 %v3586
      %3613 = vmatmul.bf16.gmra.mxu0 %v3597
      %v3614 = vpop.f32.mrf.mxu0
      %v3615 = vadd.f32 0.0, %v3614
      %v3616 = vpop.f32.mrf.mxu0
      %3617 = vdwg.mxu0
      %3618 = vmatpush.bf16.msra.mxu0 0
      %3619 = vmatpush.bf16.msra.mxu0 0
      %3620 = vmatpush.bf16.msra.mxu0 0
      %3621 = vmatpush.bf16.msra.mxu0 0
      %3622 = vmatpush.bf16.msra.mxu0 0
      %3623 = vmatpush.bf16.msra.mxu0 %v3603
      %3624 = vmatpush.bf16.msra.mxu0 %v3589
      %3625 = vmatpush.bf16.msra.mxu0 %v3587
      %3626 = vmatmul.bf16.gmra.mxu0 %v3597
      %v3627 = vpop.f32.mrf.mxu0
      %v3628 = vadd.f32 0.0, %v3627
      %v3629 = vpop.f32.mrf.mxu0
      %3630 = vdwg.mxu0
      %v3631 = vadd.f32 %v3521, %v3615
      %v3632 = vadd.f32 %v3522, %v3628
      %3633 = vrot.lane.b32.xlu0 %v3558, 1
      %v3634 = vpop.permute.xlu0 %3633
      %3635 = vrot.lane.b32.xlu0 %v3559, 1
      %v3636 = vpop.permute.xlu0 %3635
      %3637 = vrot.lane.b32.xlu0 %v3560, 1
      %v3638 = vpop.permute.xlu0 %3637
      %3639 = vrot.lane.b32.xlu0 %v3561, 1
      %v3640 = vpop.permute.xlu0 %3639
      %3641 = vrot.lane.b32.xlu0 %v3562, 1
      %v3642 = vpop.permute.xlu0 %3641
      %3643 = vrot.lane.b32.xlu0 %v3563, 1
      %v3644 = vpop.permute.xlu0 %3643
      %3645 = vrot.lane.b32.xlu0 %v3564, 1
      %v3646 = vpop.permute.xlu0 %3645
      %3647 = vrot.lane.b32.xlu0 %v3565, 1
      %v3648 = vpop.permute.xlu0 %3647
      %3649 = vrot.lane.b32.xlu0 %v3566, 1
      %v3650 = vpop.permute.xlu0 %3649
      %vm3651 = vcmask 7168
      %v3652 = vsel %vm3651, %v3634, %v3636
      %v3653 = vsel %vm3651, %v3636, %v3638
      %v3654 = vsel %vm3651, %v3640, %v3642
      %v3655 = vsel %vm3651, %v3642, %v3644
      %v3656 = vsel %vm3651, %v3646, %v3648
      %v3657 = vsel %vm3651, %v3648, %v3650
      %v3663 = vsel %vm3205, %v3155, 0
      %v3666 = vsel %vm439, %v3656, 0
      %v3669 = vsel %vm439, %v3657, 0
      %3671 = vmatpush.bf16.msra.mxu0 0
      %3672 = vmatpush.bf16.msra.mxu0 0
      %3673 = vmatpush.bf16.msra.mxu0 0
      %3674 = vmatpush.bf16.msra.mxu0 0
      %3675 = vmatpush.bf16.msra.mxu0 0
      %3676 = vmatpush.bf16.msra.mxu0 %v3666
      %3677 = vmatpush.bf16.msra.mxu0 %v3654
      %3678 = vmatpush.bf16.msra.mxu0 %v3652
      %3679 = vmatmul.bf16.gmra.mxu0 %v3663
      %v3680 = vpop.f32.mrf.mxu0
      %v3681 = vadd.f32 0.0, %v3680
      %v3682 = vpop.f32.mrf.mxu0
      %3683 = vdwg.mxu0
      %3684 = vmatpush.bf16.msra.mxu0 0
      %3685 = vmatpush.bf16.msra.mxu0 0
      %3686 = vmatpush.bf16.msra.mxu0 0
      %3687 = vmatpush.bf16.msra.mxu0 0
      %3688 = vmatpush.bf16.msra.mxu0 0
      %3689 = vmatpush.bf16.msra.mxu0 %v3669
      %3690 = vmatpush.bf16.msra.mxu0 %v3655
      %3691 = vmatpush.bf16.msra.mxu0 %v3653
      %3692 = vmatmul.bf16.gmra.mxu0 %v3663
      %v3693 = vpop.f32.mrf.mxu0
      %v3694 = vadd.f32 0.0, %v3693
      %v3695 = vpop.f32.mrf.mxu0
      %3696 = vdwg.mxu0
      %v3697 = vadd.f32 %v3631, %v3681
      %v3698 = vadd.f32 %v3632, %v3694
      %v3699 = vld [vmem:[#allocation2 + $0x4] sm:$0xff]
      %v3700 = vld [vmem:[#allocation2 + $0x10] sm:$0xff]
      %v3701 = vld [vmem:[#allocation2 + $0x1c] sm:$0xff]
      %v3702 = vld [vmem:[#allocation2 + $0x28] sm:$0xff]
      %v3703 = vld [vmem:[#allocation2 + $0x34] sm:$0x33]
      %v3709 = vunpack.c.l.b16 %v3699
      %v3710 = vunpack.c.h.b16 %v3699
      %v3711 = vunpack.c.l.b16 %v3700
      %v3712 = vunpack.c.h.b16 %v3700
      %v3713 = vunpack.c.l.b16 %v3701
      %v3714 = vunpack.c.h.b16 %v3701
      %v3715 = vunpack.c.l.b16 %v3702
      %v3716 = vunpack.c.h.b16 %v3702
      %v3717 = vunpack.c.l.b16 %v3703
      %v3718 = vunpack.c.h.b16 %v3703
      %v3719 = vpack.c.b16 %v3711, %v3709
      %v3720 = vpack.c.b16 %v3712, %v3710
      %v3721 = vpack.c.b16 %v3715, %v3713
      %v3722 = vpack.c.b16 %v3716, %v3714
      %v3723 = vpack.c.b16 %v3717, %v3717
      %v3724 = vpack.c.b16 %v3718, %v3718
      %v3730 = vsel %vm3205, %v3157, 0
      %v3733 = vsel %vm439, %v3723, 0
      %v3736 = vsel %vm439, %v3724, 0
      %3738 = vmatpush.bf16.msra.mxu0 0
      %3739 = vmatpush.bf16.msra.mxu0 0
      %3740 = vmatpush.bf16.msra.mxu0 0
      %3741 = vmatpush.bf16.msra.mxu0 0
      %3742 = vmatpush.bf16.msra.mxu0 0
      %3743 = vmatpush.bf16.msra.mxu0 %v3733
      %3744 = vmatpush.bf16.msra.mxu0 %v3721
      %3745 = vmatpush.bf16.msra.mxu0 %v3719
      %3746 = vmatmul.bf16.gmra.mxu0 %v3730
      %v3747 = vpop.f32.mrf.mxu0
      %v3748 = vadd.f32 0.0, %v3747
      %v3749 = vpop.f32.mrf.mxu0
      %3750 = vdwg.mxu0
      %3751 = vmatpush.bf16.msra.mxu0 0
      %3752 = vmatpush.bf16.msra.mxu0 0
      %3753 = vmatpush.bf16.msra.mxu0 0
      %3754 = vmatpush.bf16.msra.mxu0 0
      %3755 = vmatpush.bf16.msra.mxu0 0
      %3756 = vmatpush.bf16.msra.mxu0 %v3736
      %3757 = vmatpush.bf16.msra.mxu0 %v3722
      %3758 = vmatpush.bf16.msra.mxu0 %v3720
      %3759 = vmatmul.bf16.gmra.mxu0 %v3730
      %v3760 = vpop.f32.mrf.mxu0
      %v3761 = vadd.f32 0.0, %v3760
      %v3762 = vpop.f32.mrf.mxu0
      %3763 = vdwg.mxu0
      %v3764 = vadd.f32 %v3697, %v3748
      %v3765 = vadd.f32 %v3698, %v3761
      %3767 = vset.pattern.permute.xlu0 4
      %3768 = vperm.xlu0 %3767, %v3158
      %v3769 = vpop.permute.xlu0 %3768
      %v3771 = vadd.f32 %v3764, %v3769
      %v3772 = vadd.f32 %v3765, %v3769
      %v3773 = vld [vmem:[#allocation2] sm:$0x33]
      %v3774 = vunpack.c.l.bf16 %v3773
      %v3775 = vunpack.c.h.bf16 %v3773
      %v3776 = vmul.f32 %v3771, 0.2
      %v3777 = vmul.f32 %v3772, 0.2
      %3780 = vrot.lane.b32.xlu0 %v3774, 19
      %v3781 = vpop.permute.xlu0 %3780
      %3782 = vrot.lane.b32.xlu0 %v3775, 19
      %v3783 = vpop.permute.xlu0 %3782
      %vm3784 = vcmask 154624
      %v3785 = vsel %vm3784, %v3781, %v3783
      %v3788 = vadd.f32 %v3776, %v3785
      %v3789 = vadd.f32 %v3777, %v3783
      %v3792 = vrot.slane %v3789, 4
      %vm3793 = vcmask 1043456
      %v3794 = vsel %vm3793, %v3788, %v3792
      %vm3796 = vcmask 130052
      %vm3797 = vmor %vm3796, %vm3793
      %3798 = vst.msk [vmem:[%s358] sm:$0xff] %vm3797, %v3794
      %p3799 = scmp.lt.s32.totalorder %s23, 1
      %s3800 = scalar_select %p3799, %s23, 1
      %p3801 = scmp.lt.s32.totalorder %s24, 1
      %s3802 = scalar_select %p3801, %s24, 1
      %s3803 = smul.addr %s3802, 2
      %s3804 = smul.addr %s3800, 4
      %s3805 = sadd.s32 %s3803, %s3804
      %s3806 = smul.addr %s3805, 4
      %s3807 = scalar_lea.vmem %s8, %s3806
      // Predicated region
      $region53: #{residual_dense_block_5c.1} parent=51 // pred_check
        %p3808 = pneg %p231
      $region54: #{residual_dense_block_5c.1} parent=51 // pred_check_branch
        %3810 = sbr.rel (%p3808) target = $region56
      $region55: #{residual_dense_block_5c.1} parent=51 // pred_region
        _
      $region56: #{residual_dense_block_5c.1} parent=51 // pred_fallthru
        _
    $region52: #{residual_dense_block_5c.1} parent=5 // pred_fallthru
      _
    %p3811 = scmp.le.s32.totalorder 2, %s14
    // Predicated region
    $region57: #{residual_dense_block_5c.1} parent=5 // pred_check
      %p3812 = pneg %p3811
    $region58: #{residual_dense_block_5c.1} parent=5 // pred_check_branch
      %3814 = sbr.rel (%p3812) target = $region60
    $region59: #{residual_dense_block_5c.1} parent=5 // pred_region
      %s3815 = ssub.s32 %s14, 2
      // Predicated region
      $region61: #{residual_dense_block_5c.1} parent=59 // pred_check
        %p3816 = pneg %p237
      $region62: #{residual_dense_block_5c.1} parent=59 // pred_check_branch
        %3818 = sbr.rel (%p3816) target = $region64
      $region63: #{residual_dense_block_5c.1} parent=59 // pred_region
        %p3819 = scmp.lt.s32.totalorder %s25, 1
        %s3820 = scalar_select %p3819, %s25, 1
        %p3821 = scmp.lt.s32.totalorder %s26, 1
        %s3822 = scalar_select %p3821, %s26, 1
        %s3823 = smul.addr %s3822, 2
        %s3824 = smul.addr %s3820, 4
        %s3825 = sadd.s32 %s3823, %s3824
        %s3826 = smul.addr %s3825, 4
        %s3827 = scalar_lea.vmem %s8, %s3826
      $region64: #{residual_dense_block_5c.1} parent=59 // pred_fallthru
        _
    $region60: #{residual_dense_block_5c.1} parent=5 // pred_fallthru
      _
  $region6: #{residual_dense_block_5c.1} parent=0 // loop_footer
    %s18 = sadd.s32 1, %s14
  $region7: #{residual_dense_block_5c.1} parent=0 // loop_footer_branch
    %13 = sbr.rel target = $region3
  $region8: #{residual_dense_block_5c.1} parent=0 // loop_exit
    _

</llo_original>
